<compile_context>
chip_gen: v7x
topology: tpu7x:2x2x1
jax: 0.10.0
libtpu: 0.0.40
codegen_flags: <defaults>
</compile_context>

<pallas_src>
import jax
import jax.numpy as jnp
from jax import lax
from jax.experimental import pallas as pl
from jax.experimental.pallas import tpu as pltpu

C = 16          # channels (in == out for every conv)
H = 32
W = 32
HW = H * W
K = 9 * C       # im2col contraction size (3*3*Cin = 144)
N_LAYERS = 7


# ------------------------------ fused kernel --------------------------------

def _fused_forward_kernel(x_ref, w_ref, b_ref, o_ref):
    # x_ref: (C, HW)   f32   activation, channels on sublanes, H*W on lanes
    # w_ref: (7, C, K) f32   per-layer (Cout, 9*Cin) matmul weights
    # b_ref: (7, C, 1) f32   per-layer bias (broadcast along lanes)
    # o_ref: (C, HW)   f32   v13

    lane = lax.broadcasted_iota(jnp.int32, (C, HW), 1)
    col = jnp.bitwise_and(lane, W - 1)          # x coordinate (W is a power of 2)

    # Per-tap lane shift and validity mask (layer/input independent -> hoisted).
    shifts = []
    masks = []
    for dy in range(3):
        for dx in range(3):
            s = (dy - 1) * W + (dx - 1)
            valid = (lane + s >= 0) & (lane + s < HW)    # row in range (given col ok)
            if dx == 0:
                valid = valid & (col >= 1)               # x-1 >= 0
            elif dx == 2:
                valid = valid & (col <= W - 2)           # x+1 <= W-1
            shifts.append(s)
            masks.append(valid)

    def build_cols(inp):
        # im2col: (K, HW) -- 9 taps stacked along sublanes, tap-major / channel-minor.
        taps = []
        for t in range(9):
            s = shifts[t]
            shifted = inp if s == 0 else pltpu.roll(inp, shift=(-s) % HW, axis=1)
            taps.append(jnp.where(masks[t], shifted, 0.0))
        return jnp.concatenate(taps, axis=0)

    def apply_conv(cols, layer):
        # (C, K) @ (K, HW) on the MXU, f32 accumulation, bias fused in epilogue.
        return (
            jnp.dot(w_ref[layer], cols, preferred_element_type=jnp.float32)
            + b_ref[layer]
        )

    x = x_ref[...]

    cols_x = build_cols(x)
    v = apply_conv(cols_x, 0)                    # conv1(x)
    v1 = v + x

    cols_1 = build_cols(v1)                      # shared by conv2 / conv5
    v2 = apply_conv(cols_1, 1)                   # conv2(v1)
    v7 = apply_conv(cols_1, 4)                   # conv5(v1)
    v3 = v1 + v2

    cols_3 = build_cols(v3)                      # shared by conv3 / conv7
    v4 = apply_conv(cols_3, 2)                   # conv3(v3)
    v12 = apply_conv(cols_3, 6)                  # conv7(v3)

    v5 = v + v2
    cols_5 = build_cols(v5)
    v6 = apply_conv(cols_5, 3)                   # conv4(v5)

    v10 = (v4 * v6) * (v7 + v2)                  # v9 * v8

    cols_10 = build_cols(v10)
    v11 = apply_conv(cols_10, 5)                 # conv6(v10)

    o_ref[...] = v11 + v12                       # v13 (tanh(v13) is dead code)


# ------------------------------ host wrapper ---------------------------------

def _pack_params(params):
    # PyTorch conv weight (Cout, Cin, 3, 3) -> (Cout, 3, 3, Cin) -> (Cout, 9*Cin)
    # so that column row index (dy*3 + dx)*Cin + ci matches the in-kernel im2col.
    w_all = jnp.stack(
        [jnp.transpose(w, (0, 2, 3, 1)).reshape(C, K) for (w, _) in params])
    b_all = jnp.stack([b.reshape(C, 1) for (_, b) in params])
    return w_all, b_all       # (7, 16, 144), (7, 16, 1)


@jax.jit
def model_forward(x_nchw, params):
    n = x_nchw.shape[0]
    assert n == 1 and x_nchw.shape[1:] == (C, H, W)
    x2d = x_nchw.reshape(C, HW)                  # lane-dense (C, H*W) layout
    w_all, b_all = _pack_params(params)

    out = pl.pallas_call(
        _fused_forward_kernel,
        out_shape=jax.ShapeDtypeStruct((C, HW), jnp.float32),
        grid=(1,),
        in_specs=[
            pl.BlockSpec((C, HW), lambda i: (0, 0)),
            pl.BlockSpec((N_LAYERS, C, K), lambda i: (0, 0, 0)),
            pl.BlockSpec((N_LAYERS, C, 1), lambda i: (0, 0, 0)),
        ],
        out_specs=pl.BlockSpec((C, HW), lambda i: (0, 0)),
    )(x2d, w_all, b_all)
    return out.reshape(n, C, H, W)               # back to NCHW


# ------------------------------ params / reference ---------------------------

def make_params(key, n_convs=N_LAYERS, cin=C, cout=C, k=3):
    params = []
    fan_in = cin * k * k
    bound = 1.0 / jnp.sqrt(fan_in)
    for _ in range(n_convs):
        key, kw, kb = jax.random.split(key, 3)
        w = jax.random.uniform(kw, (cout, cin, k, k), jnp.float32, -bound, bound)
        b = jax.random.uniform(kb, (cout,), jnp.float32, -bound, bound)
        params.append((w, b))
    return params


def _conv_ref(x_nchw, w, b):
    y = lax.conv_general_dilated(
        x_nchw, w, window_strides=(1, 1), padding="SAME",
        dimension_numbers=("NCHW", "OIHW", "NCHW"),
        precision=lax.Precision.HIGHEST,
    )
    return y + b[None, :, None, None]


def model_forward_ref(x, params):
    (w1, b1), (w2, b2), (w3, b3), (w4, b4), (w5, b5), (w6, b6), (w7, b7) = params
    v = _conv_ref(x, w1, b1)
    v1 = v + x
    v2 = _conv_ref(v1, w2, b2)
    v3 = v1 + v2
    v4 = _conv_ref(v3, w3, b3)
    v5 = v + v2
    v6 = _conv_ref(v5, w4, b4)
    v7 = _conv_ref(v1, w5, b5)
    v8 = v7 + v2
    v9 = v4 * v6
    v10 = v9 * v8
    v11 = _conv_ref(v10, w6, b6)
    v12 = _conv_ref(v3, w7, b7)
    return v11 + v12


# ---------------------------------- main --------------------------------------

if __name__ == "__main__":
    key = jax.random.PRNGKey(0)
    key, kx = jax.random.split(key)
    x = jax.random.normal(kx, (1, C, H, W), jnp.float32)   # NCHW, as in the module
    params = make_params(key)

    out = jax.block_until_ready(model_forward(x, params))

    ref = model_forward_ref(x, params)
    assert out.shape == (1, C, H, W)
    assert jnp.allclose(out, ref, rtol=1e-2, atol=1e-2), "mismatch vs reference"

    print("KERNEL_OK")
</pallas_src>

<mosaic_0001>
module attributes {stable_mosaic.version = 11 : i64} {
  func.func @_fused_forward_kernel(%arg0: i32, %arg1: memref<16x1024xf32, #tpu.memory_space<vmem>>, %arg2: memref<7x16x144xf32, #tpu.memory_space<vmem>>, %arg3: memref<7x16x1xf32, #tpu.memory_space<vmem>>, %arg4: memref<16x1024xf32, #tpu.memory_space<vmem>>) attributes {dimension_semantics = [#tpu.dimension_semantics<arbitrary>], iteration_bounds = array<i64: 1>, scalar_prefetch = 0 : i64, scratch_operands = 0 : i64, tpu.core_type = #tpu.core_type<tc>, window_params = [{pipeline_mode = #tpu.pipeline_mode<synchronous>, transform_indices = @transform_0, window_bounds = array<i64: 16, 1024>}, {pipeline_mode = #tpu.pipeline_mode<synchronous>, transform_indices = @transform_1, window_bounds = array<i64: 7, 16, 144>}, {pipeline_mode = #tpu.pipeline_mode<synchronous>, transform_indices = @transform_2, window_bounds = array<i64: 7, 16, 1>}, {pipeline_mode = #tpu.pipeline_mode<synchronous>, transform_indices = @transform_3, window_bounds = array<i64: 16, 1024>}]} {
    %0 = tpu.iota {dimensions = array<i32: 1>} : vector<16x1024xi32>
    %c31_i32 = arith.constant 31 : i32
    %1 = vector.broadcast %c31_i32 : i32 to vector<16x1024xi32>
    %2 = arith.andi %0, %1 : vector<16x1024xi32>
    %c-33_i32 = arith.constant -33 : i32
    %3 = vector.broadcast %c-33_i32 : i32 to vector<16x1024xi32>
    %4 = arith.addi %0, %3 : vector<16x1024xi32>
    %c0_i32 = arith.constant 0 : i32
    %5 = vector.broadcast %c0_i32 : i32 to vector<16x1024xi32>
    %6 = arith.cmpi sge, %4, %5 : vector<16x1024xi32>
    %c-33_i32_0 = arith.constant -33 : i32
    %7 = vector.broadcast %c-33_i32_0 : i32 to vector<16x1024xi32>
    %8 = arith.addi %0, %7 : vector<16x1024xi32>
    %c1024_i32 = arith.constant 1024 : i32
    %9 = vector.broadcast %c1024_i32 : i32 to vector<16x1024xi32>
    %10 = arith.cmpi slt, %8, %9 : vector<16x1024xi32>
    %11 = arith.andi %6, %10 : vector<16x1024xi1>
    %c1_i32 = arith.constant 1 : i32
    %12 = vector.broadcast %c1_i32 : i32 to vector<16x1024xi32>
    %13 = arith.cmpi sge, %2, %12 : vector<16x1024xi32>
    %14 = arith.andi %11, %13 : vector<16x1024xi1>
    %c-32_i32 = arith.constant -32 : i32
    %15 = vector.broadcast %c-32_i32 : i32 to vector<16x1024xi32>
    %16 = arith.addi %0, %15 : vector<16x1024xi32>
    %c0_i32_1 = arith.constant 0 : i32
    %17 = vector.broadcast %c0_i32_1 : i32 to vector<16x1024xi32>
    %18 = arith.cmpi sge, %16, %17 : vector<16x1024xi32>
    %c-32_i32_2 = arith.constant -32 : i32
    %19 = vector.broadcast %c-32_i32_2 : i32 to vector<16x1024xi32>
    %20 = arith.addi %0, %19 : vector<16x1024xi32>
    %c1024_i32_3 = arith.constant 1024 : i32
    %21 = vector.broadcast %c1024_i32_3 : i32 to vector<16x1024xi32>
    %22 = arith.cmpi slt, %20, %21 : vector<16x1024xi32>
    %23 = arith.andi %18, %22 : vector<16x1024xi1>
    %c-31_i32 = arith.constant -31 : i32
    %24 = vector.broadcast %c-31_i32 : i32 to vector<16x1024xi32>
    %25 = arith.addi %0, %24 : vector<16x1024xi32>
    %c0_i32_4 = arith.constant 0 : i32
    %26 = vector.broadcast %c0_i32_4 : i32 to vector<16x1024xi32>
    %27 = arith.cmpi sge, %25, %26 : vector<16x1024xi32>
    %c-31_i32_5 = arith.constant -31 : i32
    %28 = vector.broadcast %c-31_i32_5 : i32 to vector<16x1024xi32>
    %29 = arith.addi %0, %28 : vector<16x1024xi32>
    %c1024_i32_6 = arith.constant 1024 : i32
    %30 = vector.broadcast %c1024_i32_6 : i32 to vector<16x1024xi32>
    %31 = arith.cmpi slt, %29, %30 : vector<16x1024xi32>
    %32 = arith.andi %27, %31 : vector<16x1024xi1>
    %c30_i32 = arith.constant 30 : i32
    %33 = vector.broadcast %c30_i32 : i32 to vector<16x1024xi32>
    %34 = arith.cmpi sle, %2, %33 : vector<16x1024xi32>
    %35 = arith.andi %32, %34 : vector<16x1024xi1>
    %c-1_i32 = arith.constant -1 : i32
    %36 = vector.broadcast %c-1_i32 : i32 to vector<16x1024xi32>
    %37 = arith.addi %0, %36 : vector<16x1024xi32>
    %c0_i32_7 = arith.constant 0 : i32
    %38 = vector.broadcast %c0_i32_7 : i32 to vector<16x1024xi32>
    %39 = arith.cmpi sge, %37, %38 : vector<16x1024xi32>
    %c-1_i32_8 = arith.constant -1 : i32
    %40 = vector.broadcast %c-1_i32_8 : i32 to vector<16x1024xi32>
    %41 = arith.addi %0, %40 : vector<16x1024xi32>
    %c1024_i32_9 = arith.constant 1024 : i32
    %42 = vector.broadcast %c1024_i32_9 : i32 to vector<16x1024xi32>
    %43 = arith.cmpi slt, %41, %42 : vector<16x1024xi32>
    %44 = arith.andi %39, %43 : vector<16x1024xi1>
    %c1_i32_10 = arith.constant 1 : i32
    %45 = vector.broadcast %c1_i32_10 : i32 to vector<16x1024xi32>
    %46 = arith.cmpi sge, %2, %45 : vector<16x1024xi32>
    %47 = arith.andi %44, %46 : vector<16x1024xi1>
    %c0_i32_11 = arith.constant 0 : i32
    %48 = vector.broadcast %c0_i32_11 : i32 to vector<16x1024xi32>
    %49 = arith.addi %0, %48 : vector<16x1024xi32>
    %c0_i32_12 = arith.constant 0 : i32
    %50 = vector.broadcast %c0_i32_12 : i32 to vector<16x1024xi32>
    %51 = arith.cmpi sge, %49, %50 : vector<16x1024xi32>
    %c0_i32_13 = arith.constant 0 : i32
    %52 = vector.broadcast %c0_i32_13 : i32 to vector<16x1024xi32>
    %53 = arith.addi %0, %52 : vector<16x1024xi32>
    %c1024_i32_14 = arith.constant 1024 : i32
    %54 = vector.broadcast %c1024_i32_14 : i32 to vector<16x1024xi32>
    %55 = arith.cmpi slt, %53, %54 : vector<16x1024xi32>
    %56 = arith.andi %51, %55 : vector<16x1024xi1>
    %c1_i32_15 = arith.constant 1 : i32
    %57 = vector.broadcast %c1_i32_15 : i32 to vector<16x1024xi32>
    %58 = arith.addi %0, %57 : vector<16x1024xi32>
    %c0_i32_16 = arith.constant 0 : i32
    %59 = vector.broadcast %c0_i32_16 : i32 to vector<16x1024xi32>
    %60 = arith.cmpi sge, %58, %59 : vector<16x1024xi32>
    %c1_i32_17 = arith.constant 1 : i32
    %61 = vector.broadcast %c1_i32_17 : i32 to vector<16x1024xi32>
    %62 = arith.addi %0, %61 : vector<16x1024xi32>
    %c1024_i32_18 = arith.constant 1024 : i32
    %63 = vector.broadcast %c1024_i32_18 : i32 to vector<16x1024xi32>
    %64 = arith.cmpi slt, %62, %63 : vector<16x1024xi32>
    %65 = arith.andi %60, %64 : vector<16x1024xi1>
    %c30_i32_19 = arith.constant 30 : i32
    %66 = vector.broadcast %c30_i32_19 : i32 to vector<16x1024xi32>
    %67 = arith.cmpi sle, %2, %66 : vector<16x1024xi32>
    %68 = arith.andi %65, %67 : vector<16x1024xi1>
    %c31_i32_20 = arith.constant 31 : i32
    %69 = vector.broadcast %c31_i32_20 : i32 to vector<16x1024xi32>
    %70 = arith.addi %0, %69 : vector<16x1024xi32>
    %c0_i32_21 = arith.constant 0 : i32
    %71 = vector.broadcast %c0_i32_21 : i32 to vector<16x1024xi32>
    %72 = arith.cmpi sge, %70, %71 : vector<16x1024xi32>
    %c31_i32_22 = arith.constant 31 : i32
    %73 = vector.broadcast %c31_i32_22 : i32 to vector<16x1024xi32>
    %74 = arith.addi %0, %73 : vector<16x1024xi32>
    %c1024_i32_23 = arith.constant 1024 : i32
    %75 = vector.broadcast %c1024_i32_23 : i32 to vector<16x1024xi32>
    %76 = arith.cmpi slt, %74, %75 : vector<16x1024xi32>
    %77 = arith.andi %72, %76 : vector<16x1024xi1>
    %c1_i32_24 = arith.constant 1 : i32
    %78 = vector.broadcast %c1_i32_24 : i32 to vector<16x1024xi32>
    %79 = arith.cmpi sge, %2, %78 : vector<16x1024xi32>
    %80 = arith.andi %77, %79 : vector<16x1024xi1>
    %c32_i32 = arith.constant 32 : i32
    %81 = vector.broadcast %c32_i32 : i32 to vector<16x1024xi32>
    %82 = arith.addi %0, %81 : vector<16x1024xi32>
    %c0_i32_25 = arith.constant 0 : i32
    %83 = vector.broadcast %c0_i32_25 : i32 to vector<16x1024xi32>
    %84 = arith.cmpi sge, %82, %83 : vector<16x1024xi32>
    %c32_i32_26 = arith.constant 32 : i32
    %85 = vector.broadcast %c32_i32_26 : i32 to vector<16x1024xi32>
    %86 = arith.addi %0, %85 : vector<16x1024xi32>
    %c1024_i32_27 = arith.constant 1024 : i32
    %87 = vector.broadcast %c1024_i32_27 : i32 to vector<16x1024xi32>
    %88 = arith.cmpi slt, %86, %87 : vector<16x1024xi32>
    %89 = arith.andi %84, %88 : vector<16x1024xi1>
    %c33_i32 = arith.constant 33 : i32
    %90 = vector.broadcast %c33_i32 : i32 to vector<16x1024xi32>
    %91 = arith.addi %0, %90 : vector<16x1024xi32>
    %c0_i32_28 = arith.constant 0 : i32
    %92 = vector.broadcast %c0_i32_28 : i32 to vector<16x1024xi32>
    %93 = arith.cmpi sge, %91, %92 : vector<16x1024xi32>
    %c33_i32_29 = arith.constant 33 : i32
    %94 = vector.broadcast %c33_i32_29 : i32 to vector<16x1024xi32>
    %95 = arith.addi %0, %94 : vector<16x1024xi32>
    %c1024_i32_30 = arith.constant 1024 : i32
    %96 = vector.broadcast %c1024_i32_30 : i32 to vector<16x1024xi32>
    %97 = arith.cmpi slt, %95, %96 : vector<16x1024xi32>
    %98 = arith.andi %93, %97 : vector<16x1024xi1>
    %c30_i32_31 = arith.constant 30 : i32
    %99 = vector.broadcast %c30_i32_31 : i32 to vector<16x1024xi32>
    %100 = arith.cmpi sle, %2, %99 : vector<16x1024xi32>
    %101 = arith.andi %98, %100 : vector<16x1024xi1>
    %c0 = arith.constant 0 : index
    %c0_32 = arith.constant 0 : index
    %102 = vector.load %arg1[%c0, %c0_32] : memref<16x1024xf32, #tpu.memory_space<vmem>>, vector<16x1024xf32>
    %c33_i32_33 = arith.constant 33 : i32
    %103 = tpu.dynamic_rotate %102 by %c33_i32_33 dim 1 : vector<16x1024xf32>, i32 -> vector<16x1024xf32>
    %cst = arith.constant 0.000000e+00 : f32
    %104 = vector.broadcast %cst : f32 to vector<16x1024xf32>
    %105 = arith.select %14, %103, %104 : vector<16x1024xi1>, vector<16x1024xf32>
    %c32_i32_34 = arith.constant 32 : i32
    %106 = tpu.dynamic_rotate %102 by %c32_i32_34 dim 1 : vector<16x1024xf32>, i32 -> vector<16x1024xf32>
    %cst_35 = arith.constant 0.000000e+00 : f32
    %107 = vector.broadcast %cst_35 : f32 to vector<16x1024xf32>
    %108 = arith.select %23, %106, %107 : vector<16x1024xi1>, vector<16x1024xf32>
    %c31_i32_36 = arith.constant 31 : i32
    %109 = tpu.dynamic_rotate %102 by %c31_i32_36 dim 1 : vector<16x1024xf32>, i32 -> vector<16x1024xf32>
    %cst_37 = arith.constant 0.000000e+00 : f32
    %110 = vector.broadcast %cst_37 : f32 to vector<16x1024xf32>
    %111 = arith.select %35, %109, %110 : vector<16x1024xi1>, vector<16x1024xf32>
    %c1_i32_38 = arith.constant 1 : i32
    %112 = tpu.dynamic_rotate %102 by %c1_i32_38 dim 1 : vector<16x1024xf32>, i32 -> vector<16x1024xf32>
    %cst_39 = arith.constant 0.000000e+00 : f32
    %113 = vector.broadcast %cst_39 : f32 to vector<16x1024xf32>
    %114 = arith.select %47, %112, %113 : vector<16x1024xi1>, vector<16x1024xf32>
    %cst_40 = arith.constant 0.000000e+00 : f32
    %115 = vector.broadcast %cst_40 : f32 to vector<16x1024xf32>
    %116 = arith.select %56, %102, %115 : vector<16x1024xi1>, vector<16x1024xf32>
    %c1023_i32 = arith.constant 1023 : i32
    %117 = tpu.dynamic_rotate %102 by %c1023_i32 dim 1 : vector<16x1024xf32>, i32 -> vector<16x1024xf32>
    %cst_41 = arith.constant 0.000000e+00 : f32
    %118 = vector.broadcast %cst_41 : f32 to vector<16x1024xf32>
    %119 = arith.select %68, %117, %118 : vector<16x1024xi1>, vector<16x1024xf32>
    %c993_i32 = arith.constant 993 : i32
    %120 = tpu.dynamic_rotate %102 by %c993_i32 dim 1 : vector<16x1024xf32>, i32 -> vector<16x1024xf32>
    %cst_42 = arith.constant 0.000000e+00 : f32
    %121 = vector.broadcast %cst_42 : f32 to vector<16x1024xf32>
    %122 = arith.select %80, %120, %121 : vector<16x1024xi1>, vector<16x1024xf32>
    %c992_i32 = arith.constant 992 : i32
    %123 = tpu.dynamic_rotate %102 by %c992_i32 dim 1 : vector<16x1024xf32>, i32 -> vector<16x1024xf32>
    %cst_43 = arith.constant 0.000000e+00 : f32
    %124 = vector.broadcast %cst_43 : f32 to vector<16x1024xf32>
    %125 = arith.select %89, %123, %124 : vector<16x1024xi1>, vector<16x1024xf32>
    %c991_i32 = arith.constant 991 : i32
    %126 = tpu.dynamic_rotate %102 by %c991_i32 dim 1 : vector<16x1024xf32>, i32 -> vector<16x1024xf32>
    %cst_44 = arith.constant 0.000000e+00 : f32
    %127 = vector.broadcast %cst_44 : f32 to vector<16x1024xf32>
    %128 = arith.select %101, %126, %127 : vector<16x1024xi1>, vector<16x1024xf32>
    %129 = tpu.concatenate %105, %108, %111, %114, %116, %119, %122, %125, %128 in 0 : vector<16x1024xf32>, vector<16x1024xf32>, vector<16x1024xf32>, vector<16x1024xf32>, vector<16x1024xf32>, vector<16x1024xf32>, vector<16x1024xf32>, vector<16x1024xf32>, vector<16x1024xf32> -> vector<144x1024xf32>
    %c0_45 = arith.constant 0 : index
    %c0_46 = arith.constant 0 : index
    %c0_47 = arith.constant 0 : index
    %130 = vector.load %arg2[%c0_45, %c0_46, %c0_47] : memref<7x16x144xf32, #tpu.memory_space<vmem>>, vector<1x16x144xf32>
    %131 = vector.shape_cast %130 : vector<1x16x144xf32> to vector<16x144xf32>
    %cst_48 = arith.constant dense<0.000000e+00> : vector<16x1024xf32>
    %132 = tpu.matmul %131, %129, %cst_48 {dimension_numbers = #tpu.dot_dimension_numbers<[1], [0], [0], [1], [0, 0, 1, 1], [], []>} : vector<16x144xf32>, vector<144x1024xf32>, vector<16x1024xf32> -> vector<16x1024xf32>
    %c0_49 = arith.constant 0 : index
    %c0_50 = arith.constant 0 : index
    %c0_51 = arith.constant 0 : index
    %133 = vector.load %arg3[%c0_49, %c0_50, %c0_51] : memref<7x16x1xf32, #tpu.memory_space<vmem>>, vector<1x16x1xf32>
    %134 = vector.shape_cast %133 : vector<1x16x1xf32> to vector<16x1xf32>
    %135 = vector.broadcast %134 : vector<16x1xf32> to vector<16x1024xf32>
    %136 = arith.addf %132, %135 : vector<16x1024xf32>
    %137 = arith.addf %136, %102 : vector<16x1024xf32>
    %c33_i32_52 = arith.constant 33 : i32
    %138 = tpu.dynamic_rotate %137 by %c33_i32_52 dim 1 : vector<16x1024xf32>, i32 -> vector<16x1024xf32>
    %cst_53 = arith.constant 0.000000e+00 : f32
    %139 = vector.broadcast %cst_53 : f32 to vector<16x1024xf32>
    %140 = arith.select %14, %138, %139 : vector<16x1024xi1>, vector<16x1024xf32>
    %c32_i32_54 = arith.constant 32 : i32
    %141 = tpu.dynamic_rotate %137 by %c32_i32_54 dim 1 : vector<16x1024xf32>, i32 -> vector<16x1024xf32>
    %cst_55 = arith.constant 0.000000e+00 : f32
    %142 = vector.broadcast %cst_55 : f32 to vector<16x1024xf32>
    %143 = arith.select %23, %141, %142 : vector<16x1024xi1>, vector<16x1024xf32>
    %c31_i32_56 = arith.constant 31 : i32
    %144 = tpu.dynamic_rotate %137 by %c31_i32_56 dim 1 : vector<16x1024xf32>, i32 -> vector<16x1024xf32>
    %cst_57 = arith.constant 0.000000e+00 : f32
    %145 = vector.broadcast %cst_57 : f32 to vector<16x1024xf32>
    %146 = arith.select %35, %144, %145 : vector<16x1024xi1>, vector<16x1024xf32>
    %c1_i32_58 = arith.constant 1 : i32
    %147 = tpu.dynamic_rotate %137 by %c1_i32_58 dim 1 : vector<16x1024xf32>, i32 -> vector<16x1024xf32>
    %cst_59 = arith.constant 0.000000e+00 : f32
    %148 = vector.broadcast %cst_59 : f32 to vector<16x1024xf32>
    %149 = arith.select %47, %147, %148 : vector<16x1024xi1>, vector<16x1024xf32>
    %cst_60 = arith.constant 0.000000e+00 : f32
    %150 = vector.broadcast %cst_60 : f32 to vector<16x1024xf32>
    %151 = arith.select %56, %137, %150 : vector<16x1024xi1>, vector<16x1024xf32>
    %c1023_i32_61 = arith.constant 1023 : i32
    %152 = tpu.dynamic_rotate %137 by %c1023_i32_61 dim 1 : vector<16x1024xf32>, i32 -> vector<16x1024xf32>
    %cst_62 = arith.constant 0.000000e+00 : f32
    %153 = vector.broadcast %cst_62 : f32 to vector<16x1024xf32>
    %154 = arith.select %68, %152, %153 : vector<16x1024xi1>, vector<16x1024xf32>
    %c993_i32_63 = arith.constant 993 : i32
    %155 = tpu.dynamic_rotate %137 by %c993_i32_63 dim 1 : vector<16x1024xf32>, i32 -> vector<16x1024xf32>
    %cst_64 = arith.constant 0.000000e+00 : f32
    %156 = vector.broadcast %cst_64 : f32 to vector<16x1024xf32>
    %157 = arith.select %80, %155, %156 : vector<16x1024xi1>, vector<16x1024xf32>
    %c992_i32_65 = arith.constant 992 : i32
    %158 = tpu.dynamic_rotate %137 by %c992_i32_65 dim 1 : vector<16x1024xf32>, i32 -> vector<16x1024xf32>
    %cst_66 = arith.constant 0.000000e+00 : f32
    %159 = vector.broadcast %cst_66 : f32 to vector<16x1024xf32>
    %160 = arith.select %89, %158, %159 : vector<16x1024xi1>, vector<16x1024xf32>
    %c991_i32_67 = arith.constant 991 : i32
    %161 = tpu.dynamic_rotate %137 by %c991_i32_67 dim 1 : vector<16x1024xf32>, i32 -> vector<16x1024xf32>
    %cst_68 = arith.constant 0.000000e+00 : f32
    %162 = vector.broadcast %cst_68 : f32 to vector<16x1024xf32>
    %163 = arith.select %101, %161, %162 : vector<16x1024xi1>, vector<16x1024xf32>
    %164 = tpu.concatenate %140, %143, %146, %149, %151, %154, %157, %160, %163 in 0 : vector<16x1024xf32>, vector<16x1024xf32>, vector<16x1024xf32>, vector<16x1024xf32>, vector<16x1024xf32>, vector<16x1024xf32>, vector<16x1024xf32>, vector<16x1024xf32>, vector<16x1024xf32> -> vector<144x1024xf32>
    %c1 = arith.constant 1 : index
    %c0_69 = arith.constant 0 : index
    %c0_70 = arith.constant 0 : index
    %165 = vector.load %arg2[%c1, %c0_69, %c0_70] : memref<7x16x144xf32, #tpu.memory_space<vmem>>, vector<1x16x144xf32>
    %166 = vector.shape_cast %165 : vector<1x16x144xf32> to vector<16x144xf32>
    %cst_71 = arith.constant dense<0.000000e+00> : vector<16x1024xf32>
    %167 = tpu.matmul %166, %164, %cst_71 {dimension_numbers = #tpu.dot_dimension_numbers<[1], [0], [0], [1], [0, 0, 1, 1], [], []>} : vector<16x144xf32>, vector<144x1024xf32>, vector<16x1024xf32> -> vector<16x1024xf32>
    %c1_72 = arith.constant 1 : index
    %c0_73 = arith.constant 0 : index
    %c0_74 = arith.constant 0 : index
    %168 = vector.load %arg3[%c1_72, %c0_73, %c0_74] : memref<7x16x1xf32, #tpu.memory_space<vmem>>, vector<1x16x1xf32>
    %169 = vector.shape_cast %168 : vector<1x16x1xf32> to vector<16x1xf32>
    %170 = vector.broadcast %169 : vector<16x1xf32> to vector<16x1024xf32>
    %171 = arith.addf %167, %170 : vector<16x1024xf32>
    %c4 = arith.constant 4 : index
    %c0_75 = arith.constant 0 : index
    %c0_76 = arith.constant 0 : index
    %172 = vector.load %arg2[%c4, %c0_75, %c0_76] : memref<7x16x144xf32, #tpu.memory_space<vmem>>, vector<1x16x144xf32>
    %173 = vector.shape_cast %172 : vector<1x16x144xf32> to vector<16x144xf32>
    %cst_77 = arith.constant dense<0.000000e+00> : vector<16x1024xf32>
    %174 = tpu.matmul %173, %164, %cst_77 {dimension_numbers = #tpu.dot_dimension_numbers<[1], [0], [0], [1], [0, 0, 1, 1], [], []>} : vector<16x144xf32>, vector<144x1024xf32>, vector<16x1024xf32> -> vector<16x1024xf32>
    %c4_78 = arith.constant 4 : index
    %c0_79 = arith.constant 0 : index
    %c0_80 = arith.constant 0 : index
    %175 = vector.load %arg3[%c4_78, %c0_79, %c0_80] : memref<7x16x1xf32, #tpu.memory_space<vmem>>, vector<1x16x1xf32>
    %176 = vector.shape_cast %175 : vector<1x16x1xf32> to vector<16x1xf32>
    %177 = vector.broadcast %176 : vector<16x1xf32> to vector<16x1024xf32>
    %178 = arith.addf %174, %177 : vector<16x1024xf32>
    %179 = arith.addf %137, %171 : vector<16x1024xf32>
    %c33_i32_81 = arith.constant 33 : i32
    %180 = tpu.dynamic_rotate %179 by %c33_i32_81 dim 1 : vector<16x1024xf32>, i32 -> vector<16x1024xf32>
    %cst_82 = arith.constant 0.000000e+00 : f32
    %181 = vector.broadcast %cst_82 : f32 to vector<16x1024xf32>
    %182 = arith.select %14, %180, %181 : vector<16x1024xi1>, vector<16x1024xf32>
    %c32_i32_83 = arith.constant 32 : i32
    %183 = tpu.dynamic_rotate %179 by %c32_i32_83 dim 1 : vector<16x1024xf32>, i32 -> vector<16x1024xf32>
    %cst_84 = arith.constant 0.000000e+00 : f32
    %184 = vector.broadcast %cst_84 : f32 to vector<16x1024xf32>
    %185 = arith.select %23, %183, %184 : vector<16x1024xi1>, vector<16x1024xf32>
    %c31_i32_85 = arith.constant 31 : i32
    %186 = tpu.dynamic_rotate %179 by %c31_i32_85 dim 1 : vector<16x1024xf32>, i32 -> vector<16x1024xf32>
    %cst_86 = arith.constant 0.000000e+00 : f32
    %187 = vector.broadcast %cst_86 : f32 to vector<16x1024xf32>
    %188 = arith.select %35, %186, %187 : vector<16x1024xi1>, vector<16x1024xf32>
    %c1_i32_87 = arith.constant 1 : i32
    %189 = tpu.dynamic_rotate %179 by %c1_i32_87 dim 1 : vector<16x1024xf32>, i32 -> vector<16x1024xf32>
    %cst_88 = arith.constant 0.000000e+00 : f32
    %190 = vector.broadcast %cst_88 : f32 to vector<16x1024xf32>
    %191 = arith.select %47, %189, %190 : vector<16x1024xi1>, vector<16x1024xf32>
    %cst_89 = arith.constant 0.000000e+00 : f32
    %192 = vector.broadcast %cst_89 : f32 to vector<16x1024xf32>
    %193 = arith.select %56, %179, %192 : vector<16x1024xi1>, vector<16x1024xf32>
    %c1023_i32_90 = arith.constant 1023 : i32
    %194 = tpu.dynamic_rotate %179 by %c1023_i32_90 dim 1 : vector<16x1024xf32>, i32 -> vector<16x1024xf32>
    %cst_91 = arith.constant 0.000000e+00 : f32
    %195 = vector.broadcast %cst_91 : f32 to vector<16x1024xf32>
    %196 = arith.select %68, %194, %195 : vector<16x1024xi1>, vector<16x1024xf32>
    %c993_i32_92 = arith.constant 993 : i32
    %197 = tpu.dynamic_rotate %179 by %c993_i32_92 dim 1 : vector<16x1024xf32>, i32 -> vector<16x1024xf32>
    %cst_93 = arith.constant 0.000000e+00 : f32
    %198 = vector.broadcast %cst_93 : f32 to vector<16x1024xf32>
    %199 = arith.select %80, %197, %198 : vector<16x1024xi1>, vector<16x1024xf32>
    %c992_i32_94 = arith.constant 992 : i32
    %200 = tpu.dynamic_rotate %179 by %c992_i32_94 dim 1 : vector<16x1024xf32>, i32 -> vector<16x1024xf32>
    %cst_95 = arith.constant 0.000000e+00 : f32
    %201 = vector.broadcast %cst_95 : f32 to vector<16x1024xf32>
    %202 = arith.select %89, %200, %201 : vector<16x1024xi1>, vector<16x1024xf32>
    %c991_i32_96 = arith.constant 991 : i32
    %203 = tpu.dynamic_rotate %179 by %c991_i32_96 dim 1 : vector<16x1024xf32>, i32 -> vector<16x1024xf32>
    %cst_97 = arith.constant 0.000000e+00 : f32
    %204 = vector.broadcast %cst_97 : f32 to vector<16x1024xf32>
    %205 = arith.select %101, %203, %204 : vector<16x1024xi1>, vector<16x1024xf32>
    %206 = tpu.concatenate %182, %185, %188, %191, %193, %196, %199, %202, %205 in 0 : vector<16x1024xf32>, vector<16x1024xf32>, vector<16x1024xf32>, vector<16x1024xf32>, vector<16x1024xf32>, vector<16x1024xf32>, vector<16x1024xf32>, vector<16x1024xf32>, vector<16x1024xf32> -> vector<144x1024xf32>
    %c2 = arith.constant 2 : index
    %c0_98 = arith.constant 0 : index
    %c0_99 = arith.constant 0 : index
    %207 = vector.load %arg2[%c2, %c0_98, %c0_99] : memref<7x16x144xf32, #tpu.memory_space<vmem>>, vector<1x16x144xf32>
    %208 = vector.shape_cast %207 : vector<1x16x144xf32> to vector<16x144xf32>
    %cst_100 = arith.constant dense<0.000000e+00> : vector<16x1024xf32>
    %209 = tpu.matmul %208, %206, %cst_100 {dimension_numbers = #tpu.dot_dimension_numbers<[1], [0], [0], [1], [0, 0, 1, 1], [], []>} : vector<16x144xf32>, vector<144x1024xf32>, vector<16x1024xf32> -> vector<16x1024xf32>
    %c2_101 = arith.constant 2 : index
    %c0_102 = arith.constant 0 : index
    %c0_103 = arith.constant 0 : index
    %210 = vector.load %arg3[%c2_101, %c0_102, %c0_103] : memref<7x16x1xf32, #tpu.memory_space<vmem>>, vector<1x16x1xf32>
    %211 = vector.shape_cast %210 : vector<1x16x1xf32> to vector<16x1xf32>
    %212 = vector.broadcast %211 : vector<16x1xf32> to vector<16x1024xf32>
    %213 = arith.addf %209, %212 : vector<16x1024xf32>
    %c6 = arith.constant 6 : index
    %c0_104 = arith.constant 0 : index
    %c0_105 = arith.constant 0 : index
    %214 = vector.load %arg2[%c6, %c0_104, %c0_105] : memref<7x16x144xf32, #tpu.memory_space<vmem>>, vector<1x16x144xf32>
    %215 = vector.shape_cast %214 : vector<1x16x144xf32> to vector<16x144xf32>
    %cst_106 = arith.constant dense<0.000000e+00> : vector<16x1024xf32>
    %216 = tpu.matmul %215, %206, %cst_106 {dimension_numbers = #tpu.dot_dimension_numbers<[1], [0], [0], [1], [0, 0, 1, 1], [], []>} : vector<16x144xf32>, vector<144x1024xf32>, vector<16x1024xf32> -> vector<16x1024xf32>
    %c6_107 = arith.constant 6 : index
    %c0_108 = arith.constant 0 : index
    %c0_109 = arith.constant 0 : index
    %217 = vector.load %arg3[%c6_107, %c0_108, %c0_109] : memref<7x16x1xf32, #tpu.memory_space<vmem>>, vector<1x16x1xf32>
    %218 = vector.shape_cast %217 : vector<1x16x1xf32> to vector<16x1xf32>
    %219 = vector.broadcast %218 : vector<16x1xf32> to vector<16x1024xf32>
    %220 = arith.addf %216, %219 : vector<16x1024xf32>
    %221 = arith.addf %136, %171 : vector<16x1024xf32>
    %c33_i32_110 = arith.constant 33 : i32
    %222 = tpu.dynamic_rotate %221 by %c33_i32_110 dim 1 : vector<16x1024xf32>, i32 -> vector<16x1024xf32>
    %cst_111 = arith.constant 0.000000e+00 : f32
    %223 = vector.broadcast %cst_111 : f32 to vector<16x1024xf32>
    %224 = arith.select %14, %222, %223 : vector<16x1024xi1>, vector<16x1024xf32>
    %c32_i32_112 = arith.constant 32 : i32
    %225 = tpu.dynamic_rotate %221 by %c32_i32_112 dim 1 : vector<16x1024xf32>, i32 -> vector<16x1024xf32>
    %cst_113 = arith.constant 0.000000e+00 : f32
    %226 = vector.broadcast %cst_113 : f32 to vector<16x1024xf32>
    %227 = arith.select %23, %225, %226 : vector<16x1024xi1>, vector<16x1024xf32>
    %c31_i32_114 = arith.constant 31 : i32
    %228 = tpu.dynamic_rotate %221 by %c31_i32_114 dim 1 : vector<16x1024xf32>, i32 -> vector<16x1024xf32>
    %cst_115 = arith.constant 0.000000e+00 : f32
    %229 = vector.broadcast %cst_115 : f32 to vector<16x1024xf32>
    %230 = arith.select %35, %228, %229 : vector<16x1024xi1>, vector<16x1024xf32>
    %c1_i32_116 = arith.constant 1 : i32
    %231 = tpu.dynamic_rotate %221 by %c1_i32_116 dim 1 : vector<16x1024xf32>, i32 -> vector<16x1024xf32>
    %cst_117 = arith.constant 0.000000e+00 : f32
    %232 = vector.broadcast %cst_117 : f32 to vector<16x1024xf32>
    %233 = arith.select %47, %231, %232 : vector<16x1024xi1>, vector<16x1024xf32>
    %cst_118 = arith.constant 0.000000e+00 : f32
    %234 = vector.broadcast %cst_118 : f32 to vector<16x1024xf32>
    %235 = arith.select %56, %221, %234 : vector<16x1024xi1>, vector<16x1024xf32>
    %c1023_i32_119 = arith.constant 1023 : i32
    %236 = tpu.dynamic_rotate %221 by %c1023_i32_119 dim 1 : vector<16x1024xf32>, i32 -> vector<16x1024xf32>
    %cst_120 = arith.constant 0.000000e+00 : f32
    %237 = vector.broadcast %cst_120 : f32 to vector<16x1024xf32>
    %238 = arith.select %68, %236, %237 : vector<16x1024xi1>, vector<16x1024xf32>
    %c993_i32_121 = arith.constant 993 : i32
    %239 = tpu.dynamic_rotate %221 by %c993_i32_121 dim 1 : vector<16x1024xf32>, i32 -> vector<16x1024xf32>
    %cst_122 = arith.constant 0.000000e+00 : f32
    %240 = vector.broadcast %cst_122 : f32 to vector<16x1024xf32>
    %241 = arith.select %80, %239, %240 : vector<16x1024xi1>, vector<16x1024xf32>
    %c992_i32_123 = arith.constant 992 : i32
    %242 = tpu.dynamic_rotate %221 by %c992_i32_123 dim 1 : vector<16x1024xf32>, i32 -> vector<16x1024xf32>
    %cst_124 = arith.constant 0.000000e+00 : f32
    %243 = vector.broadcast %cst_124 : f32 to vector<16x1024xf32>
    %244 = arith.select %89, %242, %243 : vector<16x1024xi1>, vector<16x1024xf32>
    %c991_i32_125 = arith.constant 991 : i32
    %245 = tpu.dynamic_rotate %221 by %c991_i32_125 dim 1 : vector<16x1024xf32>, i32 -> vector<16x1024xf32>
    %cst_126 = arith.constant 0.000000e+00 : f32
    %246 = vector.broadcast %cst_126 : f32 to vector<16x1024xf32>
    %247 = arith.select %101, %245, %246 : vector<16x1024xi1>, vector<16x1024xf32>
    %248 = tpu.concatenate %224, %227, %230, %233, %235, %238, %241, %244, %247 in 0 : vector<16x1024xf32>, vector<16x1024xf32>, vector<16x1024xf32>, vector<16x1024xf32>, vector<16x1024xf32>, vector<16x1024xf32>, vector<16x1024xf32>, vector<16x1024xf32>, vector<16x1024xf32> -> vector<144x1024xf32>
    %c3 = arith.constant 3 : index
    %c0_127 = arith.constant 0 : index
    %c0_128 = arith.constant 0 : index
    %249 = vector.load %arg2[%c3, %c0_127, %c0_128] : memref<7x16x144xf32, #tpu.memory_space<vmem>>, vector<1x16x144xf32>
    %250 = vector.shape_cast %249 : vector<1x16x144xf32> to vector<16x144xf32>
    %cst_129 = arith.constant dense<0.000000e+00> : vector<16x1024xf32>
    %251 = tpu.matmul %250, %248, %cst_129 {dimension_numbers = #tpu.dot_dimension_numbers<[1], [0], [0], [1], [0, 0, 1, 1], [], []>} : vector<16x144xf32>, vector<144x1024xf32>, vector<16x1024xf32> -> vector<16x1024xf32>
    %c3_130 = arith.constant 3 : index
    %c0_131 = arith.constant 0 : index
    %c0_132 = arith.constant 0 : index
    %252 = vector.load %arg3[%c3_130, %c0_131, %c0_132] : memref<7x16x1xf32, #tpu.memory_space<vmem>>, vector<1x16x1xf32>
    %253 = vector.shape_cast %252 : vector<1x16x1xf32> to vector<16x1xf32>
    %254 = vector.broadcast %253 : vector<16x1xf32> to vector<16x1024xf32>
    %255 = arith.addf %251, %254 : vector<16x1024xf32>
    %256 = arith.mulf %213, %255 : vector<16x1024xf32>
    %257 = arith.addf %178, %171 : vector<16x1024xf32>
    %258 = arith.mulf %256, %257 : vector<16x1024xf32>
    %c33_i32_133 = arith.constant 33 : i32
    %259 = tpu.dynamic_rotate %258 by %c33_i32_133 dim 1 : vector<16x1024xf32>, i32 -> vector<16x1024xf32>
    %cst_134 = arith.constant 0.000000e+00 : f32
    %260 = vector.broadcast %cst_134 : f32 to vector<16x1024xf32>
    %261 = arith.select %14, %259, %260 : vector<16x1024xi1>, vector<16x1024xf32>
    %c32_i32_135 = arith.constant 32 : i32
    %262 = tpu.dynamic_rotate %258 by %c32_i32_135 dim 1 : vector<16x1024xf32>, i32 -> vector<16x1024xf32>
    %cst_136 = arith.constant 0.000000e+00 : f32
    %263 = vector.broadcast %cst_136 : f32 to vector<16x1024xf32>
    %264 = arith.select %23, %262, %263 : vector<16x1024xi1>, vector<16x1024xf32>
    %c31_i32_137 = arith.constant 31 : i32
    %265 = tpu.dynamic_rotate %258 by %c31_i32_137 dim 1 : vector<16x1024xf32>, i32 -> vector<16x1024xf32>
    %cst_138 = arith.constant 0.000000e+00 : f32
    %266 = vector.broadcast %cst_138 : f32 to vector<16x1024xf32>
    %267 = arith.select %35, %265, %266 : vector<16x1024xi1>, vector<16x1024xf32>
    %c1_i32_139 = arith.constant 1 : i32
    %268 = tpu.dynamic_rotate %258 by %c1_i32_139 dim 1 : vector<16x1024xf32>, i32 -> vector<16x1024xf32>
    %cst_140 = arith.constant 0.000000e+00 : f32
    %269 = vector.broadcast %cst_140 : f32 to vector<16x1024xf32>
    %270 = arith.select %47, %268, %269 : vector<16x1024xi1>, vector<16x1024xf32>
    %cst_141 = arith.constant 0.000000e+00 : f32
    %271 = vector.broadcast %cst_141 : f32 to vector<16x1024xf32>
    %272 = arith.select %56, %258, %271 : vector<16x1024xi1>, vector<16x1024xf32>
    %c1023_i32_142 = arith.constant 1023 : i32
    %273 = tpu.dynamic_rotate %258 by %c1023_i32_142 dim 1 : vector<16x1024xf32>, i32 -> vector<16x1024xf32>
    %cst_143 = arith.constant 0.000000e+00 : f32
    %274 = vector.broadcast %cst_143 : f32 to vector<16x1024xf32>
    %275 = arith.select %68, %273, %274 : vector<16x1024xi1>, vector<16x1024xf32>
    %c993_i32_144 = arith.constant 993 : i32
    %276 = tpu.dynamic_rotate %258 by %c993_i32_144 dim 1 : vector<16x1024xf32>, i32 -> vector<16x1024xf32>
    %cst_145 = arith.constant 0.000000e+00 : f32
    %277 = vector.broadcast %cst_145 : f32 to vector<16x1024xf32>
    %278 = arith.select %80, %276, %277 : vector<16x1024xi1>, vector<16x1024xf32>
    %c992_i32_146 = arith.constant 992 : i32
    %279 = tpu.dynamic_rotate %258 by %c992_i32_146 dim 1 : vector<16x1024xf32>, i32 -> vector<16x1024xf32>
    %cst_147 = arith.constant 0.000000e+00 : f32
    %280 = vector.broadcast %cst_147 : f32 to vector<16x1024xf32>
    %281 = arith.select %89, %279, %280 : vector<16x1024xi1>, vector<16x1024xf32>
    %c991_i32_148 = arith.constant 991 : i32
    %282 = tpu.dynamic_rotate %258 by %c991_i32_148 dim 1 : vector<16x1024xf32>, i32 -> vector<16x1024xf32>
    %cst_149 = arith.constant 0.000000e+00 : f32
    %283 = vector.broadcast %cst_149 : f32 to vector<16x1024xf32>
    %284 = arith.select %101, %282, %283 : vector<16x1024xi1>, vector<16x1024xf32>
    %285 = tpu.concatenate %261, %264, %267, %270, %272, %275, %278, %281, %284 in 0 : vector<16x1024xf32>, vector<16x1024xf32>, vector<16x1024xf32>, vector<16x1024xf32>, vector<16x1024xf32>, vector<16x1024xf32>, vector<16x1024xf32>, vector<16x1024xf32>, vector<16x1024xf32> -> vector<144x1024xf32>
    %c5 = arith.constant 5 : index
    %c0_150 = arith.constant 0 : index
    %c0_151 = arith.constant 0 : index
    %286 = vector.load %arg2[%c5, %c0_150, %c0_151] : memref<7x16x144xf32, #tpu.memory_space<vmem>>, vector<1x16x144xf32>
    %287 = vector.shape_cast %286 : vector<1x16x144xf32> to vector<16x144xf32>
    %cst_152 = arith.constant dense<0.000000e+00> : vector<16x1024xf32>
    %288 = tpu.matmul %287, %285, %cst_152 {dimension_numbers = #tpu.dot_dimension_numbers<[1], [0], [0], [1], [0, 0, 1, 1], [], []>} : vector<16x144xf32>, vector<144x1024xf32>, vector<16x1024xf32> -> vector<16x1024xf32>
    %c5_153 = arith.constant 5 : index
    %c0_154 = arith.constant 0 : index
    %c0_155 = arith.constant 0 : index
    %289 = vector.load %arg3[%c5_153, %c0_154, %c0_155] : memref<7x16x1xf32, #tpu.memory_space<vmem>>, vector<1x16x1xf32>
    %290 = vector.shape_cast %289 : vector<1x16x1xf32> to vector<16x1xf32>
    %291 = vector.broadcast %290 : vector<16x1xf32> to vector<16x1024xf32>
    %292 = arith.addf %288, %291 : vector<16x1024xf32>
    %293 = arith.addf %292, %220 : vector<16x1024xf32>
    %c0_156 = arith.constant 0 : index
    %c0_157 = arith.constant 0 : index
    %294 = vector.load %arg4[%c0_156, %c0_157] : memref<16x1024xf32, #tpu.memory_space<vmem>>, vector<16x1024xf32>
    tpu.vector_store %arg4[%c0_156, %c0_157], %293 {strides = array<i32>} : memref<16x1024xf32, #tpu.memory_space<vmem>>, vector<16x1024xf32>,
    return
  }
  func.func @transform_0(%arg0: i32) -> (i32, i32) {
    %c0_i32 = arith.constant 0 : i32
    %c0_i32_0 = arith.constant 0 : i32
    %c0_i32_1 = arith.constant 0 : i32
    return %c0_i32, %c0_i32_0 : i32, i32
  }
  func.func @transform_1(%arg0: i32) -> (i32, i32, i32) {
    %c0_i32 = arith.constant 0 : i32
    %c0_i32_0 = arith.constant 0 : i32
    %c0_i32_1 = arith.constant 0 : i32
    %c0_i32_2 = arith.constant 0 : i32
    return %c0_i32, %c0_i32_0, %c0_i32_1 : i32, i32, i32
  }
  func.func @transform_2(%arg0: i32) -> (i32, i32, i32) {
    %c0_i32 = arith.constant 0 : i32
    %c0_i32_0 = arith.constant 0 : i32
    %c0_i32_1 = arith.constant 0 : i32
    %c0_i32_2 = arith.constant 0 : i32
    return %c0_i32, %c0_i32_0, %c0_i32_1 : i32, i32, i32
  }
  func.func @transform_3(%arg0: i32) -> (i32, i32) {
    %c0_i32 = arith.constant 0 : i32
    %c0_i32_0 = arith.constant 0 : i32
    %c0_i32_1 = arith.constant 0 : i32
    return %c0_i32, %c0_i32_0 : i32, i32
  }
}

</mosaic_0001>

<llo_original>
// kernel: model_forward.1
$region0: #{model_forward.1}
  #allocation0 [shape = 'u32[]', space=smem, size = 0x4, offset = 0x4, fixed_abs, tag = 'smem constant byte address 0x4 - core index']
  #allocation1 [shape = 'u32[144,128]{1,0:T(1,128)}', space=vmem, size = 0x12000, scoped, tag = 'internal scratch']
  %s0 = inlined_call_operand.vmem [shape: f32[16,1024], index: 0, kind: input, shape index: {}]
  %s1 = inlined_call_operand.vmem [shape: f32[7,16,144], index: 1, kind: input, shape index: {}]
  %s2 = inlined_call_operand.vmem [shape: f32[7,16,1], index: 2, kind: input, shape index: {}]
  %s3 = inlined_call_operand.vmem [shape: f32[16,1024], index: 3, kind: output, shape index: {}]
  %s4 = sld [smem:[#allocation0]]
  $region22: #{model_forward.1} parent=0
    _
  %s6 = ssub.s32 1, %s4
  %s7 = scalar_select 0, %s6, %s4
  // Predicated region
  $region2: #{model_forward.1} parent=0 // pred_check
    _
  $region3: #{model_forward.1} parent=0 // pred_check_branch
    %9 = sbr.rel (0) target = $region5
  $region4: #{model_forward.1} parent=0 // pred_region
    _
  $region5: #{model_forward.1} parent=0 // pred_fallthru
    _
  // Predicated region
  $region6: #{model_forward.1} parent=0 // pred_check
    _
  $region7: #{model_forward.1} parent=0 // pred_check_branch
    %11 = sbr.rel (0) target = $region9
  $region8: #{model_forward.1} parent=0 // pred_region
    _
  $region9: #{model_forward.1} parent=0 // pred_fallthru
    _
  // Predicated region
  $region10: #{model_forward.1} parent=0 // pred_check
    _
  $region11: #{model_forward.1} parent=0 // pred_check_branch
    %13 = sbr.rel (0) target = $region13
  $region12: #{model_forward.1} parent=0 // pred_region
    _
  $region13: #{model_forward.1} parent=0 // pred_fallthru
    _
  %v14 = vlaneseq
  %v15 = vand.u32 %v14, 127
  %v16 = vadd.s32 %v15, 128
  %v17 = vadd.s32 %v15, 256
  %v18 = vadd.s32 %v15, 384
  %v19 = vadd.s32 %v15, 512
  %v20 = vadd.s32 %v15, 640
  %v21 = vadd.s32 %v15, 768
  %v22 = vadd.s32 %v15, 896
  %v23 = vand.u32 %v15, 31
  %v24 = vand.u32 %v16, 31
  %v25 = vand.u32 %v17, 31
  %v26 = vand.u32 %v18, 31
  %v27 = vand.u32 %v19, 31
  %v28 = vand.u32 %v20, 31
  %v29 = vand.u32 %v21, 31
  %v30 = vand.u32 %v22, 31
  %v31 = vadd.s32 %v15, 4294967263
  %v32 = vadd.s32 %v16, 4294967263
  %v33 = vadd.s32 %v17, 4294967263
  %v34 = vadd.s32 %v18, 4294967263
  %v35 = vadd.s32 %v19, 4294967263
  %v36 = vadd.s32 %v20, 4294967263
  %v37 = vadd.s32 %v21, 4294967263
  %v38 = vadd.s32 %v22, 4294967263
  %vm39 = vcmp.ge.s32.totalorder %v31, 0
  %vm40 = vcmp.ge.s32.totalorder %v32, 0
  %vm41 = vcmp.ge.s32.totalorder %v33, 0
  %vm42 = vcmp.ge.s32.totalorder %v34, 0
  %vm43 = vcmp.ge.s32.totalorder %v35, 0
  %vm44 = vcmp.ge.s32.totalorder %v36, 0
  %vm45 = vcmp.ge.s32.totalorder %v37, 0
  %vm46 = vcmp.ge.s32.totalorder %v38, 0
  %vm47 = vcmp.lt.s32.totalorder %v31, 1024
  %vm48 = vcmp.lt.s32.totalorder %v32, 1024
  %vm49 = vcmp.lt.s32.totalorder %v33, 1024
  %vm50 = vcmp.lt.s32.totalorder %v34, 1024
  %vm51 = vcmp.lt.s32.totalorder %v35, 1024
  %vm52 = vcmp.lt.s32.totalorder %v36, 1024
  %vm53 = vcmp.lt.s32.totalorder %v37, 1024
  %vm54 = vcmp.lt.s32.totalorder %v38, 1024
  %vm55 = vmand %vm39, %vm47
  %vm56 = vmand %vm40, %vm48
  %vm57 = vmand %vm41, %vm49
  %vm58 = vmand %vm42, %vm50
  %vm59 = vmand %vm43, %vm51
  %vm60 = vmand %vm44, %vm52
  %vm61 = vmand %vm45, %vm53
  %vm62 = vmand %vm46, %vm54
  %vm63 = vcmp.ge.s32.totalorder %v23, 1
  %vm64 = vcmp.ge.s32.totalorder %v24, 1
  %vm65 = vcmp.ge.s32.totalorder %v25, 1
  %vm66 = vcmp.ge.s32.totalorder %v26, 1
  %vm67 = vcmp.ge.s32.totalorder %v27, 1
  %vm68 = vcmp.ge.s32.totalorder %v28, 1
  %vm69 = vcmp.ge.s32.totalorder %v29, 1
  %vm70 = vcmp.ge.s32.totalorder %v30, 1
  %vm71 = vmand %vm55, %vm63
  %vm72 = vmand %vm56, %vm64
  %vm73 = vmand %vm57, %vm65
  %vm74 = vmand %vm58, %vm66
  %vm75 = vmand %vm59, %vm67
  %vm76 = vmand %vm60, %vm68
  %vm77 = vmand %vm61, %vm69
  %vm78 = vmand %vm62, %vm70
  %v79 = vadd.s32 %v15, 4294967264
  %v80 = vadd.s32 %v16, 4294967264
  %v81 = vadd.s32 %v17, 4294967264
  %v82 = vadd.s32 %v18, 4294967264
  %v83 = vadd.s32 %v19, 4294967264
  %v84 = vadd.s32 %v20, 4294967264
  %v85 = vadd.s32 %v21, 4294967264
  %v86 = vadd.s32 %v22, 4294967264
  %vm87 = vcmp.ge.s32.totalorder %v79, 0
  %vm88 = vcmp.ge.s32.totalorder %v80, 0
  %vm89 = vcmp.ge.s32.totalorder %v81, 0
  %vm90 = vcmp.ge.s32.totalorder %v82, 0
  %vm91 = vcmp.ge.s32.totalorder %v83, 0
  %vm92 = vcmp.ge.s32.totalorder %v84, 0
  %vm93 = vcmp.ge.s32.totalorder %v85, 0
  %vm94 = vcmp.ge.s32.totalorder %v86, 0
  %vm95 = vcmp.lt.s32.totalorder %v79, 1024
  %vm96 = vcmp.lt.s32.totalorder %v80, 1024
  %vm97 = vcmp.lt.s32.totalorder %v81, 1024
  %vm98 = vcmp.lt.s32.totalorder %v82, 1024
  %vm99 = vcmp.lt.s32.totalorder %v83, 1024
  %vm100 = vcmp.lt.s32.totalorder %v84, 1024
  %vm101 = vcmp.lt.s32.totalorder %v85, 1024
  %vm102 = vcmp.lt.s32.totalorder %v86, 1024
  %vm103 = vmand %vm87, %vm95
  %vm104 = vmand %vm88, %vm96
  %vm105 = vmand %vm89, %vm97
  %vm106 = vmand %vm90, %vm98
  %vm107 = vmand %vm91, %vm99
  %vm108 = vmand %vm92, %vm100
  %vm109 = vmand %vm93, %vm101
  %vm110 = vmand %vm94, %vm102
  %v111 = vadd.s32 %v15, 4294967265
  %v112 = vadd.s32 %v16, 4294967265
  %v113 = vadd.s32 %v17, 4294967265
  %v114 = vadd.s32 %v18, 4294967265
  %v115 = vadd.s32 %v19, 4294967265
  %v116 = vadd.s32 %v20, 4294967265
  %v117 = vadd.s32 %v21, 4294967265
  %v118 = vadd.s32 %v22, 4294967265
  %vm119 = vcmp.ge.s32.totalorder %v111, 0
  %vm120 = vcmp.ge.s32.totalorder %v112, 0
  %vm121 = vcmp.ge.s32.totalorder %v113, 0
  %vm122 = vcmp.ge.s32.totalorder %v114, 0
  %vm123 = vcmp.ge.s32.totalorder %v115, 0
  %vm124 = vcmp.ge.s32.totalorder %v116, 0
  %vm125 = vcmp.ge.s32.totalorder %v117, 0
  %vm126 = vcmp.ge.s32.totalorder %v118, 0
  %vm127 = vcmp.lt.s32.totalorder %v111, 1024
  %vm128 = vcmp.lt.s32.totalorder %v112, 1024
  %vm129 = vcmp.lt.s32.totalorder %v113, 1024
  %vm130 = vcmp.lt.s32.totalorder %v114, 1024
  %vm131 = vcmp.lt.s32.totalorder %v115, 1024
  %vm132 = vcmp.lt.s32.totalorder %v116, 1024
  %vm133 = vcmp.lt.s32.totalorder %v117, 1024
  %vm134 = vcmp.lt.s32.totalorder %v118, 1024
  %vm135 = vmand %vm119, %vm127
  %vm136 = vmand %vm120, %vm128
  %vm137 = vmand %vm121, %vm129
  %vm138 = vmand %vm122, %vm130
  %vm139 = vmand %vm123, %vm131
  %vm140 = vmand %vm124, %vm132
  %vm141 = vmand %vm125, %vm133
  %vm142 = vmand %vm126, %vm134
  %vm143 = vcmp.le.s32.totalorder %v23, 30
  %vm144 = vcmp.le.s32.totalorder %v24, 30
  %vm145 = vcmp.le.s32.totalorder %v25, 30
  %vm146 = vcmp.le.s32.totalorder %v26, 30
  %vm147 = vcmp.le.s32.totalorder %v27, 30
  %vm148 = vcmp.le.s32.totalorder %v28, 30
  %vm149 = vcmp.le.s32.totalorder %v29, 30
  %vm150 = vcmp.le.s32.totalorder %v30, 30
  %vm151 = vmand %vm135, %vm143
  %vm152 = vmand %vm136, %vm144
  %vm153 = vmand %vm137, %vm145
  %vm154 = vmand %vm138, %vm146
  %vm155 = vmand %vm139, %vm147
  %vm156 = vmand %vm140, %vm148
  %vm157 = vmand %vm141, %vm149
  %vm158 = vmand %vm142, %vm150
  %v159 = vadd.s32 %v15, 4294967295
  %v160 = vadd.s32 %v16, 4294967295
  %v161 = vadd.s32 %v17, 4294967295
  %v162 = vadd.s32 %v18, 4294967295
  %v163 = vadd.s32 %v19, 4294967295
  %v164 = vadd.s32 %v20, 4294967295
  %v165 = vadd.s32 %v21, 4294967295
  %v166 = vadd.s32 %v22, 4294967295
  %vm167 = vcmp.ge.s32.totalorder %v159, 0
  %vm168 = vcmp.ge.s32.totalorder %v160, 0
  %vm169 = vcmp.ge.s32.totalorder %v161, 0
  %vm170 = vcmp.ge.s32.totalorder %v162, 0
  %vm171 = vcmp.ge.s32.totalorder %v163, 0
  %vm172 = vcmp.ge.s32.totalorder %v164, 0
  %vm173 = vcmp.ge.s32.totalorder %v165, 0
  %vm174 = vcmp.ge.s32.totalorder %v166, 0
  %vm175 = vcmp.lt.s32.totalorder %v159, 1024
  %vm176 = vcmp.lt.s32.totalorder %v160, 1024
  %vm177 = vcmp.lt.s32.totalorder %v161, 1024
  %vm178 = vcmp.lt.s32.totalorder %v162, 1024
  %vm179 = vcmp.lt.s32.totalorder %v163, 1024
  %vm180 = vcmp.lt.s32.totalorder %v164, 1024
  %vm181 = vcmp.lt.s32.totalorder %v165, 1024
  %vm182 = vcmp.lt.s32.totalorder %v166, 1024
  %vm183 = vmand %vm167, %vm175
  %vm184 = vmand %vm168, %vm176
  %vm185 = vmand %vm169, %vm177
  %vm186 = vmand %vm170, %vm178
  %vm187 = vmand %vm171, %vm179
  %vm188 = vmand %vm172, %vm180
  %vm189 = vmand %vm173, %vm181
  %vm190 = vmand %vm174, %vm182
  %vm191 = vmand %vm183, %vm63
  %vm192 = vmand %vm184, %vm64
  %vm193 = vmand %vm185, %vm65
  %vm194 = vmand %vm186, %vm66
  %vm195 = vmand %vm187, %vm67
  %vm196 = vmand %vm188, %vm68
  %vm197 = vmand %vm189, %vm69
  %vm198 = vmand %vm190, %vm70
  %vm199 = vcmp.ge.s32.totalorder %v15, 0
  %vm200 = vcmp.ge.s32.totalorder %v16, 0
  %vm201 = vcmp.ge.s32.totalorder %v17, 0
  %vm202 = vcmp.ge.s32.totalorder %v18, 0
  %vm203 = vcmp.ge.s32.totalorder %v19, 0
  %vm204 = vcmp.ge.s32.totalorder %v20, 0
  %vm205 = vcmp.ge.s32.totalorder %v21, 0
  %vm206 = vcmp.ge.s32.totalorder %v22, 0
  %vm207 = vcmp.lt.s32.totalorder %v15, 1024
  %vm208 = vcmp.lt.s32.totalorder %v16, 1024
  %vm209 = vcmp.lt.s32.totalorder %v17, 1024
  %vm210 = vcmp.lt.s32.totalorder %v18, 1024
  %vm211 = vcmp.lt.s32.totalorder %v19, 1024
  %vm212 = vcmp.lt.s32.totalorder %v20, 1024
  %vm213 = vcmp.lt.s32.totalorder %v21, 1024
  %vm214 = vcmp.lt.s32.totalorder %v22, 1024
  %vm215 = vmand %vm199, %vm207
  %vm216 = vmand %vm200, %vm208
  %vm217 = vmand %vm201, %vm209
  %vm218 = vmand %vm202, %vm210
  %vm219 = vmand %vm203, %vm211
  %vm220 = vmand %vm204, %vm212
  %vm221 = vmand %vm205, %vm213
  %vm222 = vmand %vm206, %vm214
  %v223 = vadd.s32 %v15, 1
  %v224 = vadd.s32 %v16, 1
  %v225 = vadd.s32 %v17, 1
  %v226 = vadd.s32 %v18, 1
  %v227 = vadd.s32 %v19, 1
  %v228 = vadd.s32 %v20, 1
  %v229 = vadd.s32 %v21, 1
  %v230 = vadd.s32 %v22, 1
  %vm231 = vcmp.ge.s32.totalorder %v223, 0
  %vm232 = vcmp.ge.s32.totalorder %v224, 0
  %vm233 = vcmp.ge.s32.totalorder %v225, 0
  %vm234 = vcmp.ge.s32.totalorder %v226, 0
  %vm235 = vcmp.ge.s32.totalorder %v227, 0
  %vm236 = vcmp.ge.s32.totalorder %v228, 0
  %vm237 = vcmp.ge.s32.totalorder %v229, 0
  %vm238 = vcmp.ge.s32.totalorder %v230, 0
  %vm239 = vcmp.lt.s32.totalorder %v223, 1024
  %vm240 = vcmp.lt.s32.totalorder %v224, 1024
  %vm241 = vcmp.lt.s32.totalorder %v225, 1024
  %vm242 = vcmp.lt.s32.totalorder %v226, 1024
  %vm243 = vcmp.lt.s32.totalorder %v227, 1024
  %vm244 = vcmp.lt.s32.totalorder %v228, 1024
  %vm245 = vcmp.lt.s32.totalorder %v229, 1024
  %vm246 = vcmp.lt.s32.totalorder %v230, 1024
  %vm247 = vmand %vm231, %vm239
  %vm248 = vmand %vm232, %vm240
  %vm249 = vmand %vm233, %vm241
  %vm250 = vmand %vm234, %vm242
  %vm251 = vmand %vm235, %vm243
  %vm252 = vmand %vm236, %vm244
  %vm253 = vmand %vm237, %vm245
  %vm254 = vmand %vm238, %vm246
  %vm255 = vmand %vm247, %vm143
  %vm256 = vmand %vm248, %vm144
  %vm257 = vmand %vm249, %vm145
  %vm258 = vmand %vm250, %vm146
  %vm259 = vmand %vm251, %vm147
  %vm260 = vmand %vm252, %vm148
  %vm261 = vmand %vm253, %vm149
  %vm262 = vmand %vm254, %vm150
  %v263 = vadd.s32 %v15, 31
  %v264 = vadd.s32 %v16, 31
  %v265 = vadd.s32 %v17, 31
  %v266 = vadd.s32 %v18, 31
  %v267 = vadd.s32 %v19, 31
  %v268 = vadd.s32 %v20, 31
  %v269 = vadd.s32 %v21, 31
  %v270 = vadd.s32 %v22, 31
  %vm271 = vcmp.ge.s32.totalorder %v263, 0
  %vm272 = vcmp.ge.s32.totalorder %v264, 0
  %vm273 = vcmp.ge.s32.totalorder %v265, 0
  %vm274 = vcmp.ge.s32.totalorder %v266, 0
  %vm275 = vcmp.ge.s32.totalorder %v267, 0
  %vm276 = vcmp.ge.s32.totalorder %v268, 0
  %vm277 = vcmp.ge.s32.totalorder %v269, 0
  %vm278 = vcmp.ge.s32.totalorder %v270, 0
  %vm279 = vcmp.lt.s32.totalorder %v263, 1024
  %vm280 = vcmp.lt.s32.totalorder %v264, 1024
  %vm281 = vcmp.lt.s32.totalorder %v265, 1024
  %vm282 = vcmp.lt.s32.totalorder %v266, 1024
  %vm283 = vcmp.lt.s32.totalorder %v267, 1024
  %vm284 = vcmp.lt.s32.totalorder %v268, 1024
  %vm285 = vcmp.lt.s32.totalorder %v269, 1024
  %vm286 = vcmp.lt.s32.totalorder %v270, 1024
  %vm287 = vmand %vm271, %vm279
  %vm288 = vmand %vm272, %vm280
  %vm289 = vmand %vm273, %vm281
  %vm290 = vmand %vm274, %vm282
  %vm291 = vmand %vm275, %vm283
  %vm292 = vmand %vm276, %vm284
  %vm293 = vmand %vm277, %vm285
  %vm294 = vmand %vm278, %vm286
  %vm295 = vmand %vm287, %vm63
  %vm296 = vmand %vm288, %vm64
  %vm297 = vmand %vm289, %vm65
  %vm298 = vmand %vm290, %vm66
  %vm299 = vmand %vm291, %vm67
  %vm300 = vmand %vm292, %vm68
  %vm301 = vmand %vm293, %vm69
  %vm302 = vmand %vm294, %vm70
  %v303 = vadd.s32 %v15, 32
  %v304 = vadd.s32 %v16, 32
  %v305 = vadd.s32 %v17, 32
  %v306 = vadd.s32 %v18, 32
  %v307 = vadd.s32 %v19, 32
  %v308 = vadd.s32 %v20, 32
  %v309 = vadd.s32 %v21, 32
  %v310 = vadd.s32 %v22, 32
  %vm311 = vcmp.ge.s32.totalorder %v303, 0
  %vm312 = vcmp.ge.s32.totalorder %v304, 0
  %vm313 = vcmp.ge.s32.totalorder %v305, 0
  %vm314 = vcmp.ge.s32.totalorder %v306, 0
  %vm315 = vcmp.ge.s32.totalorder %v307, 0
  %vm316 = vcmp.ge.s32.totalorder %v308, 0
  %vm317 = vcmp.ge.s32.totalorder %v309, 0
  %vm318 = vcmp.ge.s32.totalorder %v310, 0
  %vm319 = vcmp.lt.s32.totalorder %v303, 1024
  %vm320 = vcmp.lt.s32.totalorder %v304, 1024
  %vm321 = vcmp.lt.s32.totalorder %v305, 1024
  %vm322 = vcmp.lt.s32.totalorder %v306, 1024
  %vm323 = vcmp.lt.s32.totalorder %v307, 1024
  %vm324 = vcmp.lt.s32.totalorder %v308, 1024
  %vm325 = vcmp.lt.s32.totalorder %v309, 1024
  %vm326 = vcmp.lt.s32.totalorder %v310, 1024
  %vm327 = vmand %vm311, %vm319
  %vm328 = vmand %vm312, %vm320
  %vm329 = vmand %vm313, %vm321
  %vm330 = vmand %vm314, %vm322
  %vm331 = vmand %vm315, %vm323
  %vm332 = vmand %vm316, %vm324
  %vm333 = vmand %vm317, %vm325
  %vm334 = vmand %vm318, %vm326
  %v335 = vadd.s32 %v15, 33
  %v336 = vadd.s32 %v16, 33
  %v337 = vadd.s32 %v17, 33
  %v338 = vadd.s32 %v18, 33
  %v339 = vadd.s32 %v19, 33
  %v340 = vadd.s32 %v20, 33
  %v341 = vadd.s32 %v21, 33
  %v342 = vadd.s32 %v22, 33
  %vm343 = vcmp.ge.s32.totalorder %v335, 0
  %vm344 = vcmp.ge.s32.totalorder %v336, 0
  %vm345 = vcmp.ge.s32.totalorder %v337, 0
  %vm346 = vcmp.ge.s32.totalorder %v338, 0
  %vm347 = vcmp.ge.s32.totalorder %v339, 0
  %vm348 = vcmp.ge.s32.totalorder %v340, 0
  %vm349 = vcmp.ge.s32.totalorder %v341, 0
  %vm350 = vcmp.ge.s32.totalorder %v342, 0
  %vm351 = vcmp.lt.s32.totalorder %v335, 1024
  %vm352 = vcmp.lt.s32.totalorder %v336, 1024
  %vm353 = vcmp.lt.s32.totalorder %v337, 1024
  %vm354 = vcmp.lt.s32.totalorder %v338, 1024
  %vm355 = vcmp.lt.s32.totalorder %v339, 1024
  %vm356 = vcmp.lt.s32.totalorder %v340, 1024
  %vm357 = vcmp.lt.s32.totalorder %v341, 1024
  %vm358 = vcmp.lt.s32.totalorder %v342, 1024
  %vm359 = vmand %vm343, %vm351
  %vm360 = vmand %vm344, %vm352
  %vm361 = vmand %vm345, %vm353
  %vm362 = vmand %vm346, %vm354
  %vm363 = vmand %vm347, %vm355
  %vm364 = vmand %vm348, %vm356
  %vm365 = vmand %vm349, %vm357
  %vm366 = vmand %vm350, %vm358
  %vm367 = vmand %vm359, %vm143
  %vm368 = vmand %vm360, %vm144
  %vm369 = vmand %vm361, %vm145
  %vm370 = vmand %vm362, %vm146
  %vm371 = vmand %vm363, %vm147
  %vm372 = vmand %vm364, %vm148
  %vm373 = vmand %vm365, %vm149
  %vm374 = vmand %vm366, %vm150
  %v375 = vld [vmem:[%s0] sm:$0xff]
  %v376 = vld [vmem:[%s0 + $0x8] sm:$0xff]
  %v377 = vld [vmem:[%s0 + $0x10] sm:$0xff]
  %v378 = vld [vmem:[%s0 + $0x18] sm:$0xff]
  %v379 = vld [vmem:[%s0 + $0x20] sm:$0xff]
  %v380 = vld [vmem:[%s0 + $0x28] sm:$0xff]
  %v381 = vld [vmem:[%s0 + $0x30] sm:$0xff]
  %v382 = vld [vmem:[%s0 + $0x38] sm:$0xff]
  %v383 = vld [vmem:[%s0 + $0x40] sm:$0xff]
  %v384 = vld [vmem:[%s0 + $0x48] sm:$0xff]
  %v385 = vld [vmem:[%s0 + $0x50] sm:$0xff]
  %v386 = vld [vmem:[%s0 + $0x58] sm:$0xff]
  %v387 = vld [vmem:[%s0 + $0x60] sm:$0xff]
  %v388 = vld [vmem:[%s0 + $0x68] sm:$0xff]
  %v389 = vld [vmem:[%s0 + $0x70] sm:$0xff]
  %v390 = vld [vmem:[%s0 + $0x78] sm:$0xff]
  %391 = vrot.lane.b32.xlu0 %v375, 33
  %v392 = vpop.permute.xlu0 %391
  %393 = vrot.lane.b32.xlu0 %v383, 33
  %v394 = vpop.permute.xlu0 %393
  %395 = vrot.lane.b32.xlu0 %v376, 33
  %v396 = vpop.permute.xlu0 %395
  %397 = vrot.lane.b32.xlu0 %v384, 33
  %v398 = vpop.permute.xlu0 %397
  %399 = vrot.lane.b32.xlu0 %v377, 33
  %v400 = vpop.permute.xlu0 %399
  %401 = vrot.lane.b32.xlu0 %v385, 33
  %v402 = vpop.permute.xlu0 %401
  %403 = vrot.lane.b32.xlu0 %v378, 33
  %v404 = vpop.permute.xlu0 %403
  %405 = vrot.lane.b32.xlu0 %v386, 33
  %v406 = vpop.permute.xlu0 %405
  %407 = vrot.lane.b32.xlu0 %v379, 33
  %v408 = vpop.permute.xlu0 %407
  %409 = vrot.lane.b32.xlu0 %v387, 33
  %v410 = vpop.permute.xlu0 %409
  %411 = vrot.lane.b32.xlu0 %v380, 33
  %v412 = vpop.permute.xlu0 %411
  %413 = vrot.lane.b32.xlu0 %v388, 33
  %v414 = vpop.permute.xlu0 %413
  %415 = vrot.lane.b32.xlu0 %v381, 33
  %v416 = vpop.permute.xlu0 %415
  %417 = vrot.lane.b32.xlu0 %v389, 33
  %v418 = vpop.permute.xlu0 %417
  %419 = vrot.lane.b32.xlu0 %v382, 33
  %v420 = vpop.permute.xlu0 %419
  %421 = vrot.lane.b32.xlu0 %v390, 33
  %v422 = vpop.permute.xlu0 %421
  %vm423 = vcmp.lt.s32.totalorder %v15, 33
  %v424 = vsel %vm423, %v416, %v420
  %v425 = vsel %vm423, %v418, %v422
  %v426 = vsel %vm423, %v412, %v416
  %v427 = vsel %vm423, %v414, %v418
  %v428 = vsel %vm423, %v408, %v412
  %v429 = vsel %vm423, %v410, %v414
  %v430 = vsel %vm423, %v404, %v408
  %v431 = vsel %vm423, %v406, %v410
  %v432 = vsel %vm423, %v400, %v404
  %v433 = vsel %vm423, %v402, %v406
  %v434 = vsel %vm423, %v396, %v400
  %v435 = vsel %vm423, %v398, %v402
  %v436 = vsel %vm423, %v392, %v396
  %v437 = vsel %vm423, %v394, %v398
  %v438 = vsel %vm423, %v420, %v392
  %v439 = vsel %vm423, %v422, %v394
  %v440 = vsel %vm71, %v438, 0.0
  %v441 = vsel %vm72, %v436, 0.0
  %v442 = vsel %vm73, %v434, 0.0
  %v443 = vsel %vm74, %v432, 0.0
  %v444 = vsel %vm75, %v430, 0.0
  %v445 = vsel %vm76, %v428, 0.0
  %v446 = vsel %vm77, %v426, 0.0
  %v447 = vsel %vm78, %v424, 0.0
  %v448 = vsel %vm71, %v439, 0.0
  %v449 = vsel %vm72, %v437, 0.0
  %v450 = vsel %vm73, %v435, 0.0
  %v451 = vsel %vm74, %v433, 0.0
  %v452 = vsel %vm75, %v431, 0.0
  %v453 = vsel %vm76, %v429, 0.0
  %v454 = vsel %vm77, %v427, 0.0
  %v455 = vsel %vm78, %v425, 0.0
  %456 = vrot.lane.b32.xlu0 %v375, 32
  %v457 = vpop.permute.xlu0 %456
  %458 = vrot.lane.b32.xlu0 %v383, 32
  %v459 = vpop.permute.xlu0 %458
  %460 = vrot.lane.b32.xlu0 %v376, 32
  %v461 = vpop.permute.xlu0 %460
  %462 = vrot.lane.b32.xlu0 %v384, 32
  %v463 = vpop.permute.xlu0 %462
  %464 = vrot.lane.b32.xlu0 %v377, 32
  %v465 = vpop.permute.xlu0 %464
  %466 = vrot.lane.b32.xlu0 %v385, 32
  %v467 = vpop.permute.xlu0 %466
  %468 = vrot.lane.b32.xlu0 %v378, 32
  %v469 = vpop.permute.xlu0 %468
  %470 = vrot.lane.b32.xlu0 %v386, 32
  %v471 = vpop.permute.xlu0 %470
  %472 = vrot.lane.b32.xlu0 %v379, 32
  %v473 = vpop.permute.xlu0 %472
  %474 = vrot.lane.b32.xlu0 %v387, 32
  %v475 = vpop.permute.xlu0 %474
  %476 = vrot.lane.b32.xlu0 %v380, 32
  %v477 = vpop.permute.xlu0 %476
  %478 = vrot.lane.b32.xlu0 %v388, 32
  %v479 = vpop.permute.xlu0 %478
  %480 = vrot.lane.b32.xlu0 %v381, 32
  %v481 = vpop.permute.xlu0 %480
  %482 = vrot.lane.b32.xlu0 %v389, 32
  %v483 = vpop.permute.xlu0 %482
  %484 = vrot.lane.b32.xlu0 %v382, 32
  %v485 = vpop.permute.xlu0 %484
  %486 = vrot.lane.b32.xlu0 %v390, 32
  %v487 = vpop.permute.xlu0 %486
  %vm488 = vcmp.lt.s32.totalorder %v15, 32
  %v489 = vsel %vm488, %v481, %v485
  %v490 = vsel %vm488, %v483, %v487
  %v491 = vsel %vm488, %v477, %v481
  %v492 = vsel %vm488, %v479, %v483
  %v493 = vsel %vm488, %v473, %v477
  %v494 = vsel %vm488, %v475, %v479
  %v495 = vsel %vm488, %v469, %v473
  %v496 = vsel %vm488, %v471, %v475
  %v497 = vsel %vm488, %v465, %v469
  %v498 = vsel %vm488, %v467, %v471
  %v499 = vsel %vm488, %v461, %v465
  %v500 = vsel %vm488, %v463, %v467
  %v501 = vsel %vm488, %v457, %v461
  %v502 = vsel %vm488, %v459, %v463
  %v503 = vsel %vm488, %v485, %v457
  %v504 = vsel %vm488, %v487, %v459
  %v505 = vsel %vm103, %v503, 0.0
  %v506 = vsel %vm104, %v501, 0.0
  %v507 = vsel %vm105, %v499, 0.0
  %v508 = vsel %vm106, %v497, 0.0
  %v509 = vsel %vm107, %v495, 0.0
  %v510 = vsel %vm108, %v493, 0.0
  %v511 = vsel %vm109, %v491, 0.0
  %v512 = vsel %vm110, %v489, 0.0
  %v513 = vsel %vm103, %v504, 0.0
  %v514 = vsel %vm104, %v502, 0.0
  %v515 = vsel %vm105, %v500, 0.0
  %v516 = vsel %vm106, %v498, 0.0
  %v517 = vsel %vm107, %v496, 0.0
  %v518 = vsel %vm108, %v494, 0.0
  %v519 = vsel %vm109, %v492, 0.0
  %v520 = vsel %vm110, %v490, 0.0
  %521 = vrot.lane.b32.xlu0 %v375, 31
  %v522 = vpop.permute.xlu0 %521
  %523 = vrot.lane.b32.xlu0 %v383, 31
  %v524 = vpop.permute.xlu0 %523
  %525 = vrot.lane.b32.xlu0 %v376, 31
  %v526 = vpop.permute.xlu0 %525
  %527 = vrot.lane.b32.xlu0 %v384, 31
  %v528 = vpop.permute.xlu0 %527
  %529 = vrot.lane.b32.xlu0 %v377, 31
  %v530 = vpop.permute.xlu0 %529
  %531 = vrot.lane.b32.xlu0 %v385, 31
  %v532 = vpop.permute.xlu0 %531
  %533 = vrot.lane.b32.xlu0 %v378, 31
  %v534 = vpop.permute.xlu0 %533
  %535 = vrot.lane.b32.xlu0 %v386, 31
  %v536 = vpop.permute.xlu0 %535
  %537 = vrot.lane.b32.xlu0 %v379, 31
  %v538 = vpop.permute.xlu0 %537
  %539 = vrot.lane.b32.xlu0 %v387, 31
  %v540 = vpop.permute.xlu0 %539
  %541 = vrot.lane.b32.xlu0 %v380, 31
  %v542 = vpop.permute.xlu0 %541
  %543 = vrot.lane.b32.xlu0 %v388, 31
  %v544 = vpop.permute.xlu0 %543
  %545 = vrot.lane.b32.xlu0 %v381, 31
  %v546 = vpop.permute.xlu0 %545
  %547 = vrot.lane.b32.xlu0 %v389, 31
  %v548 = vpop.permute.xlu0 %547
  %549 = vrot.lane.b32.xlu0 %v382, 31
  %v550 = vpop.permute.xlu0 %549
  %551 = vrot.lane.b32.xlu0 %v390, 31
  %v552 = vpop.permute.xlu0 %551
  %vm553 = vcmp.lt.s32.totalorder %v15, 31
  %v554 = vsel %vm553, %v546, %v550
  %v555 = vsel %vm553, %v548, %v552
  %v556 = vsel %vm553, %v542, %v546
  %v557 = vsel %vm553, %v544, %v548
  %v558 = vsel %vm553, %v538, %v542
  %v559 = vsel %vm553, %v540, %v544
  %v560 = vsel %vm553, %v534, %v538
  %v561 = vsel %vm553, %v536, %v540
  %v562 = vsel %vm553, %v530, %v534
  %v563 = vsel %vm553, %v532, %v536
  %v564 = vsel %vm553, %v526, %v530
  %v565 = vsel %vm553, %v528, %v532
  %v566 = vsel %vm553, %v522, %v526
  %v567 = vsel %vm553, %v524, %v528
  %v568 = vsel %vm553, %v550, %v522
  %v569 = vsel %vm553, %v552, %v524
  %v570 = vsel %vm151, %v568, 0.0
  %v571 = vsel %vm152, %v566, 0.0
  %v572 = vsel %vm153, %v564, 0.0
  %v573 = vsel %vm154, %v562, 0.0
  %v574 = vsel %vm155, %v560, 0.0
  %v575 = vsel %vm156, %v558, 0.0
  %v576 = vsel %vm157, %v556, 0.0
  %v577 = vsel %vm158, %v554, 0.0
  %v578 = vsel %vm151, %v569, 0.0
  %v579 = vsel %vm152, %v567, 0.0
  %v580 = vsel %vm153, %v565, 0.0
  %v581 = vsel %vm154, %v563, 0.0
  %v582 = vsel %vm155, %v561, 0.0
  %v583 = vsel %vm156, %v559, 0.0
  %v584 = vsel %vm157, %v557, 0.0
  %v585 = vsel %vm158, %v555, 0.0
  %586 = vrot.lane.b32.xlu0 %v375, 1
  %v587 = vpop.permute.xlu0 %586
  %588 = vrot.lane.b32.xlu0 %v383, 1
  %v589 = vpop.permute.xlu0 %588
  %590 = vrot.lane.b32.xlu0 %v376, 1
  %v591 = vpop.permute.xlu0 %590
  %592 = vrot.lane.b32.xlu0 %v384, 1
  %v593 = vpop.permute.xlu0 %592
  %594 = vrot.lane.b32.xlu0 %v377, 1
  %v595 = vpop.permute.xlu0 %594
  %596 = vrot.lane.b32.xlu0 %v385, 1
  %v597 = vpop.permute.xlu0 %596
  %598 = vrot.lane.b32.xlu0 %v378, 1
  %v599 = vpop.permute.xlu0 %598
  %600 = vrot.lane.b32.xlu0 %v386, 1
  %v601 = vpop.permute.xlu0 %600
  %602 = vrot.lane.b32.xlu0 %v379, 1
  %v603 = vpop.permute.xlu0 %602
  %604 = vrot.lane.b32.xlu0 %v387, 1
  %v605 = vpop.permute.xlu0 %604
  %606 = vrot.lane.b32.xlu0 %v380, 1
  %v607 = vpop.permute.xlu0 %606
  %608 = vrot.lane.b32.xlu0 %v388, 1
  %v609 = vpop.permute.xlu0 %608
  %610 = vrot.lane.b32.xlu0 %v381, 1
  %v611 = vpop.permute.xlu0 %610
  %612 = vrot.lane.b32.xlu0 %v389, 1
  %v613 = vpop.permute.xlu0 %612
  %614 = vrot.lane.b32.xlu0 %v382, 1
  %v615 = vpop.permute.xlu0 %614
  %616 = vrot.lane.b32.xlu0 %v390, 1
  %v617 = vpop.permute.xlu0 %616
  %vm618 = vcmp.lt.s32.totalorder %v15, 1
  %v619 = vsel %vm618, %v611, %v615
  %v620 = vsel %vm618, %v613, %v617
  %v621 = vsel %vm618, %v607, %v611
  %v622 = vsel %vm618, %v609, %v613
  %v623 = vsel %vm618, %v603, %v607
  %v624 = vsel %vm618, %v605, %v609
  %v625 = vsel %vm618, %v599, %v603
  %v626 = vsel %vm618, %v601, %v605
  %v627 = vsel %vm618, %v595, %v599
  %v628 = vsel %vm618, %v597, %v601
  %v629 = vsel %vm618, %v591, %v595
  %v630 = vsel %vm618, %v593, %v597
  %v631 = vsel %vm618, %v587, %v591
  %v632 = vsel %vm618, %v589, %v593
  %v633 = vsel %vm618, %v615, %v587
  %v634 = vsel %vm618, %v617, %v589
  %v635 = vsel %vm191, %v633, 0.0
  %v636 = vsel %vm192, %v631, 0.0
  %v637 = vsel %vm193, %v629, 0.0
  %v638 = vsel %vm194, %v627, 0.0
  %v639 = vsel %vm195, %v625, 0.0
  %v640 = vsel %vm196, %v623, 0.0
  %v641 = vsel %vm197, %v621, 0.0
  %v642 = vsel %vm198, %v619, 0.0
  %v643 = vsel %vm191, %v634, 0.0
  %v644 = vsel %vm192, %v632, 0.0
  %v645 = vsel %vm193, %v630, 0.0
  %v646 = vsel %vm194, %v628, 0.0
  %v647 = vsel %vm195, %v626, 0.0
  %v648 = vsel %vm196, %v624, 0.0
  %v649 = vsel %vm197, %v622, 0.0
  %v650 = vsel %vm198, %v620, 0.0
  %v651 = vsel %vm215, %v375, 0.0
  %v652 = vsel %vm216, %v376, 0.0
  %v653 = vsel %vm217, %v377, 0.0
  %v654 = vsel %vm218, %v378, 0.0
  %v655 = vsel %vm219, %v379, 0.0
  %v656 = vsel %vm220, %v380, 0.0
  %v657 = vsel %vm221, %v381, 0.0
  %v658 = vsel %vm222, %v382, 0.0
  %v659 = vsel %vm215, %v383, 0.0
  %v660 = vsel %vm216, %v384, 0.0
  %v661 = vsel %vm217, %v385, 0.0
  %v662 = vsel %vm218, %v386, 0.0
  %v663 = vsel %vm219, %v387, 0.0
  %v664 = vsel %vm220, %v388, 0.0
  %v665 = vsel %vm221, %v389, 0.0
  %v666 = vsel %vm222, %v390, 0.0
  %667 = vrot.lane.b32.xlu0 %v375, 127
  %v668 = vpop.permute.xlu0 %667
  %669 = vrot.lane.b32.xlu0 %v383, 127
  %v670 = vpop.permute.xlu0 %669
  %671 = vrot.lane.b32.xlu0 %v376, 127
  %v672 = vpop.permute.xlu0 %671
  %673 = vrot.lane.b32.xlu0 %v384, 127
  %v674 = vpop.permute.xlu0 %673
  %675 = vrot.lane.b32.xlu0 %v377, 127
  %v676 = vpop.permute.xlu0 %675
  %677 = vrot.lane.b32.xlu0 %v385, 127
  %v678 = vpop.permute.xlu0 %677
  %679 = vrot.lane.b32.xlu0 %v378, 127
  %v680 = vpop.permute.xlu0 %679
  %681 = vrot.lane.b32.xlu0 %v386, 127
  %v682 = vpop.permute.xlu0 %681
  %683 = vrot.lane.b32.xlu0 %v379, 127
  %v684 = vpop.permute.xlu0 %683
  %685 = vrot.lane.b32.xlu0 %v387, 127
  %v686 = vpop.permute.xlu0 %685
  %687 = vrot.lane.b32.xlu0 %v380, 127
  %v688 = vpop.permute.xlu0 %687
  %689 = vrot.lane.b32.xlu0 %v388, 127
  %v690 = vpop.permute.xlu0 %689
  %691 = vrot.lane.b32.xlu0 %v381, 127
  %v692 = vpop.permute.xlu0 %691
  %693 = vrot.lane.b32.xlu0 %v389, 127
  %v694 = vpop.permute.xlu0 %693
  %695 = vrot.lane.b32.xlu0 %v382, 127
  %v696 = vpop.permute.xlu0 %695
  %697 = vrot.lane.b32.xlu0 %v390, 127
  %v698 = vpop.permute.xlu0 %697
  %vm699 = vcmp.lt.s32.totalorder %v15, 127
  %v700 = vsel %vm699, %v692, %v696
  %v701 = vsel %vm699, %v694, %v698
  %v702 = vsel %vm699, %v688, %v692
  %v703 = vsel %vm699, %v690, %v694
  %v704 = vsel %vm699, %v684, %v688
  %v705 = vsel %vm699, %v686, %v690
  %v706 = vsel %vm699, %v680, %v684
  %v707 = vsel %vm699, %v682, %v686
  %v708 = vsel %vm699, %v676, %v680
  %v709 = vsel %vm699, %v678, %v682
  %v710 = vsel %vm699, %v672, %v676
  %v711 = vsel %vm699, %v674, %v678
  %v712 = vsel %vm699, %v668, %v672
  %v713 = vsel %vm699, %v670, %v674
  %v714 = vsel %vm699, %v696, %v668
  %v715 = vsel %vm699, %v698, %v670
  %v716 = vsel %vm255, %v712, 0.0
  %v717 = vsel %vm256, %v710, 0.0
  %v718 = vsel %vm257, %v708, 0.0
  %v719 = vsel %vm258, %v706, 0.0
  %v720 = vsel %vm259, %v704, 0.0
  %v721 = vsel %vm260, %v702, 0.0
  %v722 = vsel %vm261, %v700, 0.0
  %v723 = vsel %vm262, %v714, 0.0
  %v724 = vsel %vm255, %v713, 0.0
  %v725 = vsel %vm256, %v711, 0.0
  %v726 = vsel %vm257, %v709, 0.0
  %v727 = vsel %vm258, %v707, 0.0
  %v728 = vsel %vm259, %v705, 0.0
  %v729 = vsel %vm260, %v703, 0.0
  %v730 = vsel %vm261, %v701, 0.0
  %v731 = vsel %vm262, %v715, 0.0
  %732 = vrot.lane.b32.xlu0 %v375, 97
  %v733 = vpop.permute.xlu0 %732
  %734 = vrot.lane.b32.xlu0 %v383, 97
  %v735 = vpop.permute.xlu0 %734
  %736 = vrot.lane.b32.xlu0 %v376, 97
  %v737 = vpop.permute.xlu0 %736
  %738 = vrot.lane.b32.xlu0 %v384, 97
  %v739 = vpop.permute.xlu0 %738
  %740 = vrot.lane.b32.xlu0 %v377, 97
  %v741 = vpop.permute.xlu0 %740
  %742 = vrot.lane.b32.xlu0 %v385, 97
  %v743 = vpop.permute.xlu0 %742
  %744 = vrot.lane.b32.xlu0 %v378, 97
  %v745 = vpop.permute.xlu0 %744
  %746 = vrot.lane.b32.xlu0 %v386, 97
  %v747 = vpop.permute.xlu0 %746
  %748 = vrot.lane.b32.xlu0 %v379, 97
  %v749 = vpop.permute.xlu0 %748
  %750 = vrot.lane.b32.xlu0 %v387, 97
  %v751 = vpop.permute.xlu0 %750
  %752 = vrot.lane.b32.xlu0 %v380, 97
  %v753 = vpop.permute.xlu0 %752
  %754 = vrot.lane.b32.xlu0 %v388, 97
  %v755 = vpop.permute.xlu0 %754
  %756 = vrot.lane.b32.xlu0 %v381, 97
  %v757 = vpop.permute.xlu0 %756
  %758 = vrot.lane.b32.xlu0 %v389, 97
  %v759 = vpop.permute.xlu0 %758
  %760 = vrot.lane.b32.xlu0 %v382, 97
  %v761 = vpop.permute.xlu0 %760
  %762 = vrot.lane.b32.xlu0 %v390, 97
  %v763 = vpop.permute.xlu0 %762
  %vm764 = vcmp.lt.s32.totalorder %v15, 97
  %v765 = vsel %vm764, %v757, %v761
  %v766 = vsel %vm764, %v759, %v763
  %v767 = vsel %vm764, %v753, %v757
  %v768 = vsel %vm764, %v755, %v759
  %v769 = vsel %vm764, %v749, %v753
  %v770 = vsel %vm764, %v751, %v755
  %v771 = vsel %vm764, %v745, %v749
  %v772 = vsel %vm764, %v747, %v751
  %v773 = vsel %vm764, %v741, %v745
  %v774 = vsel %vm764, %v743, %v747
  %v775 = vsel %vm764, %v737, %v741
  %v776 = vsel %vm764, %v739, %v743
  %v777 = vsel %vm764, %v733, %v737
  %v778 = vsel %vm764, %v735, %v739
  %v779 = vsel %vm764, %v761, %v733
  %v780 = vsel %vm764, %v763, %v735
  %v781 = vsel %vm295, %v777, 0.0
  %v782 = vsel %vm296, %v775, 0.0
  %v783 = vsel %vm297, %v773, 0.0
  %v784 = vsel %vm298, %v771, 0.0
  %v785 = vsel %vm299, %v769, 0.0
  %v786 = vsel %vm300, %v767, 0.0
  %v787 = vsel %vm301, %v765, 0.0
  %v788 = vsel %vm302, %v779, 0.0
  %v789 = vsel %vm295, %v778, 0.0
  %v790 = vsel %vm296, %v776, 0.0
  %v791 = vsel %vm297, %v774, 0.0
  %v792 = vsel %vm298, %v772, 0.0
  %v793 = vsel %vm299, %v770, 0.0
  %v794 = vsel %vm300, %v768, 0.0
  %v795 = vsel %vm301, %v766, 0.0
  %v796 = vsel %vm302, %v780, 0.0
  %797 = vrot.lane.b32.xlu0 %v375, 96
  %v798 = vpop.permute.xlu0 %797
  %799 = vrot.lane.b32.xlu0 %v383, 96
  %v800 = vpop.permute.xlu0 %799
  %801 = vrot.lane.b32.xlu0 %v376, 96
  %v802 = vpop.permute.xlu0 %801
  %803 = vrot.lane.b32.xlu0 %v384, 96
  %v804 = vpop.permute.xlu0 %803
  %805 = vrot.lane.b32.xlu0 %v377, 96
  %v806 = vpop.permute.xlu0 %805
  %807 = vrot.lane.b32.xlu0 %v385, 96
  %v808 = vpop.permute.xlu0 %807
  %809 = vrot.lane.b32.xlu0 %v378, 96
  %v810 = vpop.permute.xlu0 %809
  %811 = vrot.lane.b32.xlu0 %v386, 96
  %v812 = vpop.permute.xlu0 %811
  %813 = vrot.lane.b32.xlu0 %v379, 96
  %v814 = vpop.permute.xlu0 %813
  %815 = vrot.lane.b32.xlu0 %v387, 96
  %v816 = vpop.permute.xlu0 %815
  %817 = vrot.lane.b32.xlu0 %v380, 96
  %v818 = vpop.permute.xlu0 %817
  %819 = vrot.lane.b32.xlu0 %v388, 96
  %v820 = vpop.permute.xlu0 %819
  %821 = vrot.lane.b32.xlu0 %v381, 96
  %v822 = vpop.permute.xlu0 %821
  %823 = vrot.lane.b32.xlu0 %v389, 96
  %v824 = vpop.permute.xlu0 %823
  %825 = vrot.lane.b32.xlu0 %v382, 96
  %v826 = vpop.permute.xlu0 %825
  %827 = vrot.lane.b32.xlu0 %v390, 96
  %v828 = vpop.permute.xlu0 %827
  %vm829 = vcmp.lt.s32.totalorder %v15, 96
  %v830 = vsel %vm829, %v822, %v826
  %v831 = vsel %vm829, %v824, %v828
  %v832 = vsel %vm829, %v818, %v822
  %v833 = vsel %vm829, %v820, %v824
  %v834 = vsel %vm829, %v814, %v818
  %v835 = vsel %vm829, %v816, %v820
  %v836 = vsel %vm829, %v810, %v814
  %v837 = vsel %vm829, %v812, %v816
  %v838 = vsel %vm829, %v806, %v810
  %v839 = vsel %vm829, %v808, %v812
  %v840 = vsel %vm829, %v802, %v806
  %v841 = vsel %vm829, %v804, %v808
  %v842 = vsel %vm829, %v798, %v802
  %v843 = vsel %vm829, %v800, %v804
  %v844 = vsel %vm829, %v826, %v798
  %v845 = vsel %vm829, %v828, %v800
  %v846 = vsel %vm327, %v842, 0.0
  %v847 = vsel %vm328, %v840, 0.0
  %v848 = vsel %vm329, %v838, 0.0
  %v849 = vsel %vm330, %v836, 0.0
  %v850 = vsel %vm331, %v834, 0.0
  %v851 = vsel %vm332, %v832, 0.0
  %v852 = vsel %vm333, %v830, 0.0
  %v853 = vsel %vm334, %v844, 0.0
  %v854 = vsel %vm327, %v843, 0.0
  %v855 = vsel %vm328, %v841, 0.0
  %v856 = vsel %vm329, %v839, 0.0
  %v857 = vsel %vm330, %v837, 0.0
  %v858 = vsel %vm331, %v835, 0.0
  %v859 = vsel %vm332, %v833, 0.0
  %v860 = vsel %vm333, %v831, 0.0
  %v861 = vsel %vm334, %v845, 0.0
  %862 = vrot.lane.b32.xlu0 %v375, 95
  %v863 = vpop.permute.xlu0 %862
  %864 = vrot.lane.b32.xlu0 %v383, 95
  %v865 = vpop.permute.xlu0 %864
  %866 = vrot.lane.b32.xlu0 %v376, 95
  %v867 = vpop.permute.xlu0 %866
  %868 = vrot.lane.b32.xlu0 %v384, 95
  %v869 = vpop.permute.xlu0 %868
  %870 = vrot.lane.b32.xlu0 %v377, 95
  %v871 = vpop.permute.xlu0 %870
  %872 = vrot.lane.b32.xlu0 %v385, 95
  %v873 = vpop.permute.xlu0 %872
  %874 = vrot.lane.b32.xlu0 %v378, 95
  %v875 = vpop.permute.xlu0 %874
  %876 = vrot.lane.b32.xlu0 %v386, 95
  %v877 = vpop.permute.xlu0 %876
  %878 = vrot.lane.b32.xlu0 %v379, 95
  %v879 = vpop.permute.xlu0 %878
  %880 = vrot.lane.b32.xlu0 %v387, 95
  %v881 = vpop.permute.xlu0 %880
  %882 = vrot.lane.b32.xlu0 %v380, 95
  %v883 = vpop.permute.xlu0 %882
  %884 = vrot.lane.b32.xlu0 %v388, 95
  %v885 = vpop.permute.xlu0 %884
  %886 = vrot.lane.b32.xlu0 %v381, 95
  %v887 = vpop.permute.xlu0 %886
  %888 = vrot.lane.b32.xlu0 %v389, 95
  %v889 = vpop.permute.xlu0 %888
  %890 = vrot.lane.b32.xlu0 %v382, 95
  %v891 = vpop.permute.xlu0 %890
  %892 = vrot.lane.b32.xlu0 %v390, 95
  %v893 = vpop.permute.xlu0 %892
  %vm894 = vcmp.lt.s32.totalorder %v15, 95
  %v895 = vsel %vm894, %v887, %v891
  %v896 = vsel %vm894, %v889, %v893
  %v897 = vsel %vm894, %v883, %v887
  %v898 = vsel %vm894, %v885, %v889
  %v899 = vsel %vm894, %v879, %v883
  %v900 = vsel %vm894, %v881, %v885
  %v901 = vsel %vm894, %v875, %v879
  %v902 = vsel %vm894, %v877, %v881
  %v903 = vsel %vm894, %v871, %v875
  %v904 = vsel %vm894, %v873, %v877
  %v905 = vsel %vm894, %v867, %v871
  %v906 = vsel %vm894, %v869, %v873
  %v907 = vsel %vm894, %v863, %v867
  %v908 = vsel %vm894, %v865, %v869
  %v909 = vsel %vm894, %v891, %v863
  %v910 = vsel %vm894, %v893, %v865
  %v911 = vsel %vm367, %v907, 0.0
  %v912 = vsel %vm368, %v905, 0.0
  %v913 = vsel %vm369, %v903, 0.0
  %v914 = vsel %vm370, %v901, 0.0
  %v915 = vsel %vm371, %v899, 0.0
  %v916 = vsel %vm372, %v897, 0.0
  %v917 = vsel %vm373, %v895, 0.0
  %v918 = vsel %vm374, %v909, 0.0
  %v919 = vsel %vm367, %v908, 0.0
  %v920 = vsel %vm368, %v906, 0.0
  %v921 = vsel %vm369, %v904, 0.0
  %v922 = vsel %vm370, %v902, 0.0
  %v923 = vsel %vm371, %v900, 0.0
  %v924 = vsel %vm372, %v898, 0.0
  %v925 = vsel %vm373, %v896, 0.0
  %v926 = vsel %vm374, %v910, 0.0
  %v927 = vld [vmem:[%s1] sm:$0xff]
  %v928 = vld [vmem:[%s1 + $0x8] sm:$0xff]
  %v929 = vld [vmem:[%s1 + $0x10] sm:$0xff]
  %v930 = vld [vmem:[%s1 + $0x18] sm:$0xff]
  %v931 = vld [vmem:[%s2] sm:$0xff]
  %v932 = vld [vmem:[%s2 + $0x8] sm:$0xff]
  %934 = vset.pattern.permute.xlu0 0
  %935 = vperm.xlu0 %934, %v931
  %v936 = vpop.permute.xlu0 %935
  %939 = vset.pattern.permute.xlu0 0
  %940 = vperm.xlu0 %939, %v932
  %v941 = vpop.permute.xlu0 %940
  %vm943 = vcmask 130048
  %v945 = vsel %vm943, %v928, 0
  %v948 = vsel %vm943, %v930, 0
  %950 = vmatprep.subr.mxu0 %v441
  %951 = vmatpush1.msra.mxu0 %v440
  %952 = vmatprep.subr.mxu0 %v449
  %953 = vmatpush1.msra.mxu0 %v448
  %954 = vmatprep.subr.mxu0 %v506
  %955 = vmatpush1.msra.mxu0 %v505
  %956 = vmatprep.subr.mxu0 %v514
  %957 = vmatpush1.msra.mxu0 %v513
  %958 = vmatprep.subr.mxu0 %v571
  %959 = vmatpush1.msra.mxu0 %v570
  %960 = vmatprep.subr.mxu0 %v579
  %961 = vmatpush1.msra.mxu0 %v578
  %962 = vmatprep.subr.mxu0 %v636
  %963 = vmatpush1.msra.mxu0 %v635
  %964 = vmatprep.subr.mxu0 %v644
  %965 = vmatpush1.msra.mxu0 %v643
  %966 = vmatprep.subr.mxu0 %v652
  %967 = vmatpush1.msra.mxu0 %v651
  %968 = vmatprep.subr.mxu0 %v660
  %969 = vmatpush1.msra.mxu0 %v659
  %970 = vmatprep.subr.mxu0 %v717
  %971 = vmatpush1.msra.mxu0 %v716
  %972 = vmatprep.subr.mxu0 %v725
  %973 = vmatpush1.msra.mxu0 %v724
  %974 = vmatprep.subr.mxu0 %v782
  %975 = vmatpush1.msra.mxu0 %v781
  %976 = vmatprep.subr.mxu0 %v790
  %977 = vmatpush1.msra.mxu0 %v789
  %978 = vmatprep.subr.mxu0 %v847
  %979 = vmatpush1.msra.mxu0 %v846
  %980 = vmatprep.subr.mxu0 %v855
  %981 = vmatpush1.msra.mxu0 %v854
  %982 = vmatprep.subr.mxu0 %v912
  %983 = vmatpush1.msra.mxu0 %v911
  %984 = vmatprep.subr.mxu0 %v920
  %985 = vmatpush1.msra.mxu0 %v919
  %986 = vmatprep.subr.mxu0 0.0
  %987 = vmatpush1.msra.mxu0 0.0
  %988 = vmatprep.subr.mxu0 0.0
  %989 = vmatpush1.msra.mxu0 0.0
  %990 = vmatprep.subr.mxu0 0.0
  %991 = vmatpush1.msra.mxu0 0.0
  %992 = vmatprep.subr.mxu0 0.0
  %993 = vmatpush1.msra.mxu0 0.0
  %994 = vmatprep.subr.mxu0 0.0
  %995 = vmatpush1.msra.mxu0 0.0
  %996 = vmatprep.subr.mxu0 0.0
  %997 = vmatpush1.msra.mxu0 0.0
  %998 = vmatprep.subr.mxu0 0.0
  %999 = vmatpush1.msra.mxu0 0.0
  %1000 = vmatprep.subr.mxu0 0.0
  %1001 = vmatpush1.msra.mxu0 0.0
  %1002 = vmatprep.subr.mxu0 0.0
  %1003 = vmatpush1.msra.mxu0 0.0
  %1004 = vmatprep.subr.mxu0 0.0
  %1005 = vmatpush1.msra.mxu0 0.0
  %1006 = vmatprep.subr.mxu0 0.0
  %1007 = vmatpush1.msra.mxu0 0.0
  %1008 = vmatprep.subr.mxu0 0.0
  %1009 = vmatpush1.msra.mxu0 0.0
  %1010 = vmatprep.subr.mxu0 0.0
  %1011 = vmatpush1.msra.mxu0 0.0
  %1012 = vmatprep.subr.mxu0 0.0
  %1013 = vmatpush1.msra.mxu0 0.0
  %1014 = vmatprep.mubr.f32.mxu0 %v945
  %1015 = vmatmul.mubr.f32.gmra.mrb[0].mxu0 %v927
  %v1016 = vpop.f32.mrb[0].mxu0
  %v1017 = vadd.f32 %v936, %v1016
  %v1018 = vpop.f32.mrb[0].mxu0
  %v1019 = vadd.f32 %v936, %v1018
  %1020 = vmatprep.mubr.f32.mxu0 %v948
  %1021 = vmatmul.mubr.f32.gmra.mrb[0].mxu0 %v929
  %v1022 = vpop.f32.mrb[0].mxu0
  %v1023 = vadd.f32 %v941, %v1022
  %v1024 = vpop.f32.mrb[0].mxu0
  %v1025 = vadd.f32 %v941, %v1024
  %1026 = vdwg.mxu0
  %1027 = vmatprep.subr.mxu0 %v443
  %1028 = vmatpush1.msra.mxu0 %v442
  %1029 = vmatprep.subr.mxu0 %v451
  %1030 = vmatpush1.msra.mxu0 %v450
  %1031 = vmatprep.subr.mxu0 %v508
  %1032 = vmatpush1.msra.mxu0 %v507
  %1033 = vmatprep.subr.mxu0 %v516
  %1034 = vmatpush1.msra.mxu0 %v515
  %1035 = vmatprep.subr.mxu0 %v573
  %1036 = vmatpush1.msra.mxu0 %v572
  %1037 = vmatprep.subr.mxu0 %v581
  %1038 = vmatpush1.msra.mxu0 %v580
  %1039 = vmatprep.subr.mxu0 %v638
  %1040 = vmatpush1.msra.mxu0 %v637
  %1041 = vmatprep.subr.mxu0 %v646
  %1042 = vmatpush1.msra.mxu0 %v645
  %1043 = vmatprep.subr.mxu0 %v654
  %1044 = vmatpush1.msra.mxu0 %v653
  %1045 = vmatprep.subr.mxu0 %v662
  %1046 = vmatpush1.msra.mxu0 %v661
  %1047 = vmatprep.subr.mxu0 %v719
  %1048 = vmatpush1.msra.mxu0 %v718
  %1049 = vmatprep.subr.mxu0 %v727
  %1050 = vmatpush1.msra.mxu0 %v726
  %1051 = vmatprep.subr.mxu0 %v784
  %1052 = vmatpush1.msra.mxu0 %v783
  %1053 = vmatprep.subr.mxu0 %v792
  %1054 = vmatpush1.msra.mxu0 %v791
  %1055 = vmatprep.subr.mxu0 %v849
  %1056 = vmatpush1.msra.mxu0 %v848
  %1057 = vmatprep.subr.mxu0 %v857
  %1058 = vmatpush1.msra.mxu0 %v856
  %1059 = vmatprep.subr.mxu0 %v914
  %1060 = vmatpush1.msra.mxu0 %v913
  %1061 = vmatprep.subr.mxu0 %v922
  %1062 = vmatpush1.msra.mxu0 %v921
  %1063 = vmatprep.subr.mxu0 0.0
  %1064 = vmatpush1.msra.mxu0 0.0
  %1065 = vmatprep.subr.mxu0 0.0
  %1066 = vmatpush1.msra.mxu0 0.0
  %1067 = vmatprep.subr.mxu0 0.0
  %1068 = vmatpush1.msra.mxu0 0.0
  %1069 = vmatprep.subr.mxu0 0.0
  %1070 = vmatpush1.msra.mxu0 0.0
  %1071 = vmatprep.subr.mxu0 0.0
  %1072 = vmatpush1.msra.mxu0 0.0
  %1073 = vmatprep.subr.mxu0 0.0
  %1074 = vmatpush1.msra.mxu0 0.0
  %1075 = vmatprep.subr.mxu0 0.0
  %1076 = vmatpush1.msra.mxu0 0.0
  %1077 = vmatprep.subr.mxu0 0.0
  %1078 = vmatpush1.msra.mxu0 0.0
  %1079 = vmatprep.subr.mxu0 0.0
  %1080 = vmatpush1.msra.mxu0 0.0
  %1081 = vmatprep.subr.mxu0 0.0
  %1082 = vmatpush1.msra.mxu0 0.0
  %1083 = vmatprep.subr.mxu0 0.0
  %1084 = vmatpush1.msra.mxu0 0.0
  %1085 = vmatprep.subr.mxu0 0.0
  %1086 = vmatpush1.msra.mxu0 0.0
  %1087 = vmatprep.subr.mxu0 0.0
  %1088 = vmatpush1.msra.mxu0 0.0
  %1089 = vmatprep.subr.mxu0 0.0
  %1090 = vmatpush1.msra.mxu0 0.0
  %1091 = vmatprep.mubr.f32.mxu0 %v945
  %1092 = vmatmul.mubr.f32.gmra.mrb[0].mxu0 %v927
  %v1093 = vpop.f32.mrb[0].mxu0
  %v1094 = vadd.f32 %v936, %v1093
  %v1095 = vpop.f32.mrb[0].mxu0
  %v1096 = vadd.f32 %v936, %v1095
  %1097 = vmatprep.mubr.f32.mxu0 %v948
  %1098 = vmatmul.mubr.f32.gmra.mrb[0].mxu0 %v929
  %v1099 = vpop.f32.mrb[0].mxu0
  %v1100 = vadd.f32 %v941, %v1099
  %v1101 = vpop.f32.mrb[0].mxu0
  %v1102 = vadd.f32 %v941, %v1101
  %1103 = vdwg.mxu0
  %1104 = vmatprep.subr.mxu0 %v445
  %1105 = vmatpush1.msra.mxu0 %v444
  %1106 = vmatprep.subr.mxu0 %v453
  %1107 = vmatpush1.msra.mxu0 %v452
  %1108 = vmatprep.subr.mxu0 %v510
  %1109 = vmatpush1.msra.mxu0 %v509
  %1110 = vmatprep.subr.mxu0 %v518
  %1111 = vmatpush1.msra.mxu0 %v517
  %1112 = vmatprep.subr.mxu0 %v575
  %1113 = vmatpush1.msra.mxu0 %v574
  %1114 = vmatprep.subr.mxu0 %v583
  %1115 = vmatpush1.msra.mxu0 %v582
  %1116 = vmatprep.subr.mxu0 %v640
  %1117 = vmatpush1.msra.mxu0 %v639
  %1118 = vmatprep.subr.mxu0 %v648
  %1119 = vmatpush1.msra.mxu0 %v647
  %1120 = vmatprep.subr.mxu0 %v656
  %1121 = vmatpush1.msra.mxu0 %v655
  %1122 = vmatprep.subr.mxu0 %v664
  %1123 = vmatpush1.msra.mxu0 %v663
  %1124 = vmatprep.subr.mxu0 %v721
  %1125 = vmatpush1.msra.mxu0 %v720
  %1126 = vmatprep.subr.mxu0 %v729
  %1127 = vmatpush1.msra.mxu0 %v728
  %1128 = vmatprep.subr.mxu0 %v786
  %1129 = vmatpush1.msra.mxu0 %v785
  %1130 = vmatprep.subr.mxu0 %v794
  %1131 = vmatpush1.msra.mxu0 %v793
  %1132 = vmatprep.subr.mxu0 %v851
  %1133 = vmatpush1.msra.mxu0 %v850
  %1134 = vmatprep.subr.mxu0 %v859
  %1135 = vmatpush1.msra.mxu0 %v858
  %1136 = vmatprep.subr.mxu0 %v916
  %1137 = vmatpush1.msra.mxu0 %v915
  %1138 = vmatprep.subr.mxu0 %v924
  %1139 = vmatpush1.msra.mxu0 %v923
  %1140 = vmatprep.subr.mxu0 0.0
  %1141 = vmatpush1.msra.mxu0 0.0
  %1142 = vmatprep.subr.mxu0 0.0
  %1143 = vmatpush1.msra.mxu0 0.0
  %1144 = vmatprep.subr.mxu0 0.0
  %1145 = vmatpush1.msra.mxu0 0.0
  %1146 = vmatprep.subr.mxu0 0.0
  %1147 = vmatpush1.msra.mxu0 0.0
  %1148 = vmatprep.subr.mxu0 0.0
  %1149 = vmatpush1.msra.mxu0 0.0
  %1150 = vmatprep.subr.mxu0 0.0
  %1151 = vmatpush1.msra.mxu0 0.0
  %1152 = vmatprep.subr.mxu0 0.0
  %1153 = vmatpush1.msra.mxu0 0.0
  %1154 = vmatprep.subr.mxu0 0.0
  %1155 = vmatpush1.msra.mxu0 0.0
  %1156 = vmatprep.subr.mxu0 0.0
  %1157 = vmatpush1.msra.mxu0 0.0
  %1158 = vmatprep.subr.mxu0 0.0
  %1159 = vmatpush1.msra.mxu0 0.0
  %1160 = vmatprep.subr.mxu0 0.0
  %1161 = vmatpush1.msra.mxu0 0.0
  %1162 = vmatprep.subr.mxu0 0.0
  %1163 = vmatpush1.msra.mxu0 0.0
  %1164 = vmatprep.subr.mxu0 0.0
  %1165 = vmatpush1.msra.mxu0 0.0
  %1166 = vmatprep.subr.mxu0 0.0
  %1167 = vmatpush1.msra.mxu0 0.0
  %1168 = vmatprep.mubr.f32.mxu0 %v945
  %1169 = vmatmul.mubr.f32.gmra.mrb[0].mxu0 %v927
  %v1170 = vpop.f32.mrb[0].mxu0
  %v1171 = vadd.f32 %v936, %v1170
  %v1172 = vpop.f32.mrb[0].mxu0
  %v1173 = vadd.f32 %v936, %v1172
  %1174 = vmatprep.mubr.f32.mxu0 %v948
  %1175 = vmatmul.mubr.f32.gmra.mrb[0].mxu0 %v929
  %v1176 = vpop.f32.mrb[0].mxu0
  %v1177 = vadd.f32 %v941, %v1176
  %v1178 = vpop.f32.mrb[0].mxu0
  %v1179 = vadd.f32 %v941, %v1178
  %1180 = vdwg.mxu0
  %1181 = vmatprep.subr.mxu0 %v447
  %1182 = vmatpush1.msra.mxu0 %v446
  %1183 = vmatprep.subr.mxu0 %v455
  %1184 = vmatpush1.msra.mxu0 %v454
  %1185 = vmatprep.subr.mxu0 %v512
  %1186 = vmatpush1.msra.mxu0 %v511
  %1187 = vmatprep.subr.mxu0 %v520
  %1188 = vmatpush1.msra.mxu0 %v519
  %1189 = vmatprep.subr.mxu0 %v577
  %1190 = vmatpush1.msra.mxu0 %v576
  %1191 = vmatprep.subr.mxu0 %v585
  %1192 = vmatpush1.msra.mxu0 %v584
  %1193 = vmatprep.subr.mxu0 %v642
  %1194 = vmatpush1.msra.mxu0 %v641
  %1195 = vmatprep.subr.mxu0 %v650
  %1196 = vmatpush1.msra.mxu0 %v649
  %1197 = vmatprep.subr.mxu0 %v658
  %1198 = vmatpush1.msra.mxu0 %v657
  %1199 = vmatprep.subr.mxu0 %v666
  %1200 = vmatpush1.msra.mxu0 %v665
  %1201 = vmatprep.subr.mxu0 %v723
  %1202 = vmatpush1.msra.mxu0 %v722
  %1203 = vmatprep.subr.mxu0 %v731
  %1204 = vmatpush1.msra.mxu0 %v730
  %1205 = vmatprep.subr.mxu0 %v788
  %1206 = vmatpush1.msra.mxu0 %v787
  %1207 = vmatprep.subr.mxu0 %v796
  %1208 = vmatpush1.msra.mxu0 %v795
  %1209 = vmatprep.subr.mxu0 %v853
  %1210 = vmatpush1.msra.mxu0 %v852
  %1211 = vmatprep.subr.mxu0 %v861
  %1212 = vmatpush1.msra.mxu0 %v860
  %1213 = vmatprep.subr.mxu0 %v918
  %1214 = vmatpush1.msra.mxu0 %v917
  %1215 = vmatprep.subr.mxu0 %v926
  %1216 = vmatpush1.msra.mxu0 %v925
  %1217 = vmatprep.subr.mxu0 0.0
  %1218 = vmatpush1.msra.mxu0 0.0
  %1219 = vmatprep.subr.mxu0 0.0
  %1220 = vmatpush1.msra.mxu0 0.0
  %1221 = vmatprep.subr.mxu0 0.0
  %1222 = vmatpush1.msra.mxu0 0.0
  %1223 = vmatprep.subr.mxu0 0.0
  %1224 = vmatpush1.msra.mxu0 0.0
  %1225 = vmatprep.subr.mxu0 0.0
  %1226 = vmatpush1.msra.mxu0 0.0
  %1227 = vmatprep.subr.mxu0 0.0
  %1228 = vmatpush1.msra.mxu0 0.0
  %1229 = vmatprep.subr.mxu0 0.0
  %1230 = vmatpush1.msra.mxu0 0.0
  %1231 = vmatprep.subr.mxu0 0.0
  %1232 = vmatpush1.msra.mxu0 0.0
  %1233 = vmatprep.subr.mxu0 0.0
  %1234 = vmatpush1.msra.mxu0 0.0
  %1235 = vmatprep.subr.mxu0 0.0
  %1236 = vmatpush1.msra.mxu0 0.0
  %1237 = vmatprep.subr.mxu0 0.0
  %1238 = vmatpush1.msra.mxu0 0.0
  %1239 = vmatprep.subr.mxu0 0.0
  %1240 = vmatpush1.msra.mxu0 0.0
  %1241 = vmatprep.subr.mxu0 0.0
  %1242 = vmatpush1.msra.mxu0 0.0
  %1243 = vmatprep.subr.mxu0 0.0
  %1244 = vmatpush1.msra.mxu0 0.0
  %1245 = vmatprep.mubr.f32.mxu0 %v945
  %1246 = vmatmul.mubr.f32.gmra.mrb[0].mxu0 %v927
  %v1247 = vpop.f32.mrb[0].mxu0
  %v1248 = vadd.f32 %v936, %v1247
  %v1249 = vpop.f32.mrb[0].mxu0
  %v1250 = vadd.f32 %v936, %v1249
  %1251 = vmatprep.mubr.f32.mxu0 %v948
  %1252 = vmatmul.mubr.f32.gmra.mrb[0].mxu0 %v929
  %v1253 = vpop.f32.mrb[0].mxu0
  %v1254 = vadd.f32 %v941, %v1253
  %v1255 = vpop.f32.mrb[0].mxu0
  %v1256 = vadd.f32 %v941, %v1255
  %1257 = vdwg.mxu0
  %v1258 = vadd.f32 %v1017, %v375
  %v1259 = vadd.f32 %v1019, %v376
  %v1260 = vadd.f32 %v1094, %v377
  %v1261 = vadd.f32 %v1096, %v378
  %v1262 = vadd.f32 %v1171, %v379
  %v1263 = vadd.f32 %v1173, %v380
  %v1264 = vadd.f32 %v1248, %v381
  %v1265 = vadd.f32 %v1250, %v382
  %v1266 = vadd.f32 %v1023, %v383
  %v1267 = vadd.f32 %v1025, %v384
  %v1268 = vadd.f32 %v1100, %v385
  %v1269 = vadd.f32 %v1102, %v386
  %v1270 = vadd.f32 %v1177, %v387
  %v1271 = vadd.f32 %v1179, %v388
  %v1272 = vadd.f32 %v1254, %v389
  %v1273 = vadd.f32 %v1256, %v390
  %1274 = vrot.lane.b32.xlu0 %v1258, 33
  %v1275 = vpop.permute.xlu0 %1274
  %1276 = vrot.lane.b32.xlu0 %v1266, 33
  %v1277 = vpop.permute.xlu0 %1276
  %1278 = vrot.lane.b32.xlu0 %v1259, 33
  %v1279 = vpop.permute.xlu0 %1278
  %1280 = vrot.lane.b32.xlu0 %v1267, 33
  %v1281 = vpop.permute.xlu0 %1280
  %1282 = vrot.lane.b32.xlu0 %v1260, 33
  %v1283 = vpop.permute.xlu0 %1282
  %1284 = vrot.lane.b32.xlu0 %v1268, 33
  %v1285 = vpop.permute.xlu0 %1284
  %1286 = vrot.lane.b32.xlu0 %v1261, 33
  %v1287 = vpop.permute.xlu0 %1286
  %1288 = vrot.lane.b32.xlu0 %v1269, 33
  %v1289 = vpop.permute.xlu0 %1288
  %1290 = vrot.lane.b32.xlu0 %v1262, 33
  %v1291 = vpop.permute.xlu0 %1290
  %1292 = vrot.lane.b32.xlu0 %v1270, 33
  %v1293 = vpop.permute.xlu0 %1292
  %1294 = vrot.lane.b32.xlu0 %v1263, 33
  %v1295 = vpop.permute.xlu0 %1294
  %1296 = vrot.lane.b32.xlu0 %v1271, 33
  %v1297 = vpop.permute.xlu0 %1296
  %1298 = vrot.lane.b32.xlu0 %v1264, 33
  %v1299 = vpop.permute.xlu0 %1298
  %1300 = vrot.lane.b32.xlu0 %v1272, 33
  %v1301 = vpop.permute.xlu0 %1300
  %1302 = vrot.lane.b32.xlu0 %v1265, 33
  %v1303 = vpop.permute.xlu0 %1302
  %1304 = vrot.lane.b32.xlu0 %v1273, 33
  %v1305 = vpop.permute.xlu0 %1304
  %v1306 = vsel %vm423, %v1299, %v1303
  %v1307 = vsel %vm423, %v1301, %v1305
  %v1308 = vsel %vm423, %v1295, %v1299
  %v1309 = vsel %vm423, %v1297, %v1301
  %v1310 = vsel %vm423, %v1291, %v1295
  %v1311 = vsel %vm423, %v1293, %v1297
  %v1312 = vsel %vm423, %v1287, %v1291
  %v1313 = vsel %vm423, %v1289, %v1293
  %v1314 = vsel %vm423, %v1283, %v1287
  %v1315 = vsel %vm423, %v1285, %v1289
  %v1316 = vsel %vm423, %v1279, %v1283
  %v1317 = vsel %vm423, %v1281, %v1285
  %v1318 = vsel %vm423, %v1275, %v1279
  %v1319 = vsel %vm423, %v1277, %v1281
  %v1320 = vsel %vm423, %v1303, %v1275
  %v1321 = vsel %vm423, %v1305, %v1277
  %v1322 = vsel %vm71, %v1320, 0.0
  %v1323 = vsel %vm72, %v1318, 0.0
  %v1324 = vsel %vm73, %v1316, 0.0
  %v1325 = vsel %vm74, %v1314, 0.0
  %v1326 = vsel %vm75, %v1312, 0.0
  %v1327 = vsel %vm76, %v1310, 0.0
  %v1328 = vsel %vm77, %v1308, 0.0
  %v1329 = vsel %vm78, %v1306, 0.0
  %v1330 = vsel %vm71, %v1321, 0.0
  %v1331 = vsel %vm72, %v1319, 0.0
  %v1332 = vsel %vm73, %v1317, 0.0
  %v1333 = vsel %vm74, %v1315, 0.0
  %v1334 = vsel %vm75, %v1313, 0.0
  %v1335 = vsel %vm76, %v1311, 0.0
  %v1336 = vsel %vm77, %v1309, 0.0
  %v1337 = vsel %vm78, %v1307, 0.0
  %1338 = vrot.lane.b32.xlu0 %v1258, 32
  %v1339 = vpop.permute.xlu0 %1338
  %1340 = vrot.lane.b32.xlu0 %v1266, 32
  %v1341 = vpop.permute.xlu0 %1340
  %1342 = vrot.lane.b32.xlu0 %v1259, 32
  %v1343 = vpop.permute.xlu0 %1342
  %1344 = vrot.lane.b32.xlu0 %v1267, 32
  %v1345 = vpop.permute.xlu0 %1344
  %1346 = vrot.lane.b32.xlu0 %v1260, 32
  %v1347 = vpop.permute.xlu0 %1346
  %1348 = vrot.lane.b32.xlu0 %v1268, 32
  %v1349 = vpop.permute.xlu0 %1348
  %1350 = vrot.lane.b32.xlu0 %v1261, 32
  %v1351 = vpop.permute.xlu0 %1350
  %1352 = vrot.lane.b32.xlu0 %v1269, 32
  %v1353 = vpop.permute.xlu0 %1352
  %1354 = vrot.lane.b32.xlu0 %v1262, 32
  %v1355 = vpop.permute.xlu0 %1354
  %1356 = vrot.lane.b32.xlu0 %v1270, 32
  %v1357 = vpop.permute.xlu0 %1356
  %1358 = vrot.lane.b32.xlu0 %v1263, 32
  %v1359 = vpop.permute.xlu0 %1358
  %1360 = vrot.lane.b32.xlu0 %v1271, 32
  %v1361 = vpop.permute.xlu0 %1360
  %1362 = vrot.lane.b32.xlu0 %v1264, 32
  %v1363 = vpop.permute.xlu0 %1362
  %1364 = vrot.lane.b32.xlu0 %v1272, 32
  %v1365 = vpop.permute.xlu0 %1364
  %1366 = vrot.lane.b32.xlu0 %v1265, 32
  %v1367 = vpop.permute.xlu0 %1366
  %1368 = vrot.lane.b32.xlu0 %v1273, 32
  %v1369 = vpop.permute.xlu0 %1368
  %v1370 = vsel %vm488, %v1363, %v1367
  %v1371 = vsel %vm488, %v1365, %v1369
  %v1372 = vsel %vm488, %v1359, %v1363
  %v1373 = vsel %vm488, %v1361, %v1365
  %v1374 = vsel %vm488, %v1355, %v1359
  %v1375 = vsel %vm488, %v1357, %v1361
  %v1376 = vsel %vm488, %v1351, %v1355
  %v1377 = vsel %vm488, %v1353, %v1357
  %v1378 = vsel %vm488, %v1347, %v1351
  %v1379 = vsel %vm488, %v1349, %v1353
  %v1380 = vsel %vm488, %v1343, %v1347
  %v1381 = vsel %vm488, %v1345, %v1349
  %v1382 = vsel %vm488, %v1339, %v1343
  %v1383 = vsel %vm488, %v1341, %v1345
  %v1384 = vsel %vm488, %v1367, %v1339
  %v1385 = vsel %vm488, %v1369, %v1341
  %v1386 = vsel %vm103, %v1384, 0.0
  %v1387 = vsel %vm104, %v1382, 0.0
  %v1388 = vsel %vm105, %v1380, 0.0
  %v1389 = vsel %vm106, %v1378, 0.0
  %v1390 = vsel %vm107, %v1376, 0.0
  %v1391 = vsel %vm108, %v1374, 0.0
  %v1392 = vsel %vm109, %v1372, 0.0
  %v1393 = vsel %vm110, %v1370, 0.0
  %v1394 = vsel %vm103, %v1385, 0.0
  %v1395 = vsel %vm104, %v1383, 0.0
  %v1396 = vsel %vm105, %v1381, 0.0
  %v1397 = vsel %vm106, %v1379, 0.0
  %v1398 = vsel %vm107, %v1377, 0.0
  %v1399 = vsel %vm108, %v1375, 0.0
  %v1400 = vsel %vm109, %v1373, 0.0
  %v1401 = vsel %vm110, %v1371, 0.0
  %1402 = vrot.lane.b32.xlu0 %v1258, 31
  %v1403 = vpop.permute.xlu0 %1402
  %1404 = vrot.lane.b32.xlu0 %v1266, 31
  %v1405 = vpop.permute.xlu0 %1404
  %1406 = vrot.lane.b32.xlu0 %v1259, 31
  %v1407 = vpop.permute.xlu0 %1406
  %1408 = vrot.lane.b32.xlu0 %v1267, 31
  %v1409 = vpop.permute.xlu0 %1408
  %1410 = vrot.lane.b32.xlu0 %v1260, 31
  %v1411 = vpop.permute.xlu0 %1410
  %1412 = vrot.lane.b32.xlu0 %v1268, 31
  %v1413 = vpop.permute.xlu0 %1412
  %1414 = vrot.lane.b32.xlu0 %v1261, 31
  %v1415 = vpop.permute.xlu0 %1414
  %1416 = vrot.lane.b32.xlu0 %v1269, 31
  %v1417 = vpop.permute.xlu0 %1416
  %1418 = vrot.lane.b32.xlu0 %v1262, 31
  %v1419 = vpop.permute.xlu0 %1418
  %1420 = vrot.lane.b32.xlu0 %v1270, 31
  %v1421 = vpop.permute.xlu0 %1420
  %1422 = vrot.lane.b32.xlu0 %v1263, 31
  %v1423 = vpop.permute.xlu0 %1422
  %1424 = vrot.lane.b32.xlu0 %v1271, 31
  %v1425 = vpop.permute.xlu0 %1424
  %1426 = vrot.lane.b32.xlu0 %v1264, 31
  %v1427 = vpop.permute.xlu0 %1426
  %1428 = vrot.lane.b32.xlu0 %v1272, 31
  %v1429 = vpop.permute.xlu0 %1428
  %1430 = vrot.lane.b32.xlu0 %v1265, 31
  %v1431 = vpop.permute.xlu0 %1430
  %1432 = vrot.lane.b32.xlu0 %v1273, 31
  %v1433 = vpop.permute.xlu0 %1432
  %v1434 = vsel %vm553, %v1427, %v1431
  %v1435 = vsel %vm553, %v1429, %v1433
  %v1436 = vsel %vm553, %v1423, %v1427
  %v1437 = vsel %vm553, %v1425, %v1429
  %v1438 = vsel %vm553, %v1419, %v1423
  %v1439 = vsel %vm553, %v1421, %v1425
  %v1440 = vsel %vm553, %v1415, %v1419
  %v1441 = vsel %vm553, %v1417, %v1421
  %v1442 = vsel %vm553, %v1411, %v1415
  %v1443 = vsel %vm553, %v1413, %v1417
  %v1444 = vsel %vm553, %v1407, %v1411
  %v1445 = vsel %vm553, %v1409, %v1413
  %v1446 = vsel %vm553, %v1403, %v1407
  %v1447 = vsel %vm553, %v1405, %v1409
  %v1448 = vsel %vm553, %v1431, %v1403
  %v1449 = vsel %vm553, %v1433, %v1405
  %v1450 = vsel %vm151, %v1448, 0.0
  %v1451 = vsel %vm152, %v1446, 0.0
  %v1452 = vsel %vm153, %v1444, 0.0
  %v1453 = vsel %vm154, %v1442, 0.0
  %v1454 = vsel %vm155, %v1440, 0.0
  %v1455 = vsel %vm156, %v1438, 0.0
  %v1456 = vsel %vm157, %v1436, 0.0
  %v1457 = vsel %vm158, %v1434, 0.0
  %v1458 = vsel %vm151, %v1449, 0.0
  %v1459 = vsel %vm152, %v1447, 0.0
  %v1460 = vsel %vm153, %v1445, 0.0
  %v1461 = vsel %vm154, %v1443, 0.0
  %v1462 = vsel %vm155, %v1441, 0.0
  %v1463 = vsel %vm156, %v1439, 0.0
  %v1464 = vsel %vm157, %v1437, 0.0
  %v1465 = vsel %vm158, %v1435, 0.0
  %1466 = vrot.lane.b32.xlu0 %v1258, 1
  %v1467 = vpop.permute.xlu0 %1466
  %1468 = vrot.lane.b32.xlu0 %v1266, 1
  %v1469 = vpop.permute.xlu0 %1468
  %1470 = vrot.lane.b32.xlu0 %v1259, 1
  %v1471 = vpop.permute.xlu0 %1470
  %1472 = vrot.lane.b32.xlu0 %v1267, 1
  %v1473 = vpop.permute.xlu0 %1472
  %1474 = vrot.lane.b32.xlu0 %v1260, 1
  %v1475 = vpop.permute.xlu0 %1474
  %1476 = vrot.lane.b32.xlu0 %v1268, 1
  %v1477 = vpop.permute.xlu0 %1476
  %1478 = vrot.lane.b32.xlu0 %v1261, 1
  %v1479 = vpop.permute.xlu0 %1478
  %1480 = vrot.lane.b32.xlu0 %v1269, 1
  %v1481 = vpop.permute.xlu0 %1480
  %1482 = vrot.lane.b32.xlu0 %v1262, 1
  %v1483 = vpop.permute.xlu0 %1482
  %1484 = vrot.lane.b32.xlu0 %v1270, 1
  %v1485 = vpop.permute.xlu0 %1484
  %1486 = vrot.lane.b32.xlu0 %v1263, 1
  %v1487 = vpop.permute.xlu0 %1486
  %1488 = vrot.lane.b32.xlu0 %v1271, 1
  %v1489 = vpop.permute.xlu0 %1488
  %1490 = vrot.lane.b32.xlu0 %v1264, 1
  %v1491 = vpop.permute.xlu0 %1490
  %1492 = vrot.lane.b32.xlu0 %v1272, 1
  %v1493 = vpop.permute.xlu0 %1492
  %1494 = vrot.lane.b32.xlu0 %v1265, 1
  %v1495 = vpop.permute.xlu0 %1494
  %1496 = vrot.lane.b32.xlu0 %v1273, 1
  %v1497 = vpop.permute.xlu0 %1496
  %v1498 = vsel %vm618, %v1491, %v1495
  %v1499 = vsel %vm618, %v1493, %v1497
  %v1500 = vsel %vm618, %v1487, %v1491
  %v1501 = vsel %vm618, %v1489, %v1493
  %v1502 = vsel %vm618, %v1483, %v1487
  %v1503 = vsel %vm618, %v1485, %v1489
  %v1504 = vsel %vm618, %v1479, %v1483
  %v1505 = vsel %vm618, %v1481, %v1485
  %v1506 = vsel %vm618, %v1475, %v1479
  %v1507 = vsel %vm618, %v1477, %v1481
  %v1508 = vsel %vm618, %v1471, %v1475
  %v1509 = vsel %vm618, %v1473, %v1477
  %v1510 = vsel %vm618, %v1467, %v1471
  %v1511 = vsel %vm618, %v1469, %v1473
  %v1512 = vsel %vm618, %v1495, %v1467
  %v1513 = vsel %vm618, %v1497, %v1469
  %v1514 = vsel %vm191, %v1512, 0.0
  %v1515 = vsel %vm192, %v1510, 0.0
  %v1516 = vsel %vm193, %v1508, 0.0
  %v1517 = vsel %vm194, %v1506, 0.0
  %v1518 = vsel %vm195, %v1504, 0.0
  %v1519 = vsel %vm196, %v1502, 0.0
  %v1520 = vsel %vm197, %v1500, 0.0
  %v1521 = vsel %vm198, %v1498, 0.0
  %v1522 = vsel %vm191, %v1513, 0.0
  %v1523 = vsel %vm192, %v1511, 0.0
  %v1524 = vsel %vm193, %v1509, 0.0
  %v1525 = vsel %vm194, %v1507, 0.0
  %v1526 = vsel %vm195, %v1505, 0.0
  %v1527 = vsel %vm196, %v1503, 0.0
  %v1528 = vsel %vm197, %v1501, 0.0
  %v1529 = vsel %vm198, %v1499, 0.0
  %v1530 = vsel %vm215, %v1258, 0.0
  %v1531 = vsel %vm216, %v1259, 0.0
  %v1532 = vsel %vm217, %v1260, 0.0
  %v1533 = vsel %vm218, %v1261, 0.0
  %v1534 = vsel %vm219, %v1262, 0.0
  %v1535 = vsel %vm220, %v1263, 0.0
  %v1536 = vsel %vm221, %v1264, 0.0
  %v1537 = vsel %vm222, %v1265, 0.0
  %v1538 = vsel %vm215, %v1266, 0.0
  %v1539 = vsel %vm216, %v1267, 0.0
  %v1540 = vsel %vm217, %v1268, 0.0
  %v1541 = vsel %vm218, %v1269, 0.0
  %v1542 = vsel %vm219, %v1270, 0.0
  %v1543 = vsel %vm220, %v1271, 0.0
  %v1544 = vsel %vm221, %v1272, 0.0
  %v1545 = vsel %vm222, %v1273, 0.0
  %1546 = vrot.lane.b32.xlu0 %v1258, 127
  %v1547 = vpop.permute.xlu0 %1546
  %1548 = vrot.lane.b32.xlu0 %v1266, 127
  %v1549 = vpop.permute.xlu0 %1548
  %1550 = vrot.lane.b32.xlu0 %v1259, 127
  %v1551 = vpop.permute.xlu0 %1550
  %1552 = vrot.lane.b32.xlu0 %v1267, 127
  %v1553 = vpop.permute.xlu0 %1552
  %1554 = vrot.lane.b32.xlu0 %v1260, 127
  %v1555 = vpop.permute.xlu0 %1554
  %1556 = vrot.lane.b32.xlu0 %v1268, 127
  %v1557 = vpop.permute.xlu0 %1556
  %1558 = vrot.lane.b32.xlu0 %v1261, 127
  %v1559 = vpop.permute.xlu0 %1558
  %1560 = vrot.lane.b32.xlu0 %v1269, 127
  %v1561 = vpop.permute.xlu0 %1560
  %1562 = vrot.lane.b32.xlu0 %v1262, 127
  %v1563 = vpop.permute.xlu0 %1562
  %1564 = vrot.lane.b32.xlu0 %v1270, 127
  %v1565 = vpop.permute.xlu0 %1564
  %1566 = vrot.lane.b32.xlu0 %v1263, 127
  %v1567 = vpop.permute.xlu0 %1566
  %1568 = vrot.lane.b32.xlu0 %v1271, 127
  %v1569 = vpop.permute.xlu0 %1568
  %1570 = vrot.lane.b32.xlu0 %v1264, 127
  %v1571 = vpop.permute.xlu0 %1570
  %1572 = vrot.lane.b32.xlu0 %v1272, 127
  %v1573 = vpop.permute.xlu0 %1572
  %1574 = vrot.lane.b32.xlu0 %v1265, 127
  %v1575 = vpop.permute.xlu0 %1574
  %1576 = vrot.lane.b32.xlu0 %v1273, 127
  %v1577 = vpop.permute.xlu0 %1576
  %v1578 = vsel %vm699, %v1571, %v1575
  %v1579 = vsel %vm699, %v1573, %v1577
  %v1580 = vsel %vm699, %v1567, %v1571
  %v1581 = vsel %vm699, %v1569, %v1573
  %v1582 = vsel %vm699, %v1563, %v1567
  %v1583 = vsel %vm699, %v1565, %v1569
  %v1584 = vsel %vm699, %v1559, %v1563
  %v1585 = vsel %vm699, %v1561, %v1565
  %v1586 = vsel %vm699, %v1555, %v1559
  %v1587 = vsel %vm699, %v1557, %v1561
  %v1588 = vsel %vm699, %v1551, %v1555
  %v1589 = vsel %vm699, %v1553, %v1557
  %v1590 = vsel %vm699, %v1547, %v1551
  %v1591 = vsel %vm699, %v1549, %v1553
  %v1592 = vsel %vm699, %v1575, %v1547
  %v1593 = vsel %vm699, %v1577, %v1549
  %v1594 = vsel %vm255, %v1590, 0.0
  %v1595 = vsel %vm256, %v1588, 0.0
  %v1596 = vsel %vm257, %v1586, 0.0
  %v1597 = vsel %vm258, %v1584, 0.0
  %v1598 = vsel %vm259, %v1582, 0.0
  %v1599 = vsel %vm260, %v1580, 0.0
  %v1600 = vsel %vm261, %v1578, 0.0
  %v1601 = vsel %vm262, %v1592, 0.0
  %v1602 = vsel %vm255, %v1591, 0.0
  %v1603 = vsel %vm256, %v1589, 0.0
  %v1604 = vsel %vm257, %v1587, 0.0
  %v1605 = vsel %vm258, %v1585, 0.0
  %v1606 = vsel %vm259, %v1583, 0.0
  %v1607 = vsel %vm260, %v1581, 0.0
  %v1608 = vsel %vm261, %v1579, 0.0
  %v1609 = vsel %vm262, %v1593, 0.0
  %1610 = vrot.lane.b32.xlu0 %v1258, 97
  %v1611 = vpop.permute.xlu0 %1610
  %1612 = vrot.lane.b32.xlu0 %v1266, 97
  %v1613 = vpop.permute.xlu0 %1612
  %1614 = vrot.lane.b32.xlu0 %v1259, 97
  %v1615 = vpop.permute.xlu0 %1614
  %1616 = vrot.lane.b32.xlu0 %v1267, 97
  %v1617 = vpop.permute.xlu0 %1616
  %1618 = vrot.lane.b32.xlu0 %v1260, 97
  %v1619 = vpop.permute.xlu0 %1618
  %1620 = vrot.lane.b32.xlu0 %v1268, 97
  %v1621 = vpop.permute.xlu0 %1620
  %1622 = vrot.lane.b32.xlu0 %v1261, 97
  %v1623 = vpop.permute.xlu0 %1622
  %1624 = vrot.lane.b32.xlu0 %v1269, 97
  %v1625 = vpop.permute.xlu0 %1624
  %1626 = vrot.lane.b32.xlu0 %v1262, 97
  %v1627 = vpop.permute.xlu0 %1626
  %1628 = vrot.lane.b32.xlu0 %v1270, 97
  %v1629 = vpop.permute.xlu0 %1628
  %1630 = vrot.lane.b32.xlu0 %v1263, 97
  %v1631 = vpop.permute.xlu0 %1630
  %1632 = vrot.lane.b32.xlu0 %v1271, 97
  %v1633 = vpop.permute.xlu0 %1632
  %1634 = vrot.lane.b32.xlu0 %v1264, 97
  %v1635 = vpop.permute.xlu0 %1634
  %1636 = vrot.lane.b32.xlu0 %v1272, 97
  %v1637 = vpop.permute.xlu0 %1636
  %1638 = vrot.lane.b32.xlu0 %v1265, 97
  %v1639 = vpop.permute.xlu0 %1638
  %1640 = vrot.lane.b32.xlu0 %v1273, 97
  %v1641 = vpop.permute.xlu0 %1640
  %v1642 = vsel %vm764, %v1635, %v1639
  %v1643 = vsel %vm764, %v1637, %v1641
  %v1644 = vsel %vm764, %v1631, %v1635
  %v1645 = vsel %vm764, %v1633, %v1637
  %v1646 = vsel %vm764, %v1627, %v1631
  %v1647 = vsel %vm764, %v1629, %v1633
  %v1648 = vsel %vm764, %v1623, %v1627
  %v1649 = vsel %vm764, %v1625, %v1629
  %v1650 = vsel %vm764, %v1619, %v1623
  %v1651 = vsel %vm764, %v1621, %v1625
  %v1652 = vsel %vm764, %v1615, %v1619
  %v1653 = vsel %vm764, %v1617, %v1621
  %v1654 = vsel %vm764, %v1611, %v1615
  %v1655 = vsel %vm764, %v1613, %v1617
  %v1656 = vsel %vm764, %v1639, %v1611
  %v1657 = vsel %vm764, %v1641, %v1613
  %v1658 = vsel %vm295, %v1654, 0.0
  %v1659 = vsel %vm296, %v1652, 0.0
  %v1660 = vsel %vm297, %v1650, 0.0
  %v1661 = vsel %vm298, %v1648, 0.0
  %v1662 = vsel %vm299, %v1646, 0.0
  %v1663 = vsel %vm300, %v1644, 0.0
  %v1664 = vsel %vm301, %v1642, 0.0
  %v1665 = vsel %vm302, %v1656, 0.0
  %v1666 = vsel %vm295, %v1655, 0.0
  %v1667 = vsel %vm296, %v1653, 0.0
  %v1668 = vsel %vm297, %v1651, 0.0
  %v1669 = vsel %vm298, %v1649, 0.0
  %v1670 = vsel %vm299, %v1647, 0.0
  %v1671 = vsel %vm300, %v1645, 0.0
  %v1672 = vsel %vm301, %v1643, 0.0
  %v1673 = vsel %vm302, %v1657, 0.0
  %1674 = vrot.lane.b32.xlu0 %v1258, 96
  %v1675 = vpop.permute.xlu0 %1674
  %1676 = vrot.lane.b32.xlu0 %v1266, 96
  %v1677 = vpop.permute.xlu0 %1676
  %1678 = vrot.lane.b32.xlu0 %v1259, 96
  %v1679 = vpop.permute.xlu0 %1678
  %1680 = vrot.lane.b32.xlu0 %v1267, 96
  %v1681 = vpop.permute.xlu0 %1680
  %1682 = vrot.lane.b32.xlu0 %v1260, 96
  %v1683 = vpop.permute.xlu0 %1682
  %1684 = vrot.lane.b32.xlu0 %v1268, 96
  %v1685 = vpop.permute.xlu0 %1684
  %1686 = vrot.lane.b32.xlu0 %v1261, 96
  %v1687 = vpop.permute.xlu0 %1686
  %1688 = vrot.lane.b32.xlu0 %v1269, 96
  %v1689 = vpop.permute.xlu0 %1688
  %1690 = vrot.lane.b32.xlu0 %v1262, 96
  %v1691 = vpop.permute.xlu0 %1690
  %1692 = vrot.lane.b32.xlu0 %v1270, 96
  %v1693 = vpop.permute.xlu0 %1692
  %1694 = vrot.lane.b32.xlu0 %v1263, 96
  %v1695 = vpop.permute.xlu0 %1694
  %1696 = vrot.lane.b32.xlu0 %v1271, 96
  %v1697 = vpop.permute.xlu0 %1696
  %1698 = vrot.lane.b32.xlu0 %v1264, 96
  %v1699 = vpop.permute.xlu0 %1698
  %1700 = vrot.lane.b32.xlu0 %v1272, 96
  %v1701 = vpop.permute.xlu0 %1700
  %1702 = vrot.lane.b32.xlu0 %v1265, 96
  %v1703 = vpop.permute.xlu0 %1702
  %1704 = vrot.lane.b32.xlu0 %v1273, 96
  %v1705 = vpop.permute.xlu0 %1704
  %v1706 = vsel %vm829, %v1699, %v1703
  %v1707 = vsel %vm829, %v1701, %v1705
  %v1708 = vsel %vm829, %v1695, %v1699
  %v1709 = vsel %vm829, %v1697, %v1701
  %v1710 = vsel %vm829, %v1691, %v1695
  %v1711 = vsel %vm829, %v1693, %v1697
  %v1712 = vsel %vm829, %v1687, %v1691
  %v1713 = vsel %vm829, %v1689, %v1693
  %v1714 = vsel %vm829, %v1683, %v1687
  %v1715 = vsel %vm829, %v1685, %v1689
  %v1716 = vsel %vm829, %v1679, %v1683
  %v1717 = vsel %vm829, %v1681, %v1685
  %v1718 = vsel %vm829, %v1675, %v1679
  %v1719 = vsel %vm829, %v1677, %v1681
  %v1720 = vsel %vm829, %v1703, %v1675
  %v1721 = vsel %vm829, %v1705, %v1677
  %v1722 = vsel %vm327, %v1718, 0.0
  %v1723 = vsel %vm328, %v1716, 0.0
  %v1724 = vsel %vm329, %v1714, 0.0
  %v1725 = vsel %vm330, %v1712, 0.0
  %v1726 = vsel %vm331, %v1710, 0.0
  %v1727 = vsel %vm332, %v1708, 0.0
  %v1728 = vsel %vm333, %v1706, 0.0
  %v1729 = vsel %vm334, %v1720, 0.0
  %v1730 = vsel %vm327, %v1719, 0.0
  %v1731 = vsel %vm328, %v1717, 0.0
  %v1732 = vsel %vm329, %v1715, 0.0
  %v1733 = vsel %vm330, %v1713, 0.0
  %v1734 = vsel %vm331, %v1711, 0.0
  %v1735 = vsel %vm332, %v1709, 0.0
  %v1736 = vsel %vm333, %v1707, 0.0
  %v1737 = vsel %vm334, %v1721, 0.0
  %1738 = vrot.lane.b32.xlu0 %v1258, 95
  %v1739 = vpop.permute.xlu0 %1738
  %1740 = vrot.lane.b32.xlu0 %v1266, 95
  %v1741 = vpop.permute.xlu0 %1740
  %1742 = vrot.lane.b32.xlu0 %v1259, 95
  %v1743 = vpop.permute.xlu0 %1742
  %1744 = vrot.lane.b32.xlu0 %v1267, 95
  %v1745 = vpop.permute.xlu0 %1744
  %1746 = vrot.lane.b32.xlu0 %v1260, 95
  %v1747 = vpop.permute.xlu0 %1746
  %1748 = vrot.lane.b32.xlu0 %v1268, 95
  %v1749 = vpop.permute.xlu0 %1748
  %1750 = vrot.lane.b32.xlu0 %v1261, 95
  %v1751 = vpop.permute.xlu0 %1750
  %1752 = vrot.lane.b32.xlu0 %v1269, 95
  %v1753 = vpop.permute.xlu0 %1752
  %1754 = vrot.lane.b32.xlu0 %v1262, 95
  %v1755 = vpop.permute.xlu0 %1754
  %1756 = vrot.lane.b32.xlu0 %v1270, 95
  %v1757 = vpop.permute.xlu0 %1756
  %1758 = vrot.lane.b32.xlu0 %v1263, 95
  %v1759 = vpop.permute.xlu0 %1758
  %1760 = vrot.lane.b32.xlu0 %v1271, 95
  %v1761 = vpop.permute.xlu0 %1760
  %1762 = vrot.lane.b32.xlu0 %v1264, 95
  %v1763 = vpop.permute.xlu0 %1762
  %1764 = vrot.lane.b32.xlu0 %v1272, 95
  %v1765 = vpop.permute.xlu0 %1764
  %1766 = vrot.lane.b32.xlu0 %v1265, 95
  %v1767 = vpop.permute.xlu0 %1766
  %1768 = vrot.lane.b32.xlu0 %v1273, 95
  %v1769 = vpop.permute.xlu0 %1768
  %v1770 = vsel %vm894, %v1763, %v1767
  %v1771 = vsel %vm894, %v1765, %v1769
  %v1772 = vsel %vm894, %v1759, %v1763
  %v1773 = vsel %vm894, %v1761, %v1765
  %v1774 = vsel %vm894, %v1755, %v1759
  %v1775 = vsel %vm894, %v1757, %v1761
  %v1776 = vsel %vm894, %v1751, %v1755
  %v1777 = vsel %vm894, %v1753, %v1757
  %v1778 = vsel %vm894, %v1747, %v1751
  %v1779 = vsel %vm894, %v1749, %v1753
  %v1780 = vsel %vm894, %v1743, %v1747
  %v1781 = vsel %vm894, %v1745, %v1749
  %v1782 = vsel %vm894, %v1739, %v1743
  %v1783 = vsel %vm894, %v1741, %v1745
  %v1784 = vsel %vm894, %v1767, %v1739
  %v1785 = vsel %vm894, %v1769, %v1741
  %v1786 = vsel %vm367, %v1782, 0.0
  %v1787 = vsel %vm368, %v1780, 0.0
  %v1788 = vsel %vm369, %v1778, 0.0
  %v1789 = vsel %vm370, %v1776, 0.0
  %v1790 = vsel %vm371, %v1774, 0.0
  %v1791 = vsel %vm372, %v1772, 0.0
  %v1792 = vsel %vm373, %v1770, 0.0
  %v1793 = vsel %vm374, %v1784, 0.0
  %v1794 = vsel %vm367, %v1783, 0.0
  %v1795 = vsel %vm368, %v1781, 0.0
  %v1796 = vsel %vm369, %v1779, 0.0
  %v1797 = vsel %vm370, %v1777, 0.0
  %v1798 = vsel %vm371, %v1775, 0.0
  %v1799 = vsel %vm372, %v1773, 0.0
  %v1800 = vsel %vm373, %v1771, 0.0
  %v1801 = vsel %vm374, %v1785, 0.0
  %s1802 = scalar_lea.vmem %s1, 32
  %v1803 = vld [vmem:[%s1802] sm:$0xff]
  %v1804 = vld [vmem:[%s1802 + $0x8] sm:$0xff]
  %v1805 = vld [vmem:[%s1802 + $0x10] sm:$0xff]
  %v1806 = vld [vmem:[%s1802 + $0x18] sm:$0xff]
  %s1807 = scalar_lea.vmem %s2, 16
  %v1808 = vld [vmem:[%s1807] sm:$0xff]
  %v1809 = vld [vmem:[%s1807 + $0x8] sm:$0xff]
  %1811 = vset.pattern.permute.xlu0 0
  %1812 = vperm.xlu0 %1811, %v1808
  %v1813 = vpop.permute.xlu0 %1812
  %1816 = vset.pattern.permute.xlu0 0
  %1817 = vperm.xlu0 %1816, %v1809
  %v1818 = vpop.permute.xlu0 %1817
  %v1821 = vsel %vm943, %v1804, 0
  %v1824 = vsel %vm943, %v1806, 0
  %1826 = vmatprep.subr.mxu0 %v1323
  %1827 = vmatpush1.msra.mxu0 %v1322
  %1828 = vmatprep.subr.mxu0 %v1331
  %1829 = vmatpush1.msra.mxu0 %v1330
  %1830 = vmatprep.subr.mxu0 %v1387
  %1831 = vmatpush1.msra.mxu0 %v1386
  %1832 = vmatprep.subr.mxu0 %v1395
  %1833 = vmatpush1.msra.mxu0 %v1394
  %1834 = vmatprep.subr.mxu0 %v1451
  %1835 = vmatpush1.msra.mxu0 %v1450
  %1836 = vmatprep.subr.mxu0 %v1459
  %1837 = vmatpush1.msra.mxu0 %v1458
  %1838 = vmatprep.subr.mxu0 %v1515
  %1839 = vmatpush1.msra.mxu0 %v1514
  %1840 = vmatprep.subr.mxu0 %v1523
  %1841 = vmatpush1.msra.mxu0 %v1522
  %1842 = vmatprep.subr.mxu0 %v1531
  %1843 = vmatpush1.msra.mxu0 %v1530
  %1844 = vmatprep.subr.mxu0 %v1539
  %1845 = vmatpush1.msra.mxu0 %v1538
  %1846 = vmatprep.subr.mxu0 %v1595
  %1847 = vmatpush1.msra.mxu0 %v1594
  %1848 = vmatprep.subr.mxu0 %v1603
  %1849 = vmatpush1.msra.mxu0 %v1602
  %1850 = vmatprep.subr.mxu0 %v1659
  %1851 = vmatpush1.msra.mxu0 %v1658
  %1852 = vmatprep.subr.mxu0 %v1667
  %1853 = vmatpush1.msra.mxu0 %v1666
  %1854 = vmatprep.subr.mxu0 %v1723
  %1855 = vmatpush1.msra.mxu0 %v1722
  %1856 = vmatprep.subr.mxu0 %v1731
  %1857 = vmatpush1.msra.mxu0 %v1730
  %1858 = vmatprep.subr.mxu0 %v1787
  %1859 = vmatpush1.msra.mxu0 %v1786
  %1860 = vmatprep.subr.mxu0 %v1795
  %1861 = vmatpush1.msra.mxu0 %v1794
  %1862 = vmatprep.subr.mxu0 0.0
  %1863 = vmatpush1.msra.mxu0 0.0
  %1864 = vmatprep.subr.mxu0 0.0
  %1865 = vmatpush1.msra.mxu0 0.0
  %1866 = vmatprep.subr.mxu0 0.0
  %1867 = vmatpush1.msra.mxu0 0.0
  %1868 = vmatprep.subr.mxu0 0.0
  %1869 = vmatpush1.msra.mxu0 0.0
  %1870 = vmatprep.subr.mxu0 0.0
  %1871 = vmatpush1.msra.mxu0 0.0
  %1872 = vmatprep.subr.mxu0 0.0
  %1873 = vmatpush1.msra.mxu0 0.0
  %1874 = vmatprep.subr.mxu0 0.0
  %1875 = vmatpush1.msra.mxu0 0.0
  %1876 = vmatprep.subr.mxu0 0.0
  %1877 = vmatpush1.msra.mxu0 0.0
  %1878 = vmatprep.subr.mxu0 0.0
  %1879 = vmatpush1.msra.mxu0 0.0
  %1880 = vmatprep.subr.mxu0 0.0
  %1881 = vmatpush1.msra.mxu0 0.0
  %1882 = vmatprep.subr.mxu0 0.0
  %1883 = vmatpush1.msra.mxu0 0.0
  %1884 = vmatprep.subr.mxu0 0.0
  %1885 = vmatpush1.msra.mxu0 0.0
  %1886 = vmatprep.subr.mxu0 0.0
  %1887 = vmatpush1.msra.mxu0 0.0
  %1888 = vmatprep.subr.mxu0 0.0
  %1889 = vmatpush1.msra.mxu0 0.0
  %1890 = vmatprep.mubr.f32.mxu0 %v1821
  %1891 = vmatmul.mubr.f32.gmra.mrb[0].mxu0 %v1803
  %v1892 = vpop.f32.mrb[0].mxu0
  %v1893 = vadd.f32 %v1813, %v1892
  %v1894 = vpop.f32.mrb[0].mxu0
  %v1895 = vadd.f32 %v1813, %v1894
  %1896 = vmatprep.mubr.f32.mxu0 %v1824
  %1897 = vmatmul.mubr.f32.gmra.mrb[0].mxu0 %v1805
  %v1898 = vpop.f32.mrb[0].mxu0
  %v1899 = vadd.f32 %v1818, %v1898
  %v1900 = vpop.f32.mrb[0].mxu0
  %v1901 = vadd.f32 %v1818, %v1900
  %1902 = vdwg.mxu0
  %1903 = vmatprep.subr.mxu0 %v1325
  %1904 = vmatpush1.msra.mxu0 %v1324
  %1905 = vmatprep.subr.mxu0 %v1333
  %1906 = vmatpush1.msra.mxu0 %v1332
  %1907 = vmatprep.subr.mxu0 %v1389
  %1908 = vmatpush1.msra.mxu0 %v1388
  %1909 = vmatprep.subr.mxu0 %v1397
  %1910 = vmatpush1.msra.mxu0 %v1396
  %1911 = vmatprep.subr.mxu0 %v1453
  %1912 = vmatpush1.msra.mxu0 %v1452
  %1913 = vmatprep.subr.mxu0 %v1461
  %1914 = vmatpush1.msra.mxu0 %v1460
  %1915 = vmatprep.subr.mxu0 %v1517
  %1916 = vmatpush1.msra.mxu0 %v1516
  %1917 = vmatprep.subr.mxu0 %v1525
  %1918 = vmatpush1.msra.mxu0 %v1524
  %1919 = vmatprep.subr.mxu0 %v1533
  %1920 = vmatpush1.msra.mxu0 %v1532
  %1921 = vmatprep.subr.mxu0 %v1541
  %1922 = vmatpush1.msra.mxu0 %v1540
  %1923 = vmatprep.subr.mxu0 %v1597
  %1924 = vmatpush1.msra.mxu0 %v1596
  %1925 = vmatprep.subr.mxu0 %v1605
  %1926 = vmatpush1.msra.mxu0 %v1604
  %1927 = vmatprep.subr.mxu0 %v1661
  %1928 = vmatpush1.msra.mxu0 %v1660
  %1929 = vmatprep.subr.mxu0 %v1669
  %1930 = vmatpush1.msra.mxu0 %v1668
  %1931 = vmatprep.subr.mxu0 %v1725
  %1932 = vmatpush1.msra.mxu0 %v1724
  %1933 = vmatprep.subr.mxu0 %v1733
  %1934 = vmatpush1.msra.mxu0 %v1732
  %1935 = vmatprep.subr.mxu0 %v1789
  %1936 = vmatpush1.msra.mxu0 %v1788
  %1937 = vmatprep.subr.mxu0 %v1797
  %1938 = vmatpush1.msra.mxu0 %v1796
  %1939 = vmatprep.subr.mxu0 0.0
  %1940 = vmatpush1.msra.mxu0 0.0
  %1941 = vmatprep.subr.mxu0 0.0
  %1942 = vmatpush1.msra.mxu0 0.0
  %1943 = vmatprep.subr.mxu0 0.0
  %1944 = vmatpush1.msra.mxu0 0.0
  %1945 = vmatprep.subr.mxu0 0.0
  %1946 = vmatpush1.msra.mxu0 0.0
  %1947 = vmatprep.subr.mxu0 0.0
  %1948 = vmatpush1.msra.mxu0 0.0
  %1949 = vmatprep.subr.mxu0 0.0
  %1950 = vmatpush1.msra.mxu0 0.0
  %1951 = vmatprep.subr.mxu0 0.0
  %1952 = vmatpush1.msra.mxu0 0.0
  %1953 = vmatprep.subr.mxu0 0.0
  %1954 = vmatpush1.msra.mxu0 0.0
  %1955 = vmatprep.subr.mxu0 0.0
  %1956 = vmatpush1.msra.mxu0 0.0
  %1957 = vmatprep.subr.mxu0 0.0
  %1958 = vmatpush1.msra.mxu0 0.0
  %1959 = vmatprep.subr.mxu0 0.0
  %1960 = vmatpush1.msra.mxu0 0.0
  %1961 = vmatprep.subr.mxu0 0.0
  %1962 = vmatpush1.msra.mxu0 0.0
  %1963 = vmatprep.subr.mxu0 0.0
  %1964 = vmatpush1.msra.mxu0 0.0
  %1965 = vmatprep.subr.mxu0 0.0
  %1966 = vmatpush1.msra.mxu0 0.0
  %1967 = vmatprep.mubr.f32.mxu0 %v1821
  %1968 = vmatmul.mubr.f32.gmra.mrb[0].mxu0 %v1803
  %v1969 = vpop.f32.mrb[0].mxu0
  %v1970 = vadd.f32 %v1813, %v1969
  %v1971 = vpop.f32.mrb[0].mxu0
  %v1972 = vadd.f32 %v1813, %v1971
  %1973 = vmatprep.mubr.f32.mxu0 %v1824
  %1974 = vmatmul.mubr.f32.gmra.mrb[0].mxu0 %v1805
  %v1975 = vpop.f32.mrb[0].mxu0
  %v1976 = vadd.f32 %v1818, %v1975
  %v1977 = vpop.f32.mrb[0].mxu0
  %v1978 = vadd.f32 %v1818, %v1977
  %1979 = vdwg.mxu0
  %1980 = vmatprep.subr.mxu0 %v1327
  %1981 = vmatpush1.msra.mxu0 %v1326
  %1982 = vmatprep.subr.mxu0 %v1335
  %1983 = vmatpush1.msra.mxu0 %v1334
  %1984 = vmatprep.subr.mxu0 %v1391
  %1985 = vmatpush1.msra.mxu0 %v1390
  %1986 = vmatprep.subr.mxu0 %v1399
  %1987 = vmatpush1.msra.mxu0 %v1398
  %1988 = vmatprep.subr.mxu0 %v1455
  %1989 = vmatpush1.msra.mxu0 %v1454
  %1990 = vmatprep.subr.mxu0 %v1463
  %1991 = vmatpush1.msra.mxu0 %v1462
  %1992 = vmatprep.subr.mxu0 %v1519
  %1993 = vmatpush1.msra.mxu0 %v1518
  %1994 = vmatprep.subr.mxu0 %v1527
  %1995 = vmatpush1.msra.mxu0 %v1526
  %1996 = vmatprep.subr.mxu0 %v1535
  %1997 = vmatpush1.msra.mxu0 %v1534
  %1998 = vmatprep.subr.mxu0 %v1543
  %1999 = vmatpush1.msra.mxu0 %v1542
  %2000 = vmatprep.subr.mxu0 %v1599
  %2001 = vmatpush1.msra.mxu0 %v1598
  %2002 = vmatprep.subr.mxu0 %v1607
  %2003 = vmatpush1.msra.mxu0 %v1606
  %2004 = vmatprep.subr.mxu0 %v1663
  %2005 = vmatpush1.msra.mxu0 %v1662
  %2006 = vmatprep.subr.mxu0 %v1671
  %2007 = vmatpush1.msra.mxu0 %v1670
  %2008 = vmatprep.subr.mxu0 %v1727
  %2009 = vmatpush1.msra.mxu0 %v1726
  %2010 = vmatprep.subr.mxu0 %v1735
  %2011 = vmatpush1.msra.mxu0 %v1734
  %2012 = vmatprep.subr.mxu0 %v1791
  %2013 = vmatpush1.msra.mxu0 %v1790
  %2014 = vmatprep.subr.mxu0 %v1799
  %2015 = vmatpush1.msra.mxu0 %v1798
  %2016 = vmatprep.subr.mxu0 0.0
  %2017 = vmatpush1.msra.mxu0 0.0
  %2018 = vmatprep.subr.mxu0 0.0
  %2019 = vmatpush1.msra.mxu0 0.0
  %2020 = vmatprep.subr.mxu0 0.0
  %2021 = vmatpush1.msra.mxu0 0.0
  %2022 = vmatprep.subr.mxu0 0.0
  %2023 = vmatpush1.msra.mxu0 0.0
  %2024 = vmatprep.subr.mxu0 0.0
  %2025 = vmatpush1.msra.mxu0 0.0
  %2026 = vmatprep.subr.mxu0 0.0
  %2027 = vmatpush1.msra.mxu0 0.0
  %2028 = vmatprep.subr.mxu0 0.0
  %2029 = vmatpush1.msra.mxu0 0.0
  %2030 = vmatprep.subr.mxu0 0.0
  %2031 = vmatpush1.msra.mxu0 0.0
  %2032 = vmatprep.subr.mxu0 0.0
  %2033 = vmatpush1.msra.mxu0 0.0
  %2034 = vmatprep.subr.mxu0 0.0
  %2035 = vmatpush1.msra.mxu0 0.0
  %2036 = vmatprep.subr.mxu0 0.0
  %2037 = vmatpush1.msra.mxu0 0.0
  %2038 = vmatprep.subr.mxu0 0.0
  %2039 = vmatpush1.msra.mxu0 0.0
  %2040 = vmatprep.subr.mxu0 0.0
  %2041 = vmatpush1.msra.mxu0 0.0
  %2042 = vmatprep.subr.mxu0 0.0
  %2043 = vmatpush1.msra.mxu0 0.0
  %2044 = vmatprep.mubr.f32.mxu0 %v1821
  %2045 = vmatmul.mubr.f32.gmra.mrb[0].mxu0 %v1803
  %v2046 = vpop.f32.mrb[0].mxu0
  %v2047 = vadd.f32 %v1813, %v2046
  %v2048 = vpop.f32.mrb[0].mxu0
  %v2049 = vadd.f32 %v1813, %v2048
  %2050 = vmatprep.mubr.f32.mxu0 %v1824
  %2051 = vmatmul.mubr.f32.gmra.mrb[0].mxu0 %v1805
  %v2052 = vpop.f32.mrb[0].mxu0
  %v2053 = vadd.f32 %v1818, %v2052
  %v2054 = vpop.f32.mrb[0].mxu0
  %v2055 = vadd.f32 %v1818, %v2054
  %2056 = vdwg.mxu0
  %2057 = vmatprep.subr.mxu0 %v1329
  %2058 = vmatpush1.msra.mxu0 %v1328
  %2059 = vmatprep.subr.mxu0 %v1337
  %2060 = vmatpush1.msra.mxu0 %v1336
  %2061 = vmatprep.subr.mxu0 %v1393
  %2062 = vmatpush1.msra.mxu0 %v1392
  %2063 = vmatprep.subr.mxu0 %v1401
  %2064 = vmatpush1.msra.mxu0 %v1400
  %2065 = vmatprep.subr.mxu0 %v1457
  %2066 = vmatpush1.msra.mxu0 %v1456
  %2067 = vmatprep.subr.mxu0 %v1465
  %2068 = vmatpush1.msra.mxu0 %v1464
  %2069 = vmatprep.subr.mxu0 %v1521
  %2070 = vmatpush1.msra.mxu0 %v1520
  %2071 = vmatprep.subr.mxu0 %v1529
  %2072 = vmatpush1.msra.mxu0 %v1528
  %2073 = vmatprep.subr.mxu0 %v1537
  %2074 = vmatpush1.msra.mxu0 %v1536
  %2075 = vmatprep.subr.mxu0 %v1545
  %2076 = vmatpush1.msra.mxu0 %v1544
  %2077 = vmatprep.subr.mxu0 %v1601
  %2078 = vmatpush1.msra.mxu0 %v1600
  %2079 = vmatprep.subr.mxu0 %v1609
  %2080 = vmatpush1.msra.mxu0 %v1608
  %2081 = vmatprep.subr.mxu0 %v1665
  %2082 = vmatpush1.msra.mxu0 %v1664
  %2083 = vmatprep.subr.mxu0 %v1673
  %2084 = vmatpush1.msra.mxu0 %v1672
  %2085 = vmatprep.subr.mxu0 %v1729
  %2086 = vmatpush1.msra.mxu0 %v1728
  %2087 = vmatprep.subr.mxu0 %v1737
  %2088 = vmatpush1.msra.mxu0 %v1736
  %2089 = vmatprep.subr.mxu0 %v1793
  %2090 = vmatpush1.msra.mxu0 %v1792
  %2091 = vmatprep.subr.mxu0 %v1801
  %2092 = vmatpush1.msra.mxu0 %v1800
  %2093 = vmatprep.subr.mxu0 0.0
  %2094 = vmatpush1.msra.mxu0 0.0
  %2095 = vmatprep.subr.mxu0 0.0
  %2096 = vmatpush1.msra.mxu0 0.0
  %2097 = vmatprep.subr.mxu0 0.0
  %2098 = vmatpush1.msra.mxu0 0.0
  %2099 = vmatprep.subr.mxu0 0.0
  %2100 = vmatpush1.msra.mxu0 0.0
  %2101 = vmatprep.subr.mxu0 0.0
  %2102 = vmatpush1.msra.mxu0 0.0
  %2103 = vmatprep.subr.mxu0 0.0
  %2104 = vmatpush1.msra.mxu0 0.0
  %2105 = vmatprep.subr.mxu0 0.0
  %2106 = vmatpush1.msra.mxu0 0.0
  %2107 = vmatprep.subr.mxu0 0.0
  %2108 = vmatpush1.msra.mxu0 0.0
  %2109 = vmatprep.subr.mxu0 0.0
  %2110 = vmatpush1.msra.mxu0 0.0
  %2111 = vmatprep.subr.mxu0 0.0
  %2112 = vmatpush1.msra.mxu0 0.0
  %2113 = vmatprep.subr.mxu0 0.0
  %2114 = vmatpush1.msra.mxu0 0.0
  %2115 = vmatprep.subr.mxu0 0.0
  %2116 = vmatpush1.msra.mxu0 0.0
  %2117 = vmatprep.subr.mxu0 0.0
  %2118 = vmatpush1.msra.mxu0 0.0
  %2119 = vmatprep.subr.mxu0 0.0
  %2120 = vmatpush1.msra.mxu0 0.0
  %2121 = vmatprep.mubr.f32.mxu0 %v1821
  %2122 = vmatmul.mubr.f32.gmra.mrb[0].mxu0 %v1803
  %v2123 = vpop.f32.mrb[0].mxu0
  %v2124 = vadd.f32 %v1813, %v2123
  %v2125 = vpop.f32.mrb[0].mxu0
  %v2126 = vadd.f32 %v1813, %v2125
  %2127 = vmatprep.mubr.f32.mxu0 %v1824
  %2128 = vmatmul.mubr.f32.gmra.mrb[0].mxu0 %v1805
  %v2129 = vpop.f32.mrb[0].mxu0
  %v2130 = vadd.f32 %v1818, %v2129
  %v2131 = vpop.f32.mrb[0].mxu0
  %v2132 = vadd.f32 %v1818, %v2131
  %2133 = vdwg.mxu0
  %s2134 = scalar_lea.vmem %s1, 128
  %v2135 = vld [vmem:[%s2134] sm:$0xff]
  %v2136 = vld [vmem:[%s2134 + $0x8] sm:$0xff]
  %v2137 = vld [vmem:[%s2134 + $0x10] sm:$0xff]
  %v2138 = vld [vmem:[%s2134 + $0x18] sm:$0xff]
  %s2139 = scalar_lea.vmem %s2, 64
  %v2140 = vld [vmem:[%s2139] sm:$0xff]
  %v2141 = vld [vmem:[%s2139 + $0x8] sm:$0xff]
  %2143 = vset.pattern.permute.xlu0 0
  %2144 = vperm.xlu0 %2143, %v2140
  %v2145 = vpop.permute.xlu0 %2144
  %2148 = vset.pattern.permute.xlu0 0
  %2149 = vperm.xlu0 %2148, %v2141
  %v2150 = vpop.permute.xlu0 %2149
  %v2153 = vsel %vm943, %v2136, 0
  %v2156 = vsel %vm943, %v2138, 0
  %2158 = vmatprep.subr.mxu0 %v1323
  %2159 = vmatpush1.msra.mxu0 %v1322
  %2160 = vmatprep.subr.mxu0 %v1331
  %2161 = vmatpush1.msra.mxu0 %v1330
  %2162 = vmatprep.subr.mxu0 %v1387
  %2163 = vmatpush1.msra.mxu0 %v1386
  %2164 = vmatprep.subr.mxu0 %v1395
  %2165 = vmatpush1.msra.mxu0 %v1394
  %2166 = vmatprep.subr.mxu0 %v1451
  %2167 = vmatpush1.msra.mxu0 %v1450
  %2168 = vmatprep.subr.mxu0 %v1459
  %2169 = vmatpush1.msra.mxu0 %v1458
  %2170 = vmatprep.subr.mxu0 %v1515
  %2171 = vmatpush1.msra.mxu0 %v1514
  %2172 = vmatprep.subr.mxu0 %v1523
  %2173 = vmatpush1.msra.mxu0 %v1522
  %2174 = vmatprep.subr.mxu0 %v1531
  %2175 = vmatpush1.msra.mxu0 %v1530
  %2176 = vmatprep.subr.mxu0 %v1539
  %2177 = vmatpush1.msra.mxu0 %v1538
  %2178 = vmatprep.subr.mxu0 %v1595
  %2179 = vmatpush1.msra.mxu0 %v1594
  %2180 = vmatprep.subr.mxu0 %v1603
  %2181 = vmatpush1.msra.mxu0 %v1602
  %2182 = vmatprep.subr.mxu0 %v1659
  %2183 = vmatpush1.msra.mxu0 %v1658
  %2184 = vmatprep.subr.mxu0 %v1667
  %2185 = vmatpush1.msra.mxu0 %v1666
  %2186 = vmatprep.subr.mxu0 %v1723
  %2187 = vmatpush1.msra.mxu0 %v1722
  %2188 = vmatprep.subr.mxu0 %v1731
  %2189 = vmatpush1.msra.mxu0 %v1730
  %2190 = vmatprep.subr.mxu0 %v1787
  %2191 = vmatpush1.msra.mxu0 %v1786
  %2192 = vmatprep.subr.mxu0 %v1795
  %2193 = vmatpush1.msra.mxu0 %v1794
  %2194 = vmatprep.subr.mxu0 0.0
  %2195 = vmatpush1.msra.mxu0 0.0
  %2196 = vmatprep.subr.mxu0 0.0
  %2197 = vmatpush1.msra.mxu0 0.0
  %2198 = vmatprep.subr.mxu0 0.0
  %2199 = vmatpush1.msra.mxu0 0.0
  %2200 = vmatprep.subr.mxu0 0.0
  %2201 = vmatpush1.msra.mxu0 0.0
  %2202 = vmatprep.subr.mxu0 0.0
  %2203 = vmatpush1.msra.mxu0 0.0
  %2204 = vmatprep.subr.mxu0 0.0
  %2205 = vmatpush1.msra.mxu0 0.0
  %2206 = vmatprep.subr.mxu0 0.0
  %2207 = vmatpush1.msra.mxu0 0.0
  %2208 = vmatprep.subr.mxu0 0.0
  %2209 = vmatpush1.msra.mxu0 0.0
  %2210 = vmatprep.subr.mxu0 0.0
  %2211 = vmatpush1.msra.mxu0 0.0
  %2212 = vmatprep.subr.mxu0 0.0
  %2213 = vmatpush1.msra.mxu0 0.0
  %2214 = vmatprep.subr.mxu0 0.0
  %2215 = vmatpush1.msra.mxu0 0.0
  %2216 = vmatprep.subr.mxu0 0.0
  %2217 = vmatpush1.msra.mxu0 0.0
  %2218 = vmatprep.subr.mxu0 0.0
  %2219 = vmatpush1.msra.mxu0 0.0
  %2220 = vmatprep.subr.mxu0 0.0
  %2221 = vmatpush1.msra.mxu0 0.0
  %2222 = vmatprep.mubr.f32.mxu0 %v2153
  %2223 = vmatmul.mubr.f32.gmra.mrb[0].mxu0 %v2135
  %v2224 = vpop.f32.mrb[0].mxu0
  %v2225 = vadd.f32 %v2145, %v2224
  %v2226 = vpop.f32.mrb[0].mxu0
  %v2227 = vadd.f32 %v2145, %v2226
  %2228 = vmatprep.mubr.f32.mxu0 %v2156
  %2229 = vmatmul.mubr.f32.gmra.mrb[0].mxu0 %v2137
  %v2230 = vpop.f32.mrb[0].mxu0
  %v2231 = vadd.f32 %v2150, %v2230
  %v2232 = vpop.f32.mrb[0].mxu0
  %v2233 = vadd.f32 %v2150, %v2232
  %2234 = vdwg.mxu0
  %2235 = vmatprep.subr.mxu0 %v1325
  %2236 = vmatpush1.msra.mxu0 %v1324
  %2237 = vmatprep.subr.mxu0 %v1333
  %2238 = vmatpush1.msra.mxu0 %v1332
  %2239 = vmatprep.subr.mxu0 %v1389
  %2240 = vmatpush1.msra.mxu0 %v1388
  %2241 = vmatprep.subr.mxu0 %v1397
  %2242 = vmatpush1.msra.mxu0 %v1396
  %2243 = vmatprep.subr.mxu0 %v1453
  %2244 = vmatpush1.msra.mxu0 %v1452
  %2245 = vmatprep.subr.mxu0 %v1461
  %2246 = vmatpush1.msra.mxu0 %v1460
  %2247 = vmatprep.subr.mxu0 %v1517
  %2248 = vmatpush1.msra.mxu0 %v1516
  %2249 = vmatprep.subr.mxu0 %v1525
  %2250 = vmatpush1.msra.mxu0 %v1524
  %2251 = vmatprep.subr.mxu0 %v1533
  %2252 = vmatpush1.msra.mxu0 %v1532
  %2253 = vmatprep.subr.mxu0 %v1541
  %2254 = vmatpush1.msra.mxu0 %v1540
  %2255 = vmatprep.subr.mxu0 %v1597
  %2256 = vmatpush1.msra.mxu0 %v1596
  %2257 = vmatprep.subr.mxu0 %v1605
  %2258 = vmatpush1.msra.mxu0 %v1604
  %2259 = vmatprep.subr.mxu0 %v1661
  %2260 = vmatpush1.msra.mxu0 %v1660
  %2261 = vmatprep.subr.mxu0 %v1669
  %2262 = vmatpush1.msra.mxu0 %v1668
  %2263 = vmatprep.subr.mxu0 %v1725
  %2264 = vmatpush1.msra.mxu0 %v1724
  %2265 = vmatprep.subr.mxu0 %v1733
  %2266 = vmatpush1.msra.mxu0 %v1732
  %2267 = vmatprep.subr.mxu0 %v1789
  %2268 = vmatpush1.msra.mxu0 %v1788
  %2269 = vmatprep.subr.mxu0 %v1797
  %2270 = vmatpush1.msra.mxu0 %v1796
  %2271 = vmatprep.subr.mxu0 0.0
  %2272 = vmatpush1.msra.mxu0 0.0
  %2273 = vmatprep.subr.mxu0 0.0
  %2274 = vmatpush1.msra.mxu0 0.0
  %2275 = vmatprep.subr.mxu0 0.0
  %2276 = vmatpush1.msra.mxu0 0.0
  %2277 = vmatprep.subr.mxu0 0.0
  %2278 = vmatpush1.msra.mxu0 0.0
  %2279 = vmatprep.subr.mxu0 0.0
  %2280 = vmatpush1.msra.mxu0 0.0
  %2281 = vmatprep.subr.mxu0 0.0
  %2282 = vmatpush1.msra.mxu0 0.0
  %2283 = vmatprep.subr.mxu0 0.0
  %2284 = vmatpush1.msra.mxu0 0.0
  %2285 = vmatprep.subr.mxu0 0.0
  %2286 = vmatpush1.msra.mxu0 0.0
  %2287 = vmatprep.subr.mxu0 0.0
  %2288 = vmatpush1.msra.mxu0 0.0
  %2289 = vmatprep.subr.mxu0 0.0
  %2290 = vmatpush1.msra.mxu0 0.0
  %2291 = vmatprep.subr.mxu0 0.0
  %2292 = vmatpush1.msra.mxu0 0.0
  %2293 = vmatprep.subr.mxu0 0.0
  %2294 = vmatpush1.msra.mxu0 0.0
  %2295 = vmatprep.subr.mxu0 0.0
  %2296 = vmatpush1.msra.mxu0 0.0
  %2297 = vmatprep.subr.mxu0 0.0
  %2298 = vmatpush1.msra.mxu0 0.0
  %2299 = vmatprep.mubr.f32.mxu0 %v2153
  %2300 = vmatmul.mubr.f32.gmra.mrb[0].mxu0 %v2135
  %v2301 = vpop.f32.mrb[0].mxu0
  %v2302 = vadd.f32 %v2145, %v2301
  %v2303 = vpop.f32.mrb[0].mxu0
  %v2304 = vadd.f32 %v2145, %v2303
  %2305 = vmatprep.mubr.f32.mxu0 %v2156
  %2306 = vmatmul.mubr.f32.gmra.mrb[0].mxu0 %v2137
  %v2307 = vpop.f32.mrb[0].mxu0
  %v2308 = vadd.f32 %v2150, %v2307
  %v2309 = vpop.f32.mrb[0].mxu0
  %v2310 = vadd.f32 %v2150, %v2309
  %2311 = vdwg.mxu0
  %2312 = vmatprep.subr.mxu0 %v1327
  %2313 = vmatpush1.msra.mxu0 %v1326
  %2314 = vmatprep.subr.mxu0 %v1335
  %2315 = vmatpush1.msra.mxu0 %v1334
  %2316 = vmatprep.subr.mxu0 %v1391
  %2317 = vmatpush1.msra.mxu0 %v1390
  %2318 = vmatprep.subr.mxu0 %v1399
  %2319 = vmatpush1.msra.mxu0 %v1398
  %2320 = vmatprep.subr.mxu0 %v1455
  %2321 = vmatpush1.msra.mxu0 %v1454
  %2322 = vmatprep.subr.mxu0 %v1463
  %2323 = vmatpush1.msra.mxu0 %v1462
  %2324 = vmatprep.subr.mxu0 %v1519
  %2325 = vmatpush1.msra.mxu0 %v1518
  %2326 = vmatprep.subr.mxu0 %v1527
  %2327 = vmatpush1.msra.mxu0 %v1526
  %2328 = vmatprep.subr.mxu0 %v1535
  %2329 = vmatpush1.msra.mxu0 %v1534
  %2330 = vmatprep.subr.mxu0 %v1543
  %2331 = vmatpush1.msra.mxu0 %v1542
  %2332 = vmatprep.subr.mxu0 %v1599
  %2333 = vmatpush1.msra.mxu0 %v1598
  %2334 = vmatprep.subr.mxu0 %v1607
  %2335 = vmatpush1.msra.mxu0 %v1606
  %2336 = vmatprep.subr.mxu0 %v1663
  %2337 = vmatpush1.msra.mxu0 %v1662
  %2338 = vmatprep.subr.mxu0 %v1671
  %2339 = vmatpush1.msra.mxu0 %v1670
  %2340 = vmatprep.subr.mxu0 %v1727
  %2341 = vmatpush1.msra.mxu0 %v1726
  %2342 = vmatprep.subr.mxu0 %v1735
  %2343 = vmatpush1.msra.mxu0 %v1734
  %2344 = vmatprep.subr.mxu0 %v1791
  %2345 = vmatpush1.msra.mxu0 %v1790
  %2346 = vmatprep.subr.mxu0 %v1799
  %2347 = vmatpush1.msra.mxu0 %v1798
  %2348 = vmatprep.subr.mxu0 0.0
  %2349 = vmatpush1.msra.mxu0 0.0
  %2350 = vmatprep.subr.mxu0 0.0
  %2351 = vmatpush1.msra.mxu0 0.0
  %2352 = vmatprep.subr.mxu0 0.0
  %2353 = vmatpush1.msra.mxu0 0.0
  %2354 = vmatprep.subr.mxu0 0.0
  %2355 = vmatpush1.msra.mxu0 0.0
  %2356 = vmatprep.subr.mxu0 0.0
  %2357 = vmatpush1.msra.mxu0 0.0
  %2358 = vmatprep.subr.mxu0 0.0
  %2359 = vmatpush1.msra.mxu0 0.0
  %2360 = vmatprep.subr.mxu0 0.0
  %2361 = vmatpush1.msra.mxu0 0.0
  %2362 = vmatprep.subr.mxu0 0.0
  %2363 = vmatpush1.msra.mxu0 0.0
  %2364 = vmatprep.subr.mxu0 0.0
  %2365 = vmatpush1.msra.mxu0 0.0
  %2366 = vmatprep.subr.mxu0 0.0
  %2367 = vmatpush1.msra.mxu0 0.0
  %2368 = vmatprep.subr.mxu0 0.0
  %2369 = vmatpush1.msra.mxu0 0.0
  %2370 = vmatprep.subr.mxu0 0.0
  %2371 = vmatpush1.msra.mxu0 0.0
  %2372 = vmatprep.subr.mxu0 0.0
  %2373 = vmatpush1.msra.mxu0 0.0
  %2374 = vmatprep.subr.mxu0 0.0
  %2375 = vmatpush1.msra.mxu0 0.0
  %2376 = vmatprep.mubr.f32.mxu0 %v2153
  %2377 = vmatmul.mubr.f32.gmra.mrb[0].mxu0 %v2135
  %v2378 = vpop.f32.mrb[0].mxu0
  %v2379 = vadd.f32 %v2145, %v2378
  %v2380 = vpop.f32.mrb[0].mxu0
  %v2381 = vadd.f32 %v2145, %v2380
  %2382 = vmatprep.mubr.f32.mxu0 %v2156
  %2383 = vmatmul.mubr.f32.gmra.mrb[0].mxu0 %v2137
  %v2384 = vpop.f32.mrb[0].mxu0
  %v2385 = vadd.f32 %v2150, %v2384
  %v2386 = vpop.f32.mrb[0].mxu0
  %v2387 = vadd.f32 %v2150, %v2386
  %2388 = vdwg.mxu0
  %2389 = vmatprep.subr.mxu0 %v1329
  %2390 = vmatpush1.msra.mxu0 %v1328
  %2391 = vmatprep.subr.mxu0 %v1337
  %2392 = vmatpush1.msra.mxu0 %v1336
  %2393 = vmatprep.subr.mxu0 %v1393
  %2394 = vmatpush1.msra.mxu0 %v1392
  %2395 = vmatprep.subr.mxu0 %v1401
  %2396 = vmatpush1.msra.mxu0 %v1400
  %2397 = vmatprep.subr.mxu0 %v1457
  %2398 = vmatpush1.msra.mxu0 %v1456
  %2399 = vmatprep.subr.mxu0 %v1465
  %2400 = vmatpush1.msra.mxu0 %v1464
  %2401 = vmatprep.subr.mxu0 %v1521
  %2402 = vmatpush1.msra.mxu0 %v1520
  %2403 = vmatprep.subr.mxu0 %v1529
  %2404 = vmatpush1.msra.mxu0 %v1528
  %2405 = vmatprep.subr.mxu0 %v1537
  %2406 = vmatpush1.msra.mxu0 %v1536
  %2407 = vmatprep.subr.mxu0 %v1545
  %2408 = vmatpush1.msra.mxu0 %v1544
  %2409 = vmatprep.subr.mxu0 %v1601
  %2410 = vmatpush1.msra.mxu0 %v1600
  %2411 = vmatprep.subr.mxu0 %v1609
  %2412 = vmatpush1.msra.mxu0 %v1608
  %2413 = vmatprep.subr.mxu0 %v1665
  %2414 = vmatpush1.msra.mxu0 %v1664
  %2415 = vmatprep.subr.mxu0 %v1673
  %2416 = vmatpush1.msra.mxu0 %v1672
  %2417 = vmatprep.subr.mxu0 %v1729
  %2418 = vmatpush1.msra.mxu0 %v1728
  %2419 = vmatprep.subr.mxu0 %v1737
  %2420 = vmatpush1.msra.mxu0 %v1736
  %2421 = vmatprep.subr.mxu0 %v1793
  %2422 = vmatpush1.msra.mxu0 %v1792
  %2423 = vmatprep.subr.mxu0 %v1801
  %2424 = vmatpush1.msra.mxu0 %v1800
  %2425 = vmatprep.subr.mxu0 0.0
  %2426 = vmatpush1.msra.mxu0 0.0
  %2427 = vmatprep.subr.mxu0 0.0
  %2428 = vmatpush1.msra.mxu0 0.0
  %2429 = vmatprep.subr.mxu0 0.0
  %2430 = vmatpush1.msra.mxu0 0.0
  %2431 = vmatprep.subr.mxu0 0.0
  %2432 = vmatpush1.msra.mxu0 0.0
  %2433 = vmatprep.subr.mxu0 0.0
  %2434 = vmatpush1.msra.mxu0 0.0
  %2435 = vmatprep.subr.mxu0 0.0
  %2436 = vmatpush1.msra.mxu0 0.0
  %2437 = vmatprep.subr.mxu0 0.0
  %2438 = vmatpush1.msra.mxu0 0.0
  %2439 = vmatprep.subr.mxu0 0.0
  %2440 = vmatpush1.msra.mxu0 0.0
  %2441 = vmatprep.subr.mxu0 0.0
  %2442 = vmatpush1.msra.mxu0 0.0
  %2443 = vmatprep.subr.mxu0 0.0
  %2444 = vmatpush1.msra.mxu0 0.0
  %2445 = vmatprep.subr.mxu0 0.0
  %2446 = vmatpush1.msra.mxu0 0.0
  %2447 = vmatprep.subr.mxu0 0.0
  %2448 = vmatpush1.msra.mxu0 0.0
  %2449 = vmatprep.subr.mxu0 0.0
  %2450 = vmatpush1.msra.mxu0 0.0
  %2451 = vmatprep.subr.mxu0 0.0
  %2452 = vmatpush1.msra.mxu0 0.0
  %2453 = vmatprep.mubr.f32.mxu0 %v2153
  %2454 = vmatmul.mubr.f32.gmra.mrb[0].mxu0 %v2135
  %v2455 = vpop.f32.mrb[0].mxu0
  %v2456 = vadd.f32 %v2145, %v2455
  %v2457 = vpop.f32.mrb[0].mxu0
  %v2458 = vadd.f32 %v2145, %v2457
  %2459 = vmatprep.mubr.f32.mxu0 %v2156
  %2460 = vmatmul.mubr.f32.gmra.mrb[0].mxu0 %v2137
  %v2461 = vpop.f32.mrb[0].mxu0
  %v2462 = vadd.f32 %v2150, %v2461
  %v2463 = vpop.f32.mrb[0].mxu0
  %v2464 = vadd.f32 %v2150, %v2463
  %2465 = vdwg.mxu0
  %v2466 = vadd.f32 %v1258, %v1893
  %v2467 = vadd.f32 %v1259, %v1895
  %v2468 = vadd.f32 %v1260, %v1970
  %v2469 = vadd.f32 %v1261, %v1972
  %v2470 = vadd.f32 %v1262, %v2047
  %v2471 = vadd.f32 %v1263, %v2049
  %v2472 = vadd.f32 %v1264, %v2124
  %v2473 = vadd.f32 %v1265, %v2126
  %v2474 = vadd.f32 %v1266, %v1899
  %v2475 = vadd.f32 %v1267, %v1901
  %v2476 = vadd.f32 %v1268, %v1976
  %v2477 = vadd.f32 %v1269, %v1978
  %v2478 = vadd.f32 %v1270, %v2053
  %v2479 = vadd.f32 %v1271, %v2055
  %v2480 = vadd.f32 %v1272, %v2130
  %v2481 = vadd.f32 %v1273, %v2132
  %2482 = vrot.lane.b32.xlu0 %v2466, 33
  %v2483 = vpop.permute.xlu0 %2482
  %2484 = vrot.lane.b32.xlu0 %v2474, 33
  %v2485 = vpop.permute.xlu0 %2484
  %2486 = vrot.lane.b32.xlu0 %v2467, 33
  %v2487 = vpop.permute.xlu0 %2486
  %2488 = vrot.lane.b32.xlu0 %v2475, 33
  %v2489 = vpop.permute.xlu0 %2488
  %2490 = vrot.lane.b32.xlu0 %v2468, 33
  %v2491 = vpop.permute.xlu0 %2490
  %2492 = vrot.lane.b32.xlu0 %v2476, 33
  %v2493 = vpop.permute.xlu0 %2492
  %2494 = vrot.lane.b32.xlu0 %v2469, 33
  %v2495 = vpop.permute.xlu0 %2494
  %2496 = vrot.lane.b32.xlu0 %v2477, 33
  %v2497 = vpop.permute.xlu0 %2496
  %2498 = vrot.lane.b32.xlu0 %v2470, 33
  %v2499 = vpop.permute.xlu0 %2498
  %2500 = vrot.lane.b32.xlu0 %v2478, 33
  %v2501 = vpop.permute.xlu0 %2500
  %2502 = vrot.lane.b32.xlu0 %v2471, 33
  %v2503 = vpop.permute.xlu0 %2502
  %2504 = vrot.lane.b32.xlu0 %v2479, 33
  %v2505 = vpop.permute.xlu0 %2504
  %2506 = vrot.lane.b32.xlu0 %v2472, 33
  %v2507 = vpop.permute.xlu0 %2506
  %2508 = vrot.lane.b32.xlu0 %v2480, 33
  %v2509 = vpop.permute.xlu0 %2508
  %2510 = vrot.lane.b32.xlu0 %v2473, 33
  %v2511 = vpop.permute.xlu0 %2510
  %2512 = vrot.lane.b32.xlu0 %v2481, 33
  %v2513 = vpop.permute.xlu0 %2512
  %v2514 = vsel %vm423, %v2507, %v2511
  %v2515 = vsel %vm423, %v2509, %v2513
  %v2516 = vsel %vm423, %v2503, %v2507
  %v2517 = vsel %vm423, %v2505, %v2509
  %v2518 = vsel %vm423, %v2499, %v2503
  %v2519 = vsel %vm423, %v2501, %v2505
  %v2520 = vsel %vm423, %v2495, %v2499
  %v2521 = vsel %vm423, %v2497, %v2501
  %v2522 = vsel %vm423, %v2491, %v2495
  %v2523 = vsel %vm423, %v2493, %v2497
  %v2524 = vsel %vm423, %v2487, %v2491
  %v2525 = vsel %vm423, %v2489, %v2493
  %v2526 = vsel %vm423, %v2483, %v2487
  %v2527 = vsel %vm423, %v2485, %v2489
  %v2528 = vsel %vm423, %v2511, %v2483
  %v2529 = vsel %vm423, %v2513, %v2485
  %v2530 = vsel %vm71, %v2528, 0.0
  %v2531 = vsel %vm72, %v2526, 0.0
  %v2532 = vsel %vm73, %v2524, 0.0
  %v2533 = vsel %vm74, %v2522, 0.0
  %v2534 = vsel %vm75, %v2520, 0.0
  %v2535 = vsel %vm76, %v2518, 0.0
  %v2536 = vsel %vm77, %v2516, 0.0
  %v2537 = vsel %vm78, %v2514, 0.0
  %v2538 = vsel %vm71, %v2529, 0.0
  %v2539 = vsel %vm72, %v2527, 0.0
  %v2540 = vsel %vm73, %v2525, 0.0
  %v2541 = vsel %vm74, %v2523, 0.0
  %v2542 = vsel %vm75, %v2521, 0.0
  %v2543 = vsel %vm76, %v2519, 0.0
  %v2544 = vsel %vm77, %v2517, 0.0
  %v2545 = vsel %vm78, %v2515, 0.0
  %2546 = vrot.lane.b32.xlu0 %v2466, 32
  %v2547 = vpop.permute.xlu0 %2546
  %2548 = vrot.lane.b32.xlu0 %v2474, 32
  %v2549 = vpop.permute.xlu0 %2548
  %2550 = vrot.lane.b32.xlu0 %v2467, 32
  %v2551 = vpop.permute.xlu0 %2550
  %2552 = vrot.lane.b32.xlu0 %v2475, 32
  %v2553 = vpop.permute.xlu0 %2552
  %2554 = vrot.lane.b32.xlu0 %v2468, 32
  %v2555 = vpop.permute.xlu0 %2554
  %2556 = vrot.lane.b32.xlu0 %v2476, 32
  %v2557 = vpop.permute.xlu0 %2556
  %2558 = vrot.lane.b32.xlu0 %v2469, 32
  %v2559 = vpop.permute.xlu0 %2558
  %2560 = vrot.lane.b32.xlu0 %v2477, 32
  %v2561 = vpop.permute.xlu0 %2560
  %2562 = vrot.lane.b32.xlu0 %v2470, 32
  %v2563 = vpop.permute.xlu0 %2562
  %2564 = vrot.lane.b32.xlu0 %v2478, 32
  %v2565 = vpop.permute.xlu0 %2564
  %2566 = vrot.lane.b32.xlu0 %v2471, 32
  %v2567 = vpop.permute.xlu0 %2566
  %2568 = vrot.lane.b32.xlu0 %v2479, 32
  %v2569 = vpop.permute.xlu0 %2568
  %2570 = vrot.lane.b32.xlu0 %v2472, 32
  %v2571 = vpop.permute.xlu0 %2570
  %2572 = vrot.lane.b32.xlu0 %v2480, 32
  %v2573 = vpop.permute.xlu0 %2572
  %2574 = vrot.lane.b32.xlu0 %v2473, 32
  %v2575 = vpop.permute.xlu0 %2574
  %2576 = vrot.lane.b32.xlu0 %v2481, 32
  %v2577 = vpop.permute.xlu0 %2576
  %v2578 = vsel %vm488, %v2571, %v2575
  %v2579 = vsel %vm488, %v2573, %v2577
  %v2580 = vsel %vm488, %v2567, %v2571
  %v2581 = vsel %vm488, %v2569, %v2573
  %v2582 = vsel %vm488, %v2563, %v2567
  %v2583 = vsel %vm488, %v2565, %v2569
  %v2584 = vsel %vm488, %v2559, %v2563
  %v2585 = vsel %vm488, %v2561, %v2565
  %v2586 = vsel %vm488, %v2555, %v2559
  %v2587 = vsel %vm488, %v2557, %v2561
  %v2588 = vsel %vm488, %v2551, %v2555
  %v2589 = vsel %vm488, %v2553, %v2557
  %v2590 = vsel %vm488, %v2547, %v2551
  %v2591 = vsel %vm488, %v2549, %v2553
  %v2592 = vsel %vm488, %v2575, %v2547
  %v2593 = vsel %vm488, %v2577, %v2549
  %v2594 = vsel %vm103, %v2592, 0.0
  %v2595 = vsel %vm104, %v2590, 0.0
  %v2596 = vsel %vm105, %v2588, 0.0
  %v2597 = vsel %vm106, %v2586, 0.0
  %v2598 = vsel %vm107, %v2584, 0.0
  %v2599 = vsel %vm108, %v2582, 0.0
  %v2600 = vsel %vm109, %v2580, 0.0
  %v2601 = vsel %vm110, %v2578, 0.0
  %v2602 = vsel %vm103, %v2593, 0.0
  %v2603 = vsel %vm104, %v2591, 0.0
  %v2604 = vsel %vm105, %v2589, 0.0
  %v2605 = vsel %vm106, %v2587, 0.0
  %v2606 = vsel %vm107, %v2585, 0.0
  %v2607 = vsel %vm108, %v2583, 0.0
  %v2608 = vsel %vm109, %v2581, 0.0
  %v2609 = vsel %vm110, %v2579, 0.0
  %2610 = vrot.lane.b32.xlu0 %v2466, 31
  %v2611 = vpop.permute.xlu0 %2610
  %2612 = vrot.lane.b32.xlu0 %v2474, 31
  %v2613 = vpop.permute.xlu0 %2612
  %2614 = vrot.lane.b32.xlu0 %v2467, 31
  %v2615 = vpop.permute.xlu0 %2614
  %2616 = vrot.lane.b32.xlu0 %v2475, 31
  %v2617 = vpop.permute.xlu0 %2616
  %2618 = vrot.lane.b32.xlu0 %v2468, 31
  %v2619 = vpop.permute.xlu0 %2618
  %2620 = vrot.lane.b32.xlu0 %v2476, 31
  %v2621 = vpop.permute.xlu0 %2620
  %2622 = vrot.lane.b32.xlu0 %v2469, 31
  %v2623 = vpop.permute.xlu0 %2622
  %2624 = vrot.lane.b32.xlu0 %v2477, 31
  %v2625 = vpop.permute.xlu0 %2624
  %2626 = vrot.lane.b32.xlu0 %v2470, 31
  %v2627 = vpop.permute.xlu0 %2626
  %2628 = vrot.lane.b32.xlu0 %v2478, 31
  %v2629 = vpop.permute.xlu0 %2628
  %2630 = vrot.lane.b32.xlu0 %v2471, 31
  %v2631 = vpop.permute.xlu0 %2630
  %2632 = vrot.lane.b32.xlu0 %v2479, 31
  %v2633 = vpop.permute.xlu0 %2632
  %2634 = vrot.lane.b32.xlu0 %v2472, 31
  %v2635 = vpop.permute.xlu0 %2634
  %2636 = vrot.lane.b32.xlu0 %v2480, 31
  %v2637 = vpop.permute.xlu0 %2636
  %2638 = vrot.lane.b32.xlu0 %v2473, 31
  %v2639 = vpop.permute.xlu0 %2638
  %2640 = vrot.lane.b32.xlu0 %v2481, 31
  %v2641 = vpop.permute.xlu0 %2640
  %v2642 = vsel %vm553, %v2635, %v2639
  %v2643 = vsel %vm553, %v2637, %v2641
  %v2644 = vsel %vm553, %v2631, %v2635
  %v2645 = vsel %vm553, %v2633, %v2637
  %v2646 = vsel %vm553, %v2627, %v2631
  %v2647 = vsel %vm553, %v2629, %v2633
  %v2648 = vsel %vm553, %v2623, %v2627
  %v2649 = vsel %vm553, %v2625, %v2629
  %v2650 = vsel %vm553, %v2619, %v2623
  %v2651 = vsel %vm553, %v2621, %v2625
  %v2652 = vsel %vm553, %v2615, %v2619
  %v2653 = vsel %vm553, %v2617, %v2621
  %v2654 = vsel %vm553, %v2611, %v2615
  %v2655 = vsel %vm553, %v2613, %v2617
  %v2656 = vsel %vm553, %v2639, %v2611
  %v2657 = vsel %vm553, %v2641, %v2613
  %v2658 = vsel %vm151, %v2656, 0.0
  %v2659 = vsel %vm152, %v2654, 0.0
  %v2660 = vsel %vm153, %v2652, 0.0
  %v2661 = vsel %vm154, %v2650, 0.0
  %v2662 = vsel %vm155, %v2648, 0.0
  %v2663 = vsel %vm156, %v2646, 0.0
  %v2664 = vsel %vm157, %v2644, 0.0
  %v2665 = vsel %vm158, %v2642, 0.0
  %v2666 = vsel %vm151, %v2657, 0.0
  %v2667 = vsel %vm152, %v2655, 0.0
  %v2668 = vsel %vm153, %v2653, 0.0
  %v2669 = vsel %vm154, %v2651, 0.0
  %v2670 = vsel %vm155, %v2649, 0.0
  %v2671 = vsel %vm156, %v2647, 0.0
  %v2672 = vsel %vm157, %v2645, 0.0
  %v2673 = vsel %vm158, %v2643, 0.0
  %2674 = vrot.lane.b32.xlu0 %v2466, 1
  %v2675 = vpop.permute.xlu0 %2674
  %2676 = vrot.lane.b32.xlu0 %v2474, 1
  %v2677 = vpop.permute.xlu0 %2676
  %2678 = vrot.lane.b32.xlu0 %v2467, 1
  %v2679 = vpop.permute.xlu0 %2678
  %2680 = vrot.lane.b32.xlu0 %v2475, 1
  %v2681 = vpop.permute.xlu0 %2680
  %2682 = vrot.lane.b32.xlu0 %v2468, 1
  %v2683 = vpop.permute.xlu0 %2682
  %2684 = vrot.lane.b32.xlu0 %v2476, 1
  %v2685 = vpop.permute.xlu0 %2684
  %2686 = vrot.lane.b32.xlu0 %v2469, 1
  %v2687 = vpop.permute.xlu0 %2686
  %2688 = vrot.lane.b32.xlu0 %v2477, 1
  %v2689 = vpop.permute.xlu0 %2688
  %2690 = vrot.lane.b32.xlu0 %v2470, 1
  %v2691 = vpop.permute.xlu0 %2690
  %2692 = vrot.lane.b32.xlu0 %v2478, 1
  %v2693 = vpop.permute.xlu0 %2692
  %2694 = vrot.lane.b32.xlu0 %v2471, 1
  %v2695 = vpop.permute.xlu0 %2694
  %2696 = vrot.lane.b32.xlu0 %v2479, 1
  %v2697 = vpop.permute.xlu0 %2696
  %2698 = vrot.lane.b32.xlu0 %v2472, 1
  %v2699 = vpop.permute.xlu0 %2698
  %2700 = vrot.lane.b32.xlu0 %v2480, 1
  %v2701 = vpop.permute.xlu0 %2700
  %2702 = vrot.lane.b32.xlu0 %v2473, 1
  %v2703 = vpop.permute.xlu0 %2702
  %2704 = vrot.lane.b32.xlu0 %v2481, 1
  %v2705 = vpop.permute.xlu0 %2704
  %v2706 = vsel %vm618, %v2699, %v2703
  %v2707 = vsel %vm618, %v2701, %v2705
  %v2708 = vsel %vm618, %v2695, %v2699
  %v2709 = vsel %vm618, %v2697, %v2701
  %v2710 = vsel %vm618, %v2691, %v2695
  %v2711 = vsel %vm618, %v2693, %v2697
  %v2712 = vsel %vm618, %v2687, %v2691
  %v2713 = vsel %vm618, %v2689, %v2693
  %v2714 = vsel %vm618, %v2683, %v2687
  %v2715 = vsel %vm618, %v2685, %v2689
  %v2716 = vsel %vm618, %v2679, %v2683
  %v2717 = vsel %vm618, %v2681, %v2685
  %v2718 = vsel %vm618, %v2675, %v2679
  %v2719 = vsel %vm618, %v2677, %v2681
  %v2720 = vsel %vm618, %v2703, %v2675
  %v2721 = vsel %vm618, %v2705, %v2677
  %v2722 = vsel %vm191, %v2720, 0.0
  %v2723 = vsel %vm192, %v2718, 0.0
  %v2724 = vsel %vm193, %v2716, 0.0
  %v2725 = vsel %vm194, %v2714, 0.0
  %v2726 = vsel %vm195, %v2712, 0.0
  %v2727 = vsel %vm196, %v2710, 0.0
  %v2728 = vsel %vm197, %v2708, 0.0
  %v2729 = vsel %vm198, %v2706, 0.0
  %v2730 = vsel %vm191, %v2721, 0.0
  %v2731 = vsel %vm192, %v2719, 0.0
  %v2732 = vsel %vm193, %v2717, 0.0
  %v2733 = vsel %vm194, %v2715, 0.0
  %v2734 = vsel %vm195, %v2713, 0.0
  %v2735 = vsel %vm196, %v2711, 0.0
  %v2736 = vsel %vm197, %v2709, 0.0
  %v2737 = vsel %vm198, %v2707, 0.0
  %v2738 = vsel %vm215, %v2466, 0.0
  %v2739 = vsel %vm216, %v2467, 0.0
  %v2740 = vsel %vm217, %v2468, 0.0
  %v2741 = vsel %vm218, %v2469, 0.0
  %v2742 = vsel %vm219, %v2470, 0.0
  %v2743 = vsel %vm220, %v2471, 0.0
  %v2744 = vsel %vm221, %v2472, 0.0
  %v2745 = vsel %vm222, %v2473, 0.0
  %v2746 = vsel %vm215, %v2474, 0.0
  %v2747 = vsel %vm216, %v2475, 0.0
  %v2748 = vsel %vm217, %v2476, 0.0
  %v2749 = vsel %vm218, %v2477, 0.0
  %v2750 = vsel %vm219, %v2478, 0.0
  %v2751 = vsel %vm220, %v2479, 0.0
  %v2752 = vsel %vm221, %v2480, 0.0
  %v2753 = vsel %vm222, %v2481, 0.0
  %2754 = vrot.lane.b32.xlu0 %v2466, 127
  %v2755 = vpop.permute.xlu0 %2754
  %2756 = vrot.lane.b32.xlu0 %v2474, 127
  %v2757 = vpop.permute.xlu0 %2756
  %2758 = vrot.lane.b32.xlu0 %v2467, 127
  %v2759 = vpop.permute.xlu0 %2758
  %2760 = vrot.lane.b32.xlu0 %v2475, 127
  %v2761 = vpop.permute.xlu0 %2760
  %2762 = vrot.lane.b32.xlu0 %v2468, 127
  %v2763 = vpop.permute.xlu0 %2762
  %2764 = vrot.lane.b32.xlu0 %v2476, 127
  %v2765 = vpop.permute.xlu0 %2764
  %2766 = vrot.lane.b32.xlu0 %v2469, 127
  %v2767 = vpop.permute.xlu0 %2766
  %2768 = vrot.lane.b32.xlu0 %v2477, 127
  %v2769 = vpop.permute.xlu0 %2768
  %2770 = vrot.lane.b32.xlu0 %v2470, 127
  %v2771 = vpop.permute.xlu0 %2770
  %2772 = vrot.lane.b32.xlu0 %v2478, 127
  %v2773 = vpop.permute.xlu0 %2772
  %2774 = vrot.lane.b32.xlu0 %v2471, 127
  %v2775 = vpop.permute.xlu0 %2774
  %2776 = vrot.lane.b32.xlu0 %v2479, 127
  %v2777 = vpop.permute.xlu0 %2776
  %2778 = vrot.lane.b32.xlu0 %v2472, 127
  %v2779 = vpop.permute.xlu0 %2778
  %2780 = vrot.lane.b32.xlu0 %v2480, 127
  %v2781 = vpop.permute.xlu0 %2780
  %2782 = vrot.lane.b32.xlu0 %v2473, 127
  %v2783 = vpop.permute.xlu0 %2782
  %2784 = vrot.lane.b32.xlu0 %v2481, 127
  %v2785 = vpop.permute.xlu0 %2784
  %v2786 = vsel %vm699, %v2779, %v2783
  %v2787 = vsel %vm699, %v2781, %v2785
  %v2788 = vsel %vm699, %v2775, %v2779
  %v2789 = vsel %vm699, %v2777, %v2781
  %v2790 = vsel %vm699, %v2771, %v2775
  %v2791 = vsel %vm699, %v2773, %v2777
  %v2792 = vsel %vm699, %v2767, %v2771
  %v2793 = vsel %vm699, %v2769, %v2773
  %v2794 = vsel %vm699, %v2763, %v2767
  %v2795 = vsel %vm699, %v2765, %v2769
  %v2796 = vsel %vm699, %v2759, %v2763
  %v2797 = vsel %vm699, %v2761, %v2765
  %v2798 = vsel %vm699, %v2755, %v2759
  %v2799 = vsel %vm699, %v2757, %v2761
  %v2800 = vsel %vm699, %v2783, %v2755
  %v2801 = vsel %vm699, %v2785, %v2757
  %v2802 = vsel %vm255, %v2798, 0.0
  %v2803 = vsel %vm256, %v2796, 0.0
  %v2804 = vsel %vm257, %v2794, 0.0
  %v2805 = vsel %vm258, %v2792, 0.0
  %v2806 = vsel %vm259, %v2790, 0.0
  %v2807 = vsel %vm260, %v2788, 0.0
  %v2808 = vsel %vm261, %v2786, 0.0
  %v2809 = vsel %vm262, %v2800, 0.0
  %v2810 = vsel %vm255, %v2799, 0.0
  %v2811 = vsel %vm256, %v2797, 0.0
  %v2812 = vsel %vm257, %v2795, 0.0
  %v2813 = vsel %vm258, %v2793, 0.0
  %v2814 = vsel %vm259, %v2791, 0.0
  %v2815 = vsel %vm260, %v2789, 0.0
  %v2816 = vsel %vm261, %v2787, 0.0
  %v2817 = vsel %vm262, %v2801, 0.0
  %2818 = vrot.lane.b32.xlu0 %v2466, 97
  %v2819 = vpop.permute.xlu0 %2818
  %2820 = vrot.lane.b32.xlu0 %v2474, 97
  %v2821 = vpop.permute.xlu0 %2820
  %2822 = vrot.lane.b32.xlu0 %v2467, 97
  %v2823 = vpop.permute.xlu0 %2822
  %2824 = vrot.lane.b32.xlu0 %v2475, 97
  %v2825 = vpop.permute.xlu0 %2824
  %2826 = vrot.lane.b32.xlu0 %v2468, 97
  %v2827 = vpop.permute.xlu0 %2826
  %2828 = vrot.lane.b32.xlu0 %v2476, 97
  %v2829 = vpop.permute.xlu0 %2828
  %2830 = vrot.lane.b32.xlu0 %v2469, 97
  %v2831 = vpop.permute.xlu0 %2830
  %2832 = vrot.lane.b32.xlu0 %v2477, 97
  %v2833 = vpop.permute.xlu0 %2832
  %2834 = vrot.lane.b32.xlu0 %v2470, 97
  %v2835 = vpop.permute.xlu0 %2834
  %2836 = vrot.lane.b32.xlu0 %v2478, 97
  %v2837 = vpop.permute.xlu0 %2836
  %2838 = vrot.lane.b32.xlu0 %v2471, 97
  %v2839 = vpop.permute.xlu0 %2838
  %2840 = vrot.lane.b32.xlu0 %v2479, 97
  %v2841 = vpop.permute.xlu0 %2840
  %2842 = vrot.lane.b32.xlu0 %v2472, 97
  %v2843 = vpop.permute.xlu0 %2842
  %2844 = vrot.lane.b32.xlu0 %v2480, 97
  %v2845 = vpop.permute.xlu0 %2844
  %2846 = vrot.lane.b32.xlu0 %v2473, 97
  %v2847 = vpop.permute.xlu0 %2846
  %2848 = vrot.lane.b32.xlu0 %v2481, 97
  %v2849 = vpop.permute.xlu0 %2848
  %v2850 = vsel %vm764, %v2843, %v2847
  %v2851 = vsel %vm764, %v2845, %v2849
  %v2852 = vsel %vm764, %v2839, %v2843
  %v2853 = vsel %vm764, %v2841, %v2845
  %v2854 = vsel %vm764, %v2835, %v2839
  %v2855 = vsel %vm764, %v2837, %v2841
  %v2856 = vsel %vm764, %v2831, %v2835
  %v2857 = vsel %vm764, %v2833, %v2837
  %v2858 = vsel %vm764, %v2827, %v2831
  %v2859 = vsel %vm764, %v2829, %v2833
  %v2860 = vsel %vm764, %v2823, %v2827
  %v2861 = vsel %vm764, %v2825, %v2829
  %v2862 = vsel %vm764, %v2819, %v2823
  %v2863 = vsel %vm764, %v2821, %v2825
  %v2864 = vsel %vm764, %v2847, %v2819
  %v2865 = vsel %vm764, %v2849, %v2821
  %v2866 = vsel %vm295, %v2862, 0.0
  %v2867 = vsel %vm296, %v2860, 0.0
  %v2868 = vsel %vm297, %v2858, 0.0
  %v2869 = vsel %vm298, %v2856, 0.0
  %v2870 = vsel %vm299, %v2854, 0.0
  %v2871 = vsel %vm300, %v2852, 0.0
  %v2872 = vsel %vm301, %v2850, 0.0
  %v2873 = vsel %vm302, %v2864, 0.0
  %v2874 = vsel %vm295, %v2863, 0.0
  %v2875 = vsel %vm296, %v2861, 0.0
  %v2876 = vsel %vm297, %v2859, 0.0
  %v2877 = vsel %vm298, %v2857, 0.0
  %v2878 = vsel %vm299, %v2855, 0.0
  %v2879 = vsel %vm300, %v2853, 0.0
  %v2880 = vsel %vm301, %v2851, 0.0
  %v2881 = vsel %vm302, %v2865, 0.0
  %2882 = vrot.lane.b32.xlu0 %v2466, 96
  %v2883 = vpop.permute.xlu0 %2882
  %2884 = vrot.lane.b32.xlu0 %v2474, 96
  %v2885 = vpop.permute.xlu0 %2884
  %2886 = vrot.lane.b32.xlu0 %v2467, 96
  %v2887 = vpop.permute.xlu0 %2886
  %2888 = vrot.lane.b32.xlu0 %v2475, 96
  %v2889 = vpop.permute.xlu0 %2888
  %2890 = vrot.lane.b32.xlu0 %v2468, 96
  %v2891 = vpop.permute.xlu0 %2890
  %2892 = vrot.lane.b32.xlu0 %v2476, 96
  %v2893 = vpop.permute.xlu0 %2892
  %2894 = vrot.lane.b32.xlu0 %v2469, 96
  %v2895 = vpop.permute.xlu0 %2894
  %2896 = vrot.lane.b32.xlu0 %v2477, 96
  %v2897 = vpop.permute.xlu0 %2896
  %2898 = vrot.lane.b32.xlu0 %v2470, 96
  %v2899 = vpop.permute.xlu0 %2898
  %2900 = vrot.lane.b32.xlu0 %v2478, 96
  %v2901 = vpop.permute.xlu0 %2900
  %2902 = vrot.lane.b32.xlu0 %v2471, 96
  %v2903 = vpop.permute.xlu0 %2902
  %2904 = vrot.lane.b32.xlu0 %v2479, 96
  %v2905 = vpop.permute.xlu0 %2904
  %2906 = vrot.lane.b32.xlu0 %v2472, 96
  %v2907 = vpop.permute.xlu0 %2906
  %2908 = vrot.lane.b32.xlu0 %v2480, 96
  %v2909 = vpop.permute.xlu0 %2908
  %2910 = vrot.lane.b32.xlu0 %v2473, 96
  %v2911 = vpop.permute.xlu0 %2910
  %2912 = vrot.lane.b32.xlu0 %v2481, 96
  %v2913 = vpop.permute.xlu0 %2912
  %v2914 = vsel %vm829, %v2907, %v2911
  %v2915 = vsel %vm829, %v2909, %v2913
  %v2916 = vsel %vm829, %v2903, %v2907
  %v2917 = vsel %vm829, %v2905, %v2909
  %v2918 = vsel %vm829, %v2899, %v2903
  %v2919 = vsel %vm829, %v2901, %v2905
  %v2920 = vsel %vm829, %v2895, %v2899
  %v2921 = vsel %vm829, %v2897, %v2901
  %v2922 = vsel %vm829, %v2891, %v2895
  %v2923 = vsel %vm829, %v2893, %v2897
  %v2924 = vsel %vm829, %v2887, %v2891
  %v2925 = vsel %vm829, %v2889, %v2893
  %v2926 = vsel %vm829, %v2883, %v2887
  %v2927 = vsel %vm829, %v2885, %v2889
  %v2928 = vsel %vm829, %v2911, %v2883
  %v2929 = vsel %vm829, %v2913, %v2885
  %v2930 = vsel %vm327, %v2926, 0.0
  %v2931 = vsel %vm328, %v2924, 0.0
  %v2932 = vsel %vm329, %v2922, 0.0
  %v2933 = vsel %vm330, %v2920, 0.0
  %v2934 = vsel %vm331, %v2918, 0.0
  %v2935 = vsel %vm332, %v2916, 0.0
  %v2936 = vsel %vm333, %v2914, 0.0
  %v2937 = vsel %vm334, %v2928, 0.0
  %v2938 = vsel %vm327, %v2927, 0.0
  %v2939 = vsel %vm328, %v2925, 0.0
  %v2940 = vsel %vm329, %v2923, 0.0
  %v2941 = vsel %vm330, %v2921, 0.0
  %v2942 = vsel %vm331, %v2919, 0.0
  %v2943 = vsel %vm332, %v2917, 0.0
  %v2944 = vsel %vm333, %v2915, 0.0
  %v2945 = vsel %vm334, %v2929, 0.0
  %2946 = vrot.lane.b32.xlu0 %v2466, 95
  %v2947 = vpop.permute.xlu0 %2946
  %2948 = vrot.lane.b32.xlu0 %v2474, 95
  %v2949 = vpop.permute.xlu0 %2948
  %2950 = vrot.lane.b32.xlu0 %v2467, 95
  %v2951 = vpop.permute.xlu0 %2950
  %2952 = vrot.lane.b32.xlu0 %v2475, 95
  %v2953 = vpop.permute.xlu0 %2952
  %2954 = vrot.lane.b32.xlu0 %v2468, 95
  %v2955 = vpop.permute.xlu0 %2954
  %2956 = vrot.lane.b32.xlu0 %v2476, 95
  %v2957 = vpop.permute.xlu0 %2956
  %2958 = vrot.lane.b32.xlu0 %v2469, 95
  %v2959 = vpop.permute.xlu0 %2958
  %2960 = vrot.lane.b32.xlu0 %v2477, 95
  %v2961 = vpop.permute.xlu0 %2960
  %2962 = vrot.lane.b32.xlu0 %v2470, 95
  %v2963 = vpop.permute.xlu0 %2962
  %2964 = vrot.lane.b32.xlu0 %v2478, 95
  %v2965 = vpop.permute.xlu0 %2964
  %2966 = vrot.lane.b32.xlu0 %v2471, 95
  %v2967 = vpop.permute.xlu0 %2966
  %2968 = vrot.lane.b32.xlu0 %v2479, 95
  %v2969 = vpop.permute.xlu0 %2968
  %2970 = vrot.lane.b32.xlu0 %v2472, 95
  %v2971 = vpop.permute.xlu0 %2970
  %2972 = vrot.lane.b32.xlu0 %v2480, 95
  %v2973 = vpop.permute.xlu0 %2972
  %2974 = vrot.lane.b32.xlu0 %v2473, 95
  %v2975 = vpop.permute.xlu0 %2974
  %2976 = vrot.lane.b32.xlu0 %v2481, 95
  %v2977 = vpop.permute.xlu0 %2976
  %v2978 = vsel %vm894, %v2971, %v2975
  %v2979 = vsel %vm894, %v2973, %v2977
  %v2980 = vsel %vm894, %v2967, %v2971
  %v2981 = vsel %vm894, %v2969, %v2973
  %v2982 = vsel %vm894, %v2963, %v2967
  %v2983 = vsel %vm894, %v2965, %v2969
  %v2984 = vsel %vm894, %v2959, %v2963
  %v2985 = vsel %vm894, %v2961, %v2965
  %v2986 = vsel %vm894, %v2955, %v2959
  %v2987 = vsel %vm894, %v2957, %v2961
  %v2988 = vsel %vm894, %v2951, %v2955
  %v2989 = vsel %vm894, %v2953, %v2957
  %v2990 = vsel %vm894, %v2947, %v2951
  %v2991 = vsel %vm894, %v2949, %v2953
  %v2992 = vsel %vm894, %v2975, %v2947
  %v2993 = vsel %vm894, %v2977, %v2949
  %v2994 = vsel %vm367, %v2990, 0.0
  %v2995 = vsel %vm368, %v2988, 0.0
  %v2996 = vsel %vm369, %v2986, 0.0
  %v2997 = vsel %vm370, %v2984, 0.0
  %v2998 = vsel %vm371, %v2982, 0.0
  %v2999 = vsel %vm372, %v2980, 0.0
  %v3000 = vsel %vm373, %v2978, 0.0
  %v3001 = vsel %vm374, %v2992, 0.0
  %v3002 = vsel %vm367, %v2991, 0.0
  %v3003 = vsel %vm368, %v2989, 0.0
  %v3004 = vsel %vm369, %v2987, 0.0
  %v3005 = vsel %vm370, %v2985, 0.0
  %v3006 = vsel %vm371, %v2983, 0.0
  %v3007 = vsel %vm372, %v2981, 0.0
  %v3008 = vsel %vm373, %v2979, 0.0
  %v3009 = vsel %vm374, %v2993, 0.0
  %s3010 = scalar_lea.vmem %s1, 64
  %v3011 = vld [vmem:[%s3010] sm:$0xff]
  %v3012 = vld [vmem:[%s3010 + $0x8] sm:$0xff]
  %v3013 = vld [vmem:[%s3010 + $0x10] sm:$0xff]
  %v3014 = vld [vmem:[%s3010 + $0x18] sm:$0xff]
  %s3015 = scalar_lea.vmem %s2, 32
  %v3016 = vld [vmem:[%s3015] sm:$0xff]
  %v3017 = vld [vmem:[%s3015 + $0x8] sm:$0xff]
  %3019 = vset.pattern.permute.xlu0 0
  %3020 = vperm.xlu0 %3019, %v3016
  %v3021 = vpop.permute.xlu0 %3020
  %3024 = vset.pattern.permute.xlu0 0
  %3025 = vperm.xlu0 %3024, %v3017
  %v3026 = vpop.permute.xlu0 %3025
  %v3029 = vsel %vm943, %v3012, 0
  %v3032 = vsel %vm943, %v3014, 0
  %3034 = vmatprep.subr.mxu0 %v2531
  %3035 = vmatpush1.msra.mxu0 %v2530
  %3036 = vmatprep.subr.mxu0 %v2539
  %3037 = vmatpush1.msra.mxu0 %v2538
  %3038 = vmatprep.subr.mxu0 %v2595
  %3039 = vmatpush1.msra.mxu0 %v2594
  %3040 = vmatprep.subr.mxu0 %v2603
  %3041 = vmatpush1.msra.mxu0 %v2602
  %3042 = vmatprep.subr.mxu0 %v2659
  %3043 = vmatpush1.msra.mxu0 %v2658
  %3044 = vmatprep.subr.mxu0 %v2667
  %3045 = vmatpush1.msra.mxu0 %v2666
  %3046 = vmatprep.subr.mxu0 %v2723
  %3047 = vmatpush1.msra.mxu0 %v2722
  %3048 = vmatprep.subr.mxu0 %v2731
  %3049 = vmatpush1.msra.mxu0 %v2730
  %3050 = vmatprep.subr.mxu0 %v2739
  %3051 = vmatpush1.msra.mxu0 %v2738
  %3052 = vmatprep.subr.mxu0 %v2747
  %3053 = vmatpush1.msra.mxu0 %v2746
  %3054 = vmatprep.subr.mxu0 %v2803
  %3055 = vmatpush1.msra.mxu0 %v2802
  %3056 = vmatprep.subr.mxu0 %v2811
  %3057 = vmatpush1.msra.mxu0 %v2810
  %3058 = vmatprep.subr.mxu0 %v2867
  %3059 = vmatpush1.msra.mxu0 %v2866
  %3060 = vmatprep.subr.mxu0 %v2875
  %3061 = vmatpush1.msra.mxu0 %v2874
  %3062 = vmatprep.subr.mxu0 %v2931
  %3063 = vmatpush1.msra.mxu0 %v2930
  %3064 = vmatprep.subr.mxu0 %v2939
  %3065 = vmatpush1.msra.mxu0 %v2938
  %3066 = vmatprep.subr.mxu0 %v2995
  %3067 = vmatpush1.msra.mxu0 %v2994
  %3068 = vmatprep.subr.mxu0 %v3003
  %3069 = vmatpush1.msra.mxu0 %v3002
  %3070 = vmatprep.subr.mxu0 0.0
  %3071 = vmatpush1.msra.mxu0 0.0
  %3072 = vmatprep.subr.mxu0 0.0
  %3073 = vmatpush1.msra.mxu0 0.0
  %3074 = vmatprep.subr.mxu0 0.0
  %3075 = vmatpush1.msra.mxu0 0.0
  %3076 = vmatprep.subr.mxu0 0.0
  %3077 = vmatpush1.msra.mxu0 0.0
  %3078 = vmatprep.subr.mxu0 0.0
  %3079 = vmatpush1.msra.mxu0 0.0
  %3080 = vmatprep.subr.mxu0 0.0
  %3081 = vmatpush1.msra.mxu0 0.0
  %3082 = vmatprep.subr.mxu0 0.0
  %3083 = vmatpush1.msra.mxu0 0.0
  %3084 = vmatprep.subr.mxu0 0.0
  %3085 = vmatpush1.msra.mxu0 0.0
  %3086 = vmatprep.subr.mxu0 0.0
  %3087 = vmatpush1.msra.mxu0 0.0
  %3088 = vmatprep.subr.mxu0 0.0
  %3089 = vmatpush1.msra.mxu0 0.0
  %3090 = vmatprep.subr.mxu0 0.0
  %3091 = vmatpush1.msra.mxu0 0.0
  %3092 = vmatprep.subr.mxu0 0.0
  %3093 = vmatpush1.msra.mxu0 0.0
  %3094 = vmatprep.subr.mxu0 0.0
  %3095 = vmatpush1.msra.mxu0 0.0
  %3096 = vmatprep.subr.mxu0 0.0
  %3097 = vmatpush1.msra.mxu0 0.0
  %3098 = vmatprep.mubr.f32.mxu0 %v3029
  %3099 = vmatmul.mubr.f32.gmra.mrb[0].mxu0 %v3011
  %v3100 = vpop.f32.mrb[0].mxu0
  %v3101 = vadd.f32 %v3021, %v3100
  %v3102 = vpop.f32.mrb[0].mxu0
  %v3103 = vadd.f32 %v3021, %v3102
  %3104 = vmatprep.mubr.f32.mxu0 %v3032
  %3105 = vmatmul.mubr.f32.gmra.mrb[0].mxu0 %v3013
  %v3106 = vpop.f32.mrb[0].mxu0
  %v3107 = vadd.f32 %v3026, %v3106
  %v3108 = vpop.f32.mrb[0].mxu0
  %v3109 = vadd.f32 %v3026, %v3108
  %3110 = vdwg.mxu0
  %3111 = vmatprep.subr.mxu0 %v2533
  %3112 = vmatpush1.msra.mxu0 %v2532
  %3113 = vmatprep.subr.mxu0 %v2541
  %3114 = vmatpush1.msra.mxu0 %v2540
  %3115 = vmatprep.subr.mxu0 %v2597
  %3116 = vmatpush1.msra.mxu0 %v2596
  %3117 = vmatprep.subr.mxu0 %v2605
  %3118 = vmatpush1.msra.mxu0 %v2604
  %3119 = vmatprep.subr.mxu0 %v2661
  %3120 = vmatpush1.msra.mxu0 %v2660
  %3121 = vmatprep.subr.mxu0 %v2669
  %3122 = vmatpush1.msra.mxu0 %v2668
  %3123 = vmatprep.subr.mxu0 %v2725
  %3124 = vmatpush1.msra.mxu0 %v2724
  %3125 = vmatprep.subr.mxu0 %v2733
  %3126 = vmatpush1.msra.mxu0 %v2732
  %3127 = vmatprep.subr.mxu0 %v2741
  %3128 = vmatpush1.msra.mxu0 %v2740
  %3129 = vmatprep.subr.mxu0 %v2749
  %3130 = vmatpush1.msra.mxu0 %v2748
  %3131 = vmatprep.subr.mxu0 %v2805
  %3132 = vmatpush1.msra.mxu0 %v2804
  %3133 = vmatprep.subr.mxu0 %v2813
  %3134 = vmatpush1.msra.mxu0 %v2812
  %3135 = vmatprep.subr.mxu0 %v2869
  %3136 = vmatpush1.msra.mxu0 %v2868
  %3137 = vmatprep.subr.mxu0 %v2877
  %3138 = vmatpush1.msra.mxu0 %v2876
  %3139 = vmatprep.subr.mxu0 %v2933
  %3140 = vmatpush1.msra.mxu0 %v2932
  %3141 = vmatprep.subr.mxu0 %v2941
  %3142 = vmatpush1.msra.mxu0 %v2940
  %3143 = vmatprep.subr.mxu0 %v2997
  %3144 = vmatpush1.msra.mxu0 %v2996
  %3145 = vmatprep.subr.mxu0 %v3005
  %3146 = vmatpush1.msra.mxu0 %v3004
  %3147 = vmatprep.subr.mxu0 0.0
  %3148 = vmatpush1.msra.mxu0 0.0
  %3149 = vmatprep.subr.mxu0 0.0
  %3150 = vmatpush1.msra.mxu0 0.0
  %3151 = vmatprep.subr.mxu0 0.0
  %3152 = vmatpush1.msra.mxu0 0.0
  %3153 = vmatprep.subr.mxu0 0.0
  %3154 = vmatpush1.msra.mxu0 0.0
  %3155 = vmatprep.subr.mxu0 0.0
  %3156 = vmatpush1.msra.mxu0 0.0
  %3157 = vmatprep.subr.mxu0 0.0
  %3158 = vmatpush1.msra.mxu0 0.0
  %3159 = vmatprep.subr.mxu0 0.0
  %3160 = vmatpush1.msra.mxu0 0.0
  %3161 = vmatprep.subr.mxu0 0.0
  %3162 = vmatpush1.msra.mxu0 0.0
  %3163 = vmatprep.subr.mxu0 0.0
  %3164 = vmatpush1.msra.mxu0 0.0
  %3165 = vmatprep.subr.mxu0 0.0
  %3166 = vmatpush1.msra.mxu0 0.0
  %3167 = vmatprep.subr.mxu0 0.0
  %3168 = vmatpush1.msra.mxu0 0.0
  %3169 = vmatprep.subr.mxu0 0.0
  %3170 = vmatpush1.msra.mxu0 0.0
  %3171 = vmatprep.subr.mxu0 0.0
  %3172 = vmatpush1.msra.mxu0 0.0
  %3173 = vmatprep.subr.mxu0 0.0
  %3174 = vmatpush1.msra.mxu0 0.0
  %3175 = vmatprep.mubr.f32.mxu0 %v3029
  %3176 = vmatmul.mubr.f32.gmra.mrb[0].mxu0 %v3011
  %v3177 = vpop.f32.mrb[0].mxu0
  %v3178 = vadd.f32 %v3021, %v3177
  %v3179 = vpop.f32.mrb[0].mxu0
  %v3180 = vadd.f32 %v3021, %v3179
  %3181 = vmatprep.mubr.f32.mxu0 %v3032
  %3182 = vmatmul.mubr.f32.gmra.mrb[0].mxu0 %v3013
  %v3183 = vpop.f32.mrb[0].mxu0
  %v3184 = vadd.f32 %v3026, %v3183
  %v3185 = vpop.f32.mrb[0].mxu0
  %v3186 = vadd.f32 %v3026, %v3185
  %3187 = vdwg.mxu0
  %3188 = vmatprep.subr.mxu0 %v2535
  %3189 = vmatpush1.msra.mxu0 %v2534
  %3190 = vmatprep.subr.mxu0 %v2543
  %3191 = vmatpush1.msra.mxu0 %v2542
  %3192 = vmatprep.subr.mxu0 %v2599
  %3193 = vmatpush1.msra.mxu0 %v2598
  %3194 = vmatprep.subr.mxu0 %v2607
  %3195 = vmatpush1.msra.mxu0 %v2606
  %3196 = vmatprep.subr.mxu0 %v2663
  %3197 = vmatpush1.msra.mxu0 %v2662
  %3198 = vmatprep.subr.mxu0 %v2671
  %3199 = vmatpush1.msra.mxu0 %v2670
  %3200 = vmatprep.subr.mxu0 %v2727
  %3201 = vmatpush1.msra.mxu0 %v2726
  %3202 = vmatprep.subr.mxu0 %v2735
  %3203 = vmatpush1.msra.mxu0 %v2734
  %3204 = vmatprep.subr.mxu0 %v2743
  %3205 = vmatpush1.msra.mxu0 %v2742
  %3206 = vmatprep.subr.mxu0 %v2751
  %3207 = vmatpush1.msra.mxu0 %v2750
  %3208 = vmatprep.subr.mxu0 %v2807
  %3209 = vmatpush1.msra.mxu0 %v2806
  %3210 = vmatprep.subr.mxu0 %v2815
  %3211 = vmatpush1.msra.mxu0 %v2814
  %3212 = vmatprep.subr.mxu0 %v2871
  %3213 = vmatpush1.msra.mxu0 %v2870
  %3214 = vmatprep.subr.mxu0 %v2879
  %3215 = vmatpush1.msra.mxu0 %v2878
  %3216 = vmatprep.subr.mxu0 %v2935
  %3217 = vmatpush1.msra.mxu0 %v2934
  %3218 = vmatprep.subr.mxu0 %v2943
  %3219 = vmatpush1.msra.mxu0 %v2942
  %3220 = vmatprep.subr.mxu0 %v2999
  %3221 = vmatpush1.msra.mxu0 %v2998
  %3222 = vmatprep.subr.mxu0 %v3007
  %3223 = vmatpush1.msra.mxu0 %v3006
  %3224 = vmatprep.subr.mxu0 0.0
  %3225 = vmatpush1.msra.mxu0 0.0
  %3226 = vmatprep.subr.mxu0 0.0
  %3227 = vmatpush1.msra.mxu0 0.0
  %3228 = vmatprep.subr.mxu0 0.0
  %3229 = vmatpush1.msra.mxu0 0.0
  %3230 = vmatprep.subr.mxu0 0.0
  %3231 = vmatpush1.msra.mxu0 0.0
  %3232 = vmatprep.subr.mxu0 0.0
  %3233 = vmatpush1.msra.mxu0 0.0
  %3234 = vmatprep.subr.mxu0 0.0
  %3235 = vmatpush1.msra.mxu0 0.0
  %3236 = vmatprep.subr.mxu0 0.0
  %3237 = vmatpush1.msra.mxu0 0.0
  %3238 = vmatprep.subr.mxu0 0.0
  %3239 = vmatpush1.msra.mxu0 0.0
  %3240 = vmatprep.subr.mxu0 0.0
  %3241 = vmatpush1.msra.mxu0 0.0
  %3242 = vmatprep.subr.mxu0 0.0
  %3243 = vmatpush1.msra.mxu0 0.0
  %3244 = vmatprep.subr.mxu0 0.0
  %3245 = vmatpush1.msra.mxu0 0.0
  %3246 = vmatprep.subr.mxu0 0.0
  %3247 = vmatpush1.msra.mxu0 0.0
  %3248 = vmatprep.subr.mxu0 0.0
  %3249 = vmatpush1.msra.mxu0 0.0
  %3250 = vmatprep.subr.mxu0 0.0
  %3251 = vmatpush1.msra.mxu0 0.0
  %3252 = vmatprep.mubr.f32.mxu0 %v3029
  %3253 = vmatmul.mubr.f32.gmra.mrb[0].mxu0 %v3011
  %v3254 = vpop.f32.mrb[0].mxu0
  %v3255 = vadd.f32 %v3021, %v3254
  %v3256 = vpop.f32.mrb[0].mxu0
  %v3257 = vadd.f32 %v3021, %v3256
  %3258 = vmatprep.mubr.f32.mxu0 %v3032
  %3259 = vmatmul.mubr.f32.gmra.mrb[0].mxu0 %v3013
  %v3260 = vpop.f32.mrb[0].mxu0
  %v3261 = vadd.f32 %v3026, %v3260
  %v3262 = vpop.f32.mrb[0].mxu0
  %v3263 = vadd.f32 %v3026, %v3262
  %3264 = vdwg.mxu0
  %3265 = vmatprep.subr.mxu0 %v2537
  %3266 = vmatpush1.msra.mxu0 %v2536
  %3267 = vmatprep.subr.mxu0 %v2545
  %3268 = vmatpush1.msra.mxu0 %v2544
  %3269 = vmatprep.subr.mxu0 %v2601
  %3270 = vmatpush1.msra.mxu0 %v2600
  %3271 = vmatprep.subr.mxu0 %v2609
  %3272 = vmatpush1.msra.mxu0 %v2608
  %3273 = vmatprep.subr.mxu0 %v2665
  %3274 = vmatpush1.msra.mxu0 %v2664
  %3275 = vmatprep.subr.mxu0 %v2673
  %3276 = vmatpush1.msra.mxu0 %v2672
  %3277 = vmatprep.subr.mxu0 %v2729
  %3278 = vmatpush1.msra.mxu0 %v2728
  %3279 = vmatprep.subr.mxu0 %v2737
  %3280 = vmatpush1.msra.mxu0 %v2736
  %3281 = vmatprep.subr.mxu0 %v2745
  %3282 = vmatpush1.msra.mxu0 %v2744
  %3283 = vmatprep.subr.mxu0 %v2753
  %3284 = vmatpush1.msra.mxu0 %v2752
  %3285 = vmatprep.subr.mxu0 %v2809
  %3286 = vmatpush1.msra.mxu0 %v2808
  %3287 = vmatprep.subr.mxu0 %v2817
  %3288 = vmatpush1.msra.mxu0 %v2816
  %3289 = vmatprep.subr.mxu0 %v2873
  %3290 = vmatpush1.msra.mxu0 %v2872
  %3291 = vmatprep.subr.mxu0 %v2881
  %3292 = vmatpush1.msra.mxu0 %v2880
  %3293 = vmatprep.subr.mxu0 %v2937
  %3294 = vmatpush1.msra.mxu0 %v2936
  %3295 = vmatprep.subr.mxu0 %v2945
  %3296 = vmatpush1.msra.mxu0 %v2944
  %3297 = vmatprep.subr.mxu0 %v3001
  %3298 = vmatpush1.msra.mxu0 %v3000
  %3299 = vmatprep.subr.mxu0 %v3009
  %3300 = vmatpush1.msra.mxu0 %v3008
  %3301 = vmatprep.subr.mxu0 0.0
  %3302 = vmatpush1.msra.mxu0 0.0
  %3303 = vmatprep.subr.mxu0 0.0
  %3304 = vmatpush1.msra.mxu0 0.0
  %3305 = vmatprep.subr.mxu0 0.0
  %3306 = vmatpush1.msra.mxu0 0.0
  %3307 = vmatprep.subr.mxu0 0.0
  %3308 = vmatpush1.msra.mxu0 0.0
  %3309 = vmatprep.subr.mxu0 0.0
  %3310 = vmatpush1.msra.mxu0 0.0
  %3311 = vmatprep.subr.mxu0 0.0
  %3312 = vmatpush1.msra.mxu0 0.0
  %3313 = vmatprep.subr.mxu0 0.0
  %3314 = vmatpush1.msra.mxu0 0.0
  %3315 = vmatprep.subr.mxu0 0.0
  %3316 = vmatpush1.msra.mxu0 0.0
  %3317 = vmatprep.subr.mxu0 0.0
  %3318 = vmatpush1.msra.mxu0 0.0
  %3319 = vmatprep.subr.mxu0 0.0
  %3320 = vmatpush1.msra.mxu0 0.0
  %3321 = vmatprep.subr.mxu0 0.0
  %3322 = vmatpush1.msra.mxu0 0.0
  %3323 = vmatprep.subr.mxu0 0.0
  %3324 = vmatpush1.msra.mxu0 0.0
  %3325 = vmatprep.subr.mxu0 0.0
  %3326 = vmatpush1.msra.mxu0 0.0
  %3327 = vmatprep.subr.mxu0 0.0
  %3328 = vmatpush1.msra.mxu0 0.0
  %3329 = vmatprep.mubr.f32.mxu0 %v3029
  %3330 = vmatmul.mubr.f32.gmra.mrb[0].mxu0 %v3011
  %v3331 = vpop.f32.mrb[0].mxu0
  %v3332 = vadd.f32 %v3021, %v3331
  %v3333 = vpop.f32.mrb[0].mxu0
  %v3334 = vadd.f32 %v3021, %v3333
  %3335 = vmatprep.mubr.f32.mxu0 %v3032
  %3336 = vmatmul.mubr.f32.gmra.mrb[0].mxu0 %v3013
  %v3337 = vpop.f32.mrb[0].mxu0
  %v3338 = vadd.f32 %v3026, %v3337
  %v3339 = vpop.f32.mrb[0].mxu0
  %v3340 = vadd.f32 %v3026, %v3339
  %3341 = vdwg.mxu0
  %s3342 = scalar_lea.vmem %s1, 192
  %v3343 = vld [vmem:[%s3342] sm:$0xff]
  %v3344 = vld [vmem:[%s3342 + $0x8] sm:$0xff]
  %v3345 = vld [vmem:[%s3342 + $0x10] sm:$0xff]
  %v3346 = vld [vmem:[%s3342 + $0x18] sm:$0xff]
  %s3347 = scalar_lea.vmem %s2, 96
  %v3348 = vld [vmem:[%s3347] sm:$0xff]
  %v3349 = vld [vmem:[%s3347 + $0x8] sm:$0xff]
  %3351 = vset.pattern.permute.xlu0 0
  %3352 = vperm.xlu0 %3351, %v3348
  %v3353 = vpop.permute.xlu0 %3352
  %3356 = vset.pattern.permute.xlu0 0
  %3357 = vperm.xlu0 %3356, %v3349
  %v3358 = vpop.permute.xlu0 %3357
  %v3361 = vsel %vm943, %v3344, 0
  %v3364 = vsel %vm943, %v3346, 0
  %3366 = vmatprep.subr.mxu0 %v2531
  %3367 = vmatpush1.msra.mxu0 %v2530
  %3368 = vmatprep.subr.mxu0 %v2539
  %3369 = vmatpush1.msra.mxu0 %v2538
  %3370 = vmatprep.subr.mxu0 %v2595
  %3371 = vmatpush1.msra.mxu0 %v2594
  %3372 = vmatprep.subr.mxu0 %v2603
  %3373 = vmatpush1.msra.mxu0 %v2602
  %3374 = vmatprep.subr.mxu0 %v2659
  %3375 = vmatpush1.msra.mxu0 %v2658
  %3376 = vmatprep.subr.mxu0 %v2667
  %3377 = vmatpush1.msra.mxu0 %v2666
  %3378 = vmatprep.subr.mxu0 %v2723
  %3379 = vmatpush1.msra.mxu0 %v2722
  %3380 = vmatprep.subr.mxu0 %v2731
  %3381 = vmatpush1.msra.mxu0 %v2730
  %3382 = vmatprep.subr.mxu0 %v2739
  %3383 = vmatpush1.msra.mxu0 %v2738
  %3384 = vmatprep.subr.mxu0 %v2747
  %3385 = vmatpush1.msra.mxu0 %v2746
  %3386 = vmatprep.subr.mxu0 %v2803
  %3387 = vmatpush1.msra.mxu0 %v2802
  %3388 = vmatprep.subr.mxu0 %v2811
  %3389 = vmatpush1.msra.mxu0 %v2810
  %3390 = vmatprep.subr.mxu0 %v2867
  %3391 = vmatpush1.msra.mxu0 %v2866
  %3392 = vmatprep.subr.mxu0 %v2875
  %3393 = vmatpush1.msra.mxu0 %v2874
  %3394 = vmatprep.subr.mxu0 %v2931
  %3395 = vmatpush1.msra.mxu0 %v2930
  %3396 = vmatprep.subr.mxu0 %v2939
  %3397 = vmatpush1.msra.mxu0 %v2938
  %3398 = vmatprep.subr.mxu0 %v2995
  %3399 = vmatpush1.msra.mxu0 %v2994
  %3400 = vmatprep.subr.mxu0 %v3003
  %3401 = vmatpush1.msra.mxu0 %v3002
  %3402 = vmatprep.subr.mxu0 0.0
  %3403 = vmatpush1.msra.mxu0 0.0
  %3404 = vmatprep.subr.mxu0 0.0
  %3405 = vmatpush1.msra.mxu0 0.0
  %3406 = vmatprep.subr.mxu0 0.0
  %3407 = vmatpush1.msra.mxu0 0.0
  %3408 = vmatprep.subr.mxu0 0.0
  %3409 = vmatpush1.msra.mxu0 0.0
  %3410 = vmatprep.subr.mxu0 0.0
  %3411 = vmatpush1.msra.mxu0 0.0
  %3412 = vmatprep.subr.mxu0 0.0
  %3413 = vmatpush1.msra.mxu0 0.0
  %3414 = vmatprep.subr.mxu0 0.0
  %3415 = vmatpush1.msra.mxu0 0.0
  %3416 = vmatprep.subr.mxu0 0.0
  %3417 = vmatpush1.msra.mxu0 0.0
  %3418 = vmatprep.subr.mxu0 0.0
  %3419 = vmatpush1.msra.mxu0 0.0
  %3420 = vmatprep.subr.mxu0 0.0
  %3421 = vmatpush1.msra.mxu0 0.0
  %3422 = vmatprep.subr.mxu0 0.0
  %3423 = vmatpush1.msra.mxu0 0.0
  %3424 = vmatprep.subr.mxu0 0.0
  %3425 = vmatpush1.msra.mxu0 0.0
  %3426 = vmatprep.subr.mxu0 0.0
  %3427 = vmatpush1.msra.mxu0 0.0
  %3428 = vmatprep.subr.mxu0 0.0
  %3429 = vmatpush1.msra.mxu0 0.0
  %3430 = vmatprep.mubr.f32.mxu0 %v3361
  %3431 = vmatmul.mubr.f32.gmra.mrb[0].mxu0 %v3343
  %v3432 = vpop.f32.mrb[0].mxu0
  %v3433 = vadd.f32 %v3353, %v3432
  %v3434 = vpop.f32.mrb[0].mxu0
  %v3435 = vadd.f32 %v3353, %v3434
  %3436 = vmatprep.mubr.f32.mxu0 %v3364
  %3437 = vmatmul.mubr.f32.gmra.mrb[0].mxu0 %v3345
  %v3438 = vpop.f32.mrb[0].mxu0
  %v3439 = vadd.f32 %v3358, %v3438
  %v3440 = vpop.f32.mrb[0].mxu0
  %v3441 = vadd.f32 %v3358, %v3440
  %3442 = vdwg.mxu0
  %3443 = vmatprep.subr.mxu0 %v2533
  %3444 = vmatpush1.msra.mxu0 %v2532
  %3445 = vmatprep.subr.mxu0 %v2541
  %3446 = vmatpush1.msra.mxu0 %v2540
  %3447 = vmatprep.subr.mxu0 %v2597
  %3448 = vmatpush1.msra.mxu0 %v2596
  %3449 = vmatprep.subr.mxu0 %v2605
  %3450 = vmatpush1.msra.mxu0 %v2604
  %3451 = vmatprep.subr.mxu0 %v2661
  %3452 = vmatpush1.msra.mxu0 %v2660
  %3453 = vmatprep.subr.mxu0 %v2669
  %3454 = vmatpush1.msra.mxu0 %v2668
  %3455 = vmatprep.subr.mxu0 %v2725
  %3456 = vmatpush1.msra.mxu0 %v2724
  %3457 = vmatprep.subr.mxu0 %v2733
  %3458 = vmatpush1.msra.mxu0 %v2732
  %3459 = vmatprep.subr.mxu0 %v2741
  %3460 = vmatpush1.msra.mxu0 %v2740
  %3461 = vmatprep.subr.mxu0 %v2749
  %3462 = vmatpush1.msra.mxu0 %v2748
  %3463 = vmatprep.subr.mxu0 %v2805
  %3464 = vmatpush1.msra.mxu0 %v2804
  %3465 = vmatprep.subr.mxu0 %v2813
  %3466 = vmatpush1.msra.mxu0 %v2812
  %3467 = vmatprep.subr.mxu0 %v2869
  %3468 = vmatpush1.msra.mxu0 %v2868
  %3469 = vmatprep.subr.mxu0 %v2877
  %3470 = vmatpush1.msra.mxu0 %v2876
  %3471 = vmatprep.subr.mxu0 %v2933
  %3472 = vmatpush1.msra.mxu0 %v2932
  %3473 = vmatprep.subr.mxu0 %v2941
  %3474 = vmatpush1.msra.mxu0 %v2940
  %3475 = vmatprep.subr.mxu0 %v2997
  %3476 = vmatpush1.msra.mxu0 %v2996
  %3477 = vmatprep.subr.mxu0 %v3005
  %3478 = vmatpush1.msra.mxu0 %v3004
  %3479 = vmatprep.subr.mxu0 0.0
  %3480 = vmatpush1.msra.mxu0 0.0
  %3481 = vmatprep.subr.mxu0 0.0
  %3482 = vmatpush1.msra.mxu0 0.0
  %3483 = vmatprep.subr.mxu0 0.0
  %3484 = vmatpush1.msra.mxu0 0.0
  %3485 = vmatprep.subr.mxu0 0.0
  %3486 = vmatpush1.msra.mxu0 0.0
  %3487 = vmatprep.subr.mxu0 0.0
  %3488 = vmatpush1.msra.mxu0 0.0
  %3489 = vmatprep.subr.mxu0 0.0
  %3490 = vmatpush1.msra.mxu0 0.0
  %3491 = vmatprep.subr.mxu0 0.0
  %3492 = vmatpush1.msra.mxu0 0.0
  %3493 = vmatprep.subr.mxu0 0.0
  %3494 = vmatpush1.msra.mxu0 0.0
  %3495 = vmatprep.subr.mxu0 0.0
  %3496 = vmatpush1.msra.mxu0 0.0
  %3497 = vmatprep.subr.mxu0 0.0
  %3498 = vmatpush1.msra.mxu0 0.0
  %3499 = vmatprep.subr.mxu0 0.0
  %3500 = vmatpush1.msra.mxu0 0.0
  %3501 = vmatprep.subr.mxu0 0.0
  %3502 = vmatpush1.msra.mxu0 0.0
  %3503 = vmatprep.subr.mxu0 0.0
  %3504 = vmatpush1.msra.mxu0 0.0
  %3505 = vmatprep.subr.mxu0 0.0
  %3506 = vmatpush1.msra.mxu0 0.0
  %3507 = vmatprep.mubr.f32.mxu0 %v3361
  %3508 = vmatmul.mubr.f32.gmra.mrb[0].mxu0 %v3343
  %v3509 = vpop.f32.mrb[0].mxu0
  %v3510 = vadd.f32 %v3353, %v3509
  %v3511 = vpop.f32.mrb[0].mxu0
  %v3512 = vadd.f32 %v3353, %v3511
  %3513 = vmatprep.mubr.f32.mxu0 %v3364
  %3514 = vmatmul.mubr.f32.gmra.mrb[0].mxu0 %v3345
  %v3515 = vpop.f32.mrb[0].mxu0
  %v3516 = vadd.f32 %v3358, %v3515
  %v3517 = vpop.f32.mrb[0].mxu0
  %v3518 = vadd.f32 %v3358, %v3517
  %3519 = vdwg.mxu0
  %3520 = vmatprep.subr.mxu0 %v2535
  %3521 = vmatpush1.msra.mxu0 %v2534
  %3522 = vmatprep.subr.mxu0 %v2543
  %3523 = vmatpush1.msra.mxu0 %v2542
  %3524 = vmatprep.subr.mxu0 %v2599
  %3525 = vmatpush1.msra.mxu0 %v2598
  %3526 = vmatprep.subr.mxu0 %v2607
  %3527 = vmatpush1.msra.mxu0 %v2606
  %3528 = vmatprep.subr.mxu0 %v2663
  %3529 = vmatpush1.msra.mxu0 %v2662
  %3530 = vmatprep.subr.mxu0 %v2671
  %3531 = vmatpush1.msra.mxu0 %v2670
  %3532 = vmatprep.subr.mxu0 %v2727
  %3533 = vmatpush1.msra.mxu0 %v2726
  %3534 = vmatprep.subr.mxu0 %v2735
  %3535 = vmatpush1.msra.mxu0 %v2734
  %3536 = vmatprep.subr.mxu0 %v2743
  %3537 = vmatpush1.msra.mxu0 %v2742
  %3538 = vmatprep.subr.mxu0 %v2751
  %3539 = vmatpush1.msra.mxu0 %v2750
  %3540 = vmatprep.subr.mxu0 %v2807
  %3541 = vmatpush1.msra.mxu0 %v2806
  %3542 = vmatprep.subr.mxu0 %v2815
  %3543 = vmatpush1.msra.mxu0 %v2814
  %3544 = vmatprep.subr.mxu0 %v2871
  %3545 = vmatpush1.msra.mxu0 %v2870
  %3546 = vmatprep.subr.mxu0 %v2879
  %3547 = vmatpush1.msra.mxu0 %v2878
  %3548 = vmatprep.subr.mxu0 %v2935
  %3549 = vmatpush1.msra.mxu0 %v2934
  %3550 = vmatprep.subr.mxu0 %v2943
  %3551 = vmatpush1.msra.mxu0 %v2942
  %3552 = vmatprep.subr.mxu0 %v2999
  %3553 = vmatpush1.msra.mxu0 %v2998
  %3554 = vmatprep.subr.mxu0 %v3007
  %3555 = vmatpush1.msra.mxu0 %v3006
  %3556 = vmatprep.subr.mxu0 0.0
  %3557 = vmatpush1.msra.mxu0 0.0
  %3558 = vmatprep.subr.mxu0 0.0
  %3559 = vmatpush1.msra.mxu0 0.0
  %3560 = vmatprep.subr.mxu0 0.0
  %3561 = vmatpush1.msra.mxu0 0.0
  %3562 = vmatprep.subr.mxu0 0.0
  %3563 = vmatpush1.msra.mxu0 0.0
  %3564 = vmatprep.subr.mxu0 0.0
  %3565 = vmatpush1.msra.mxu0 0.0
  %3566 = vmatprep.subr.mxu0 0.0
  %3567 = vmatpush1.msra.mxu0 0.0
  %3568 = vmatprep.subr.mxu0 0.0
  %3569 = vmatpush1.msra.mxu0 0.0
  %3570 = vmatprep.subr.mxu0 0.0
  %3571 = vmatpush1.msra.mxu0 0.0
  %3572 = vmatprep.subr.mxu0 0.0
  %3573 = vmatpush1.msra.mxu0 0.0
  %3574 = vmatprep.subr.mxu0 0.0
  %3575 = vmatpush1.msra.mxu0 0.0
  %3576 = vmatprep.subr.mxu0 0.0
  %3577 = vmatpush1.msra.mxu0 0.0
  %3578 = vmatprep.subr.mxu0 0.0
  %3579 = vmatpush1.msra.mxu0 0.0
  %3580 = vmatprep.subr.mxu0 0.0
  %3581 = vmatpush1.msra.mxu0 0.0
  %3582 = vmatprep.subr.mxu0 0.0
  %3583 = vmatpush1.msra.mxu0 0.0
  %3584 = vmatprep.mubr.f32.mxu0 %v3361
  %3585 = vmatmul.mubr.f32.gmra.mrb[0].mxu0 %v3343
  %v3586 = vpop.f32.mrb[0].mxu0
  %v3587 = vadd.f32 %v3353, %v3586
  %v3588 = vpop.f32.mrb[0].mxu0
  %v3589 = vadd.f32 %v3353, %v3588
  %3590 = vmatprep.mubr.f32.mxu0 %v3364
  %3591 = vmatmul.mubr.f32.gmra.mrb[0].mxu0 %v3345
  %v3592 = vpop.f32.mrb[0].mxu0
  %v3593 = vadd.f32 %v3358, %v3592
  %v3594 = vpop.f32.mrb[0].mxu0
  %v3595 = vadd.f32 %v3358, %v3594
  %3596 = vdwg.mxu0
  %3597 = vmatprep.subr.mxu0 %v2537
  %3598 = vmatpush1.msra.mxu0 %v2536
  %3599 = vmatprep.subr.mxu0 %v2545
  %3600 = vmatpush1.msra.mxu0 %v2544
  %3601 = vmatprep.subr.mxu0 %v2601
  %3602 = vmatpush1.msra.mxu0 %v2600
  %3603 = vmatprep.subr.mxu0 %v2609
  %3604 = vmatpush1.msra.mxu0 %v2608
  %3605 = vmatprep.subr.mxu0 %v2665
  %3606 = vmatpush1.msra.mxu0 %v2664
  %3607 = vmatprep.subr.mxu0 %v2673
  %3608 = vmatpush1.msra.mxu0 %v2672
  %3609 = vmatprep.subr.mxu0 %v2729
  %3610 = vmatpush1.msra.mxu0 %v2728
  %3611 = vmatprep.subr.mxu0 %v2737
  %3612 = vmatpush1.msra.mxu0 %v2736
  %3613 = vmatprep.subr.mxu0 %v2745
  %3614 = vmatpush1.msra.mxu0 %v2744
  %3615 = vmatprep.subr.mxu0 %v2753
  %3616 = vmatpush1.msra.mxu0 %v2752
  %3617 = vmatprep.subr.mxu0 %v2809
  %3618 = vmatpush1.msra.mxu0 %v2808
  %3619 = vmatprep.subr.mxu0 %v2817
  %3620 = vmatpush1.msra.mxu0 %v2816
  %3621 = vmatprep.subr.mxu0 %v2873
  %3622 = vmatpush1.msra.mxu0 %v2872
  %3623 = vmatprep.subr.mxu0 %v2881
  %3624 = vmatpush1.msra.mxu0 %v2880
  %3625 = vmatprep.subr.mxu0 %v2937
  %3626 = vmatpush1.msra.mxu0 %v2936
  %3627 = vmatprep.subr.mxu0 %v2945
  %3628 = vmatpush1.msra.mxu0 %v2944
  %3629 = vmatprep.subr.mxu0 %v3001
  %3630 = vmatpush1.msra.mxu0 %v3000
  %3631 = vmatprep.subr.mxu0 %v3009
  %3632 = vmatpush1.msra.mxu0 %v3008
  %3633 = vmatprep.subr.mxu0 0.0
  %3634 = vmatpush1.msra.mxu0 0.0
  %3635 = vmatprep.subr.mxu0 0.0
  %3636 = vmatpush1.msra.mxu0 0.0
  %3637 = vmatprep.subr.mxu0 0.0
  %3638 = vmatpush1.msra.mxu0 0.0
  %3639 = vmatprep.subr.mxu0 0.0
  %3640 = vmatpush1.msra.mxu0 0.0
  %3641 = vmatprep.subr.mxu0 0.0
  %3642 = vmatpush1.msra.mxu0 0.0
  %3643 = vmatprep.subr.mxu0 0.0
  %3644 = vmatpush1.msra.mxu0 0.0
  %3645 = vmatprep.subr.mxu0 0.0
  %3646 = vmatpush1.msra.mxu0 0.0
  %3647 = vmatprep.subr.mxu0 0.0
  %3648 = vmatpush1.msra.mxu0 0.0
  %3649 = vmatprep.subr.mxu0 0.0
  %3650 = vmatpush1.msra.mxu0 0.0
  %3651 = vmatprep.subr.mxu0 0.0
  %3652 = vmatpush1.msra.mxu0 0.0
  %3653 = vmatprep.subr.mxu0 0.0
  %3654 = vmatpush1.msra.mxu0 0.0
  %3655 = vmatprep.subr.mxu0 0.0
  %3656 = vmatpush1.msra.mxu0 0.0
  %3657 = vmatprep.subr.mxu0 0.0
  %3658 = vmatpush1.msra.mxu0 0.0
  %3659 = vmatprep.subr.mxu0 0.0
  %3660 = vmatpush1.msra.mxu0 0.0
  %3661 = vmatprep.mubr.f32.mxu0 %v3361
  %3662 = vmatmul.mubr.f32.gmra.mrb[0].mxu0 %v3343
  %v3663 = vpop.f32.mrb[0].mxu0
  %v3664 = vadd.f32 %v3353, %v3663
  %v3665 = vpop.f32.mrb[0].mxu0
  %v3666 = vadd.f32 %v3353, %v3665
  %3667 = vmatprep.mubr.f32.mxu0 %v3364
  %3668 = vmatmul.mubr.f32.gmra.mrb[0].mxu0 %v3345
  %v3669 = vpop.f32.mrb[0].mxu0
  %v3670 = vadd.f32 %v3358, %v3669
  %v3671 = vpop.f32.mrb[0].mxu0
  %v3672 = vadd.f32 %v3358, %v3671
  %3673 = vdwg.mxu0
  %v3674 = vadd.f32 %v1017, %v1893
  %v3675 = vadd.f32 %v1019, %v1895
  %v3676 = vadd.f32 %v1094, %v1970
  %v3677 = vadd.f32 %v1096, %v1972
  %v3678 = vadd.f32 %v1171, %v2047
  %v3679 = vadd.f32 %v1173, %v2049
  %v3680 = vadd.f32 %v1248, %v2124
  %v3681 = vadd.f32 %v1250, %v2126
  %v3682 = vadd.f32 %v1023, %v1899
  %v3683 = vadd.f32 %v1025, %v1901
  %v3684 = vadd.f32 %v1100, %v1976
  %v3685 = vadd.f32 %v1102, %v1978
  %v3686 = vadd.f32 %v1177, %v2053
  %v3687 = vadd.f32 %v1179, %v2055
  %v3688 = vadd.f32 %v1254, %v2130
  %v3689 = vadd.f32 %v1256, %v2132
  %3690 = vrot.lane.b32.xlu0 %v3674, 33
  %v3691 = vpop.permute.xlu0 %3690
  %3692 = vrot.lane.b32.xlu0 %v3682, 33
  %v3693 = vpop.permute.xlu0 %3692
  %3694 = vrot.lane.b32.xlu0 %v3675, 33
  %v3695 = vpop.permute.xlu0 %3694
  %3696 = vrot.lane.b32.xlu0 %v3683, 33
  %v3697 = vpop.permute.xlu0 %3696
  %3698 = vrot.lane.b32.xlu0 %v3676, 33
  %v3699 = vpop.permute.xlu0 %3698
  %3700 = vrot.lane.b32.xlu0 %v3684, 33
  %v3701 = vpop.permute.xlu0 %3700
  %3702 = vrot.lane.b32.xlu0 %v3677, 33
  %v3703 = vpop.permute.xlu0 %3702
  %3704 = vrot.lane.b32.xlu0 %v3685, 33
  %v3705 = vpop.permute.xlu0 %3704
  %3706 = vrot.lane.b32.xlu0 %v3678, 33
  %v3707 = vpop.permute.xlu0 %3706
  %3708 = vrot.lane.b32.xlu0 %v3686, 33
  %v3709 = vpop.permute.xlu0 %3708
  %3710 = vrot.lane.b32.xlu0 %v3679, 33
  %v3711 = vpop.permute.xlu0 %3710
  %3712 = vrot.lane.b32.xlu0 %v3687, 33
  %v3713 = vpop.permute.xlu0 %3712
  %3714 = vrot.lane.b32.xlu0 %v3680, 33
  %v3715 = vpop.permute.xlu0 %3714
  %3716 = vrot.lane.b32.xlu0 %v3688, 33
  %v3717 = vpop.permute.xlu0 %3716
  %3718 = vrot.lane.b32.xlu0 %v3681, 33
  %v3719 = vpop.permute.xlu0 %3718
  %3720 = vrot.lane.b32.xlu0 %v3689, 33
  %v3721 = vpop.permute.xlu0 %3720
  %v3722 = vsel %vm423, %v3715, %v3719
  %v3723 = vsel %vm423, %v3717, %v3721
  %v3724 = vsel %vm423, %v3711, %v3715
  %v3725 = vsel %vm423, %v3713, %v3717
  %v3726 = vsel %vm423, %v3707, %v3711
  %v3727 = vsel %vm423, %v3709, %v3713
  %v3728 = vsel %vm423, %v3703, %v3707
  %v3729 = vsel %vm423, %v3705, %v3709
  %v3730 = vsel %vm423, %v3699, %v3703
  %v3731 = vsel %vm423, %v3701, %v3705
  %v3732 = vsel %vm423, %v3695, %v3699
  %v3733 = vsel %vm423, %v3697, %v3701
  %v3734 = vsel %vm423, %v3691, %v3695
  %v3735 = vsel %vm423, %v3693, %v3697
  %v3736 = vsel %vm423, %v3719, %v3691
  %v3737 = vsel %vm423, %v3721, %v3693
  %v3738 = vsel %vm71, %v3736, 0.0
  %v3739 = vsel %vm72, %v3734, 0.0
  %v3740 = vsel %vm73, %v3732, 0.0
  %v3741 = vsel %vm74, %v3730, 0.0
  %v3742 = vsel %vm75, %v3728, 0.0
  %v3743 = vsel %vm76, %v3726, 0.0
  %v3744 = vsel %vm77, %v3724, 0.0
  %v3745 = vsel %vm78, %v3722, 0.0
  %v3746 = vsel %vm71, %v3737, 0.0
  %v3747 = vsel %vm72, %v3735, 0.0
  %v3748 = vsel %vm73, %v3733, 0.0
  %v3749 = vsel %vm74, %v3731, 0.0
  %v3750 = vsel %vm75, %v3729, 0.0
  %v3751 = vsel %vm76, %v3727, 0.0
  %v3752 = vsel %vm77, %v3725, 0.0
  %v3753 = vsel %vm78, %v3723, 0.0
  %3754 = vrot.lane.b32.xlu0 %v3674, 32
  %v3755 = vpop.permute.xlu0 %3754
  %3756 = vrot.lane.b32.xlu0 %v3682, 32
  %v3757 = vpop.permute.xlu0 %3756
  %3758 = vrot.lane.b32.xlu0 %v3675, 32
  %v3759 = vpop.permute.xlu0 %3758
  %3760 = vrot.lane.b32.xlu0 %v3683, 32
  %v3761 = vpop.permute.xlu0 %3760
  %3762 = vrot.lane.b32.xlu0 %v3676, 32
  %v3763 = vpop.permute.xlu0 %3762
  %3764 = vrot.lane.b32.xlu0 %v3684, 32
  %v3765 = vpop.permute.xlu0 %3764
  %3766 = vrot.lane.b32.xlu0 %v3677, 32
  %v3767 = vpop.permute.xlu0 %3766
  %3768 = vrot.lane.b32.xlu0 %v3685, 32
  %v3769 = vpop.permute.xlu0 %3768
  %3770 = vrot.lane.b32.xlu0 %v3678, 32
  %v3771 = vpop.permute.xlu0 %3770
  %3772 = vrot.lane.b32.xlu0 %v3686, 32
  %v3773 = vpop.permute.xlu0 %3772
  %3774 = vrot.lane.b32.xlu0 %v3679, 32
  %v3775 = vpop.permute.xlu0 %3774
  %3776 = vrot.lane.b32.xlu0 %v3687, 32
  %v3777 = vpop.permute.xlu0 %3776
  %3778 = vrot.lane.b32.xlu0 %v3680, 32
  %v3779 = vpop.permute.xlu0 %3778
  %3780 = vrot.lane.b32.xlu0 %v3688, 32
  %v3781 = vpop.permute.xlu0 %3780
  %3782 = vrot.lane.b32.xlu0 %v3681, 32
  %v3783 = vpop.permute.xlu0 %3782
  %3784 = vrot.lane.b32.xlu0 %v3689, 32
  %v3785 = vpop.permute.xlu0 %3784
  %v3786 = vsel %vm488, %v3779, %v3783
  %v3787 = vsel %vm488, %v3781, %v3785
  %v3788 = vsel %vm488, %v3775, %v3779
  %v3789 = vsel %vm488, %v3777, %v3781
  %v3790 = vsel %vm488, %v3771, %v3775
  %v3791 = vsel %vm488, %v3773, %v3777
  %v3792 = vsel %vm488, %v3767, %v3771
  %v3793 = vsel %vm488, %v3769, %v3773
  %v3794 = vsel %vm488, %v3763, %v3767
  %v3795 = vsel %vm488, %v3765, %v3769
  %v3796 = vsel %vm488, %v3759, %v3763
  %v3797 = vsel %vm488, %v3761, %v3765
  %v3798 = vsel %vm488, %v3755, %v3759
  %v3799 = vsel %vm488, %v3757, %v3761
  %v3800 = vsel %vm488, %v3783, %v3755
  %v3801 = vsel %vm488, %v3785, %v3757
  %v3802 = vsel %vm103, %v3800, 0.0
  %v3803 = vsel %vm104, %v3798, 0.0
  %v3804 = vsel %vm105, %v3796, 0.0
  %v3805 = vsel %vm106, %v3794, 0.0
  %v3806 = vsel %vm107, %v3792, 0.0
  %v3807 = vsel %vm108, %v3790, 0.0
  %v3808 = vsel %vm109, %v3788, 0.0
  %v3809 = vsel %vm110, %v3786, 0.0
  %v3810 = vsel %vm103, %v3801, 0.0
  %v3811 = vsel %vm104, %v3799, 0.0
  %v3812 = vsel %vm105, %v3797, 0.0
  %v3813 = vsel %vm106, %v3795, 0.0
  %v3814 = vsel %vm107, %v3793, 0.0
  %v3815 = vsel %vm108, %v3791, 0.0
  %v3816 = vsel %vm109, %v3789, 0.0
  %v3817 = vsel %vm110, %v3787, 0.0
  %3818 = vrot.lane.b32.xlu0 %v3674, 31
  %v3819 = vpop.permute.xlu0 %3818
  %3820 = vrot.lane.b32.xlu0 %v3682, 31
  %v3821 = vpop.permute.xlu0 %3820
  %3822 = vrot.lane.b32.xlu0 %v3675, 31
  %v3823 = vpop.permute.xlu0 %3822
  %3824 = vrot.lane.b32.xlu0 %v3683, 31
  %v3825 = vpop.permute.xlu0 %3824
  %3826 = vrot.lane.b32.xlu0 %v3676, 31
  %v3827 = vpop.permute.xlu0 %3826
  %3828 = vrot.lane.b32.xlu0 %v3684, 31
  %v3829 = vpop.permute.xlu0 %3828
  %3830 = vrot.lane.b32.xlu0 %v3677, 31
  %v3831 = vpop.permute.xlu0 %3830
  %3832 = vrot.lane.b32.xlu0 %v3685, 31
  %v3833 = vpop.permute.xlu0 %3832
  %3834 = vrot.lane.b32.xlu0 %v3678, 31
  %v3835 = vpop.permute.xlu0 %3834
  %3836 = vrot.lane.b32.xlu0 %v3686, 31
  %v3837 = vpop.permute.xlu0 %3836
  %3838 = vrot.lane.b32.xlu0 %v3679, 31
  %v3839 = vpop.permute.xlu0 %3838
  %3840 = vrot.lane.b32.xlu0 %v3687, 31
  %v3841 = vpop.permute.xlu0 %3840
  %3842 = vrot.lane.b32.xlu0 %v3680, 31
  %v3843 = vpop.permute.xlu0 %3842
  %3844 = vrot.lane.b32.xlu0 %v3688, 31
  %v3845 = vpop.permute.xlu0 %3844
  %3846 = vrot.lane.b32.xlu0 %v3681, 31
  %v3847 = vpop.permute.xlu0 %3846
  %3848 = vrot.lane.b32.xlu0 %v3689, 31
  %v3849 = vpop.permute.xlu0 %3848
  %v3850 = vsel %vm553, %v3843, %v3847
  %v3851 = vsel %vm553, %v3845, %v3849
  %v3852 = vsel %vm553, %v3839, %v3843
  %v3853 = vsel %vm553, %v3841, %v3845
  %v3854 = vsel %vm553, %v3835, %v3839
  %v3855 = vsel %vm553, %v3837, %v3841
  %v3856 = vsel %vm553, %v3831, %v3835
  %v3857 = vsel %vm553, %v3833, %v3837
  %v3858 = vsel %vm553, %v3827, %v3831
  %v3859 = vsel %vm553, %v3829, %v3833
  %v3860 = vsel %vm553, %v3823, %v3827
  %v3861 = vsel %vm553, %v3825, %v3829
  %v3862 = vsel %vm553, %v3819, %v3823
  %v3863 = vsel %vm553, %v3821, %v3825
  %v3864 = vsel %vm553, %v3847, %v3819
  %v3865 = vsel %vm553, %v3849, %v3821
  %v3866 = vsel %vm151, %v3864, 0.0
  %v3867 = vsel %vm152, %v3862, 0.0
  %v3868 = vsel %vm153, %v3860, 0.0
  %v3869 = vsel %vm154, %v3858, 0.0
  %v3870 = vsel %vm155, %v3856, 0.0
  %v3871 = vsel %vm156, %v3854, 0.0
  %v3872 = vsel %vm157, %v3852, 0.0
  %v3873 = vsel %vm158, %v3850, 0.0
  %v3874 = vsel %vm151, %v3865, 0.0
  %v3875 = vsel %vm152, %v3863, 0.0
  %v3876 = vsel %vm153, %v3861, 0.0
  %v3877 = vsel %vm154, %v3859, 0.0
  %v3878 = vsel %vm155, %v3857, 0.0
  %v3879 = vsel %vm156, %v3855, 0.0
  %v3880 = vsel %vm157, %v3853, 0.0
  %v3881 = vsel %vm158, %v3851, 0.0
  %3882 = vrot.lane.b32.xlu0 %v3674, 1
  %v3883 = vpop.permute.xlu0 %3882
  %3884 = vrot.lane.b32.xlu0 %v3682, 1
  %v3885 = vpop.permute.xlu0 %3884
  %3886 = vrot.lane.b32.xlu0 %v3675, 1
  %v3887 = vpop.permute.xlu0 %3886
  %3888 = vrot.lane.b32.xlu0 %v3683, 1
  %v3889 = vpop.permute.xlu0 %3888
  %3890 = vrot.lane.b32.xlu0 %v3676, 1
  %v3891 = vpop.permute.xlu0 %3890
  %3892 = vrot.lane.b32.xlu0 %v3684, 1
  %v3893 = vpop.permute.xlu0 %3892
  %3894 = vrot.lane.b32.xlu0 %v3677, 1
  %v3895 = vpop.permute.xlu0 %3894
  %3896 = vrot.lane.b32.xlu0 %v3685, 1
  %v3897 = vpop.permute.xlu0 %3896
  %3898 = vrot.lane.b32.xlu0 %v3678, 1
  %v3899 = vpop.permute.xlu0 %3898
  %3900 = vrot.lane.b32.xlu0 %v3686, 1
  %v3901 = vpop.permute.xlu0 %3900
  %3902 = vrot.lane.b32.xlu0 %v3679, 1
  %v3903 = vpop.permute.xlu0 %3902
  %3904 = vrot.lane.b32.xlu0 %v3687, 1
  %v3905 = vpop.permute.xlu0 %3904
  %3906 = vrot.lane.b32.xlu0 %v3680, 1
  %v3907 = vpop.permute.xlu0 %3906
  %3908 = vrot.lane.b32.xlu0 %v3688, 1
  %v3909 = vpop.permute.xlu0 %3908
  %3910 = vrot.lane.b32.xlu0 %v3681, 1
  %v3911 = vpop.permute.xlu0 %3910
  %3912 = vrot.lane.b32.xlu0 %v3689, 1
  %v3913 = vpop.permute.xlu0 %3912
  %v3914 = vsel %vm618, %v3907, %v3911
  %v3915 = vsel %vm618, %v3909, %v3913
  %v3916 = vsel %vm618, %v3903, %v3907
  %v3917 = vsel %vm618, %v3905, %v3909
  %v3918 = vsel %vm618, %v3899, %v3903
  %v3919 = vsel %vm618, %v3901, %v3905
  %v3920 = vsel %vm618, %v3895, %v3899
  %v3921 = vsel %vm618, %v3897, %v3901
  %v3922 = vsel %vm618, %v3891, %v3895
  %v3923 = vsel %vm618, %v3893, %v3897
  %v3924 = vsel %vm618, %v3887, %v3891
  %v3925 = vsel %vm618, %v3889, %v3893
  %v3926 = vsel %vm618, %v3883, %v3887
  %v3927 = vsel %vm618, %v3885, %v3889
  %v3928 = vsel %vm618, %v3911, %v3883
  %v3929 = vsel %vm618, %v3913, %v3885
  %v3930 = vsel %vm191, %v3928, 0.0
  %v3931 = vsel %vm192, %v3926, 0.0
  %v3932 = vsel %vm193, %v3924, 0.0
  %v3933 = vsel %vm194, %v3922, 0.0
  %v3934 = vsel %vm195, %v3920, 0.0
  %v3935 = vsel %vm196, %v3918, 0.0
  %v3936 = vsel %vm197, %v3916, 0.0
  %v3937 = vsel %vm198, %v3914, 0.0
  %v3938 = vsel %vm191, %v3929, 0.0
  %v3939 = vsel %vm192, %v3927, 0.0
  %v3940 = vsel %vm193, %v3925, 0.0
  %v3941 = vsel %vm194, %v3923, 0.0
  %v3942 = vsel %vm195, %v3921, 0.0
  %v3943 = vsel %vm196, %v3919, 0.0
  %v3944 = vsel %vm197, %v3917, 0.0
  %v3945 = vsel %vm198, %v3915, 0.0
  %v3946 = vsel %vm215, %v3674, 0.0
  %v3947 = vsel %vm216, %v3675, 0.0
  %v3948 = vsel %vm217, %v3676, 0.0
  %v3949 = vsel %vm218, %v3677, 0.0
  %v3950 = vsel %vm219, %v3678, 0.0
  %v3951 = vsel %vm220, %v3679, 0.0
  %v3952 = vsel %vm221, %v3680, 0.0
  %v3953 = vsel %vm222, %v3681, 0.0
  %v3954 = vsel %vm215, %v3682, 0.0
  %v3955 = vsel %vm216, %v3683, 0.0
  %v3956 = vsel %vm217, %v3684, 0.0
  %v3957 = vsel %vm218, %v3685, 0.0
  %v3958 = vsel %vm219, %v3686, 0.0
  %v3959 = vsel %vm220, %v3687, 0.0
  %v3960 = vsel %vm221, %v3688, 0.0
  %v3961 = vsel %vm222, %v3689, 0.0
  %3962 = vrot.lane.b32.xlu0 %v3674, 127
  %v3963 = vpop.permute.xlu0 %3962
  %3964 = vrot.lane.b32.xlu0 %v3682, 127
  %v3965 = vpop.permute.xlu0 %3964
  %3966 = vrot.lane.b32.xlu0 %v3675, 127
  %v3967 = vpop.permute.xlu0 %3966
  %3968 = vrot.lane.b32.xlu0 %v3683, 127
  %v3969 = vpop.permute.xlu0 %3968
  %3970 = vrot.lane.b32.xlu0 %v3676, 127
  %v3971 = vpop.permute.xlu0 %3970
  %3972 = vrot.lane.b32.xlu0 %v3684, 127
  %v3973 = vpop.permute.xlu0 %3972
  %3974 = vrot.lane.b32.xlu0 %v3677, 127
  %v3975 = vpop.permute.xlu0 %3974
  %3976 = vrot.lane.b32.xlu0 %v3685, 127
  %v3977 = vpop.permute.xlu0 %3976
  %3978 = vrot.lane.b32.xlu0 %v3678, 127
  %v3979 = vpop.permute.xlu0 %3978
  %3980 = vrot.lane.b32.xlu0 %v3686, 127
  %v3981 = vpop.permute.xlu0 %3980
  %3982 = vrot.lane.b32.xlu0 %v3679, 127
  %v3983 = vpop.permute.xlu0 %3982
  %3984 = vrot.lane.b32.xlu0 %v3687, 127
  %v3985 = vpop.permute.xlu0 %3984
  %3986 = vrot.lane.b32.xlu0 %v3680, 127
  %v3987 = vpop.permute.xlu0 %3986
  %3988 = vrot.lane.b32.xlu0 %v3688, 127
  %v3989 = vpop.permute.xlu0 %3988
  %3990 = vrot.lane.b32.xlu0 %v3681, 127
  %v3991 = vpop.permute.xlu0 %3990
  %3992 = vrot.lane.b32.xlu0 %v3689, 127
  %v3993 = vpop.permute.xlu0 %3992
  %v3994 = vsel %vm699, %v3987, %v3991
  %v3995 = vsel %vm699, %v3989, %v3993
  %v3996 = vsel %vm699, %v3983, %v3987
  %v3997 = vsel %vm699, %v3985, %v3989
  %v3998 = vsel %vm699, %v3979, %v3983
  %v3999 = vsel %vm699, %v3981, %v3985
  %v4000 = vsel %vm699, %v3975, %v3979
  %v4001 = vsel %vm699, %v3977, %v3981
  %v4002 = vsel %vm699, %v3971, %v3975
  %v4003 = vsel %vm699, %v3973, %v3977
  %v4004 = vsel %vm699, %v3967, %v3971
  %v4005 = vsel %vm699, %v3969, %v3973
  %v4006 = vsel %vm699, %v3963, %v3967
  %v4007 = vsel %vm699, %v3965, %v3969
  %v4008 = vsel %vm699, %v3991, %v3963
  %v4009 = vsel %vm699, %v3993, %v3965
  %v4010 = vsel %vm255, %v4006, 0.0
  %v4011 = vsel %vm256, %v4004, 0.0
  %v4012 = vsel %vm257, %v4002, 0.0
  %v4013 = vsel %vm258, %v4000, 0.0
  %v4014 = vsel %vm259, %v3998, 0.0
  %v4015 = vsel %vm260, %v3996, 0.0
  %v4016 = vsel %vm261, %v3994, 0.0
  %v4017 = vsel %vm262, %v4008, 0.0
  %v4018 = vsel %vm255, %v4007, 0.0
  %v4019 = vsel %vm256, %v4005, 0.0
  %v4020 = vsel %vm257, %v4003, 0.0
  %v4021 = vsel %vm258, %v4001, 0.0
  %v4022 = vsel %vm259, %v3999, 0.0
  %v4023 = vsel %vm260, %v3997, 0.0
  %v4024 = vsel %vm261, %v3995, 0.0
  %v4025 = vsel %vm262, %v4009, 0.0
  %4026 = vrot.lane.b32.xlu0 %v3674, 97
  %v4027 = vpop.permute.xlu0 %4026
  %4028 = vrot.lane.b32.xlu0 %v3682, 97
  %v4029 = vpop.permute.xlu0 %4028
  %4030 = vrot.lane.b32.xlu0 %v3675, 97
  %v4031 = vpop.permute.xlu0 %4030
  %4032 = vrot.lane.b32.xlu0 %v3683, 97
  %v4033 = vpop.permute.xlu0 %4032
  %4034 = vrot.lane.b32.xlu0 %v3676, 97
  %v4035 = vpop.permute.xlu0 %4034
  %4036 = vrot.lane.b32.xlu0 %v3684, 97
  %v4037 = vpop.permute.xlu0 %4036
  %4038 = vrot.lane.b32.xlu0 %v3677, 97
  %v4039 = vpop.permute.xlu0 %4038
  %4040 = vrot.lane.b32.xlu0 %v3685, 97
  %v4041 = vpop.permute.xlu0 %4040
  %4042 = vrot.lane.b32.xlu0 %v3678, 97
  %v4043 = vpop.permute.xlu0 %4042
  %4044 = vrot.lane.b32.xlu0 %v3686, 97
  %v4045 = vpop.permute.xlu0 %4044
  %4046 = vrot.lane.b32.xlu0 %v3679, 97
  %v4047 = vpop.permute.xlu0 %4046
  %4048 = vrot.lane.b32.xlu0 %v3687, 97
  %v4049 = vpop.permute.xlu0 %4048
  %4050 = vrot.lane.b32.xlu0 %v3680, 97
  %v4051 = vpop.permute.xlu0 %4050
  %4052 = vrot.lane.b32.xlu0 %v3688, 97
  %v4053 = vpop.permute.xlu0 %4052
  %4054 = vrot.lane.b32.xlu0 %v3681, 97
  %v4055 = vpop.permute.xlu0 %4054
  %4056 = vrot.lane.b32.xlu0 %v3689, 97
  %v4057 = vpop.permute.xlu0 %4056
  %v4058 = vsel %vm764, %v4051, %v4055
  %v4059 = vsel %vm764, %v4053, %v4057
  %v4060 = vsel %vm764, %v4047, %v4051
  %v4061 = vsel %vm764, %v4049, %v4053
  %v4062 = vsel %vm764, %v4043, %v4047
  %v4063 = vsel %vm764, %v4045, %v4049
  %v4064 = vsel %vm764, %v4039, %v4043
  %v4065 = vsel %vm764, %v4041, %v4045
  %v4066 = vsel %vm764, %v4035, %v4039
  %v4067 = vsel %vm764, %v4037, %v4041
  %v4068 = vsel %vm764, %v4031, %v4035
  %v4069 = vsel %vm764, %v4033, %v4037
  %v4070 = vsel %vm764, %v4027, %v4031
  %v4071 = vsel %vm764, %v4029, %v4033
  %v4072 = vsel %vm764, %v4055, %v4027
  %v4073 = vsel %vm764, %v4057, %v4029
  %v4074 = vsel %vm295, %v4070, 0.0
  %v4075 = vsel %vm296, %v4068, 0.0
  %v4076 = vsel %vm297, %v4066, 0.0
  %v4077 = vsel %vm298, %v4064, 0.0
  %v4078 = vsel %vm299, %v4062, 0.0
  %v4079 = vsel %vm300, %v4060, 0.0
  %v4080 = vsel %vm301, %v4058, 0.0
  %v4081 = vsel %vm302, %v4072, 0.0
  %v4082 = vsel %vm295, %v4071, 0.0
  %v4083 = vsel %vm296, %v4069, 0.0
  %v4084 = vsel %vm297, %v4067, 0.0
  %v4085 = vsel %vm298, %v4065, 0.0
  %v4086 = vsel %vm299, %v4063, 0.0
  %v4087 = vsel %vm300, %v4061, 0.0
  %v4088 = vsel %vm301, %v4059, 0.0
  %v4089 = vsel %vm302, %v4073, 0.0
  %4090 = vrot.lane.b32.xlu0 %v3674, 96
  %v4091 = vpop.permute.xlu0 %4090
  %4092 = vrot.lane.b32.xlu0 %v3682, 96
  %v4093 = vpop.permute.xlu0 %4092
  %4094 = vrot.lane.b32.xlu0 %v3675, 96
  %v4095 = vpop.permute.xlu0 %4094
  %4096 = vrot.lane.b32.xlu0 %v3683, 96
  %v4097 = vpop.permute.xlu0 %4096
  %4098 = vrot.lane.b32.xlu0 %v3676, 96
  %v4099 = vpop.permute.xlu0 %4098
  %4100 = vrot.lane.b32.xlu0 %v3684, 96
  %v4101 = vpop.permute.xlu0 %4100
  %4102 = vrot.lane.b32.xlu0 %v3677, 96
  %v4103 = vpop.permute.xlu0 %4102
  %4104 = vrot.lane.b32.xlu0 %v3685, 96
  %v4105 = vpop.permute.xlu0 %4104
  %4106 = vrot.lane.b32.xlu0 %v3678, 96
  %v4107 = vpop.permute.xlu0 %4106
  %4108 = vrot.lane.b32.xlu0 %v3686, 96
  %v4109 = vpop.permute.xlu0 %4108
  %4110 = vrot.lane.b32.xlu0 %v3679, 96
  %v4111 = vpop.permute.xlu0 %4110
  %4112 = vrot.lane.b32.xlu0 %v3687, 96
  %v4113 = vpop.permute.xlu0 %4112
  %4114 = vrot.lane.b32.xlu0 %v3680, 96
  %v4115 = vpop.permute.xlu0 %4114
  %4116 = vrot.lane.b32.xlu0 %v3688, 96
  %v4117 = vpop.permute.xlu0 %4116
  %4118 = vrot.lane.b32.xlu0 %v3681, 96
  %v4119 = vpop.permute.xlu0 %4118
  %4120 = vrot.lane.b32.xlu0 %v3689, 96
  %v4121 = vpop.permute.xlu0 %4120
  %v4122 = vsel %vm829, %v4115, %v4119
  %v4123 = vsel %vm829, %v4117, %v4121
  %v4124 = vsel %vm829, %v4111, %v4115
  %v4125 = vsel %vm829, %v4113, %v4117
  %v4126 = vsel %vm829, %v4107, %v4111
  %v4127 = vsel %vm829, %v4109, %v4113
  %v4128 = vsel %vm829, %v4103, %v4107
  %v4129 = vsel %vm829, %v4105, %v4109
  %v4130 = vsel %vm829, %v4099, %v4103
  %v4131 = vsel %vm829, %v4101, %v4105
  %v4132 = vsel %vm829, %v4095, %v4099
  %v4133 = vsel %vm829, %v4097, %v4101
  %v4134 = vsel %vm829, %v4091, %v4095
  %v4135 = vsel %vm829, %v4093, %v4097
  %v4136 = vsel %vm829, %v4119, %v4091
  %v4137 = vsel %vm829, %v4121, %v4093
  %v4138 = vsel %vm327, %v4134, 0.0
  %v4139 = vsel %vm328, %v4132, 0.0
  %v4140 = vsel %vm329, %v4130, 0.0
  %v4141 = vsel %vm330, %v4128, 0.0
  %v4142 = vsel %vm331, %v4126, 0.0
  %v4143 = vsel %vm332, %v4124, 0.0
  %v4144 = vsel %vm333, %v4122, 0.0
  %v4145 = vsel %vm334, %v4136, 0.0
  %v4146 = vsel %vm327, %v4135, 0.0
  %v4147 = vsel %vm328, %v4133, 0.0
  %v4148 = vsel %vm329, %v4131, 0.0
  %v4149 = vsel %vm330, %v4129, 0.0
  %v4150 = vsel %vm331, %v4127, 0.0
  %v4151 = vsel %vm332, %v4125, 0.0
  %v4152 = vsel %vm333, %v4123, 0.0
  %v4153 = vsel %vm334, %v4137, 0.0
  %4154 = vrot.lane.b32.xlu0 %v3674, 95
  %v4155 = vpop.permute.xlu0 %4154
  %4156 = vrot.lane.b32.xlu0 %v3682, 95
  %v4157 = vpop.permute.xlu0 %4156
  %4158 = vrot.lane.b32.xlu0 %v3675, 95
  %v4159 = vpop.permute.xlu0 %4158
  %4160 = vrot.lane.b32.xlu0 %v3683, 95
  %v4161 = vpop.permute.xlu0 %4160
  %4162 = vrot.lane.b32.xlu0 %v3676, 95
  %v4163 = vpop.permute.xlu0 %4162
  %4164 = vrot.lane.b32.xlu0 %v3684, 95
  %v4165 = vpop.permute.xlu0 %4164
  %4166 = vrot.lane.b32.xlu0 %v3677, 95
  %v4167 = vpop.permute.xlu0 %4166
  %4168 = vrot.lane.b32.xlu0 %v3685, 95
  %v4169 = vpop.permute.xlu0 %4168
  %4170 = vrot.lane.b32.xlu0 %v3678, 95
  %v4171 = vpop.permute.xlu0 %4170
  %4172 = vrot.lane.b32.xlu0 %v3686, 95
  %v4173 = vpop.permute.xlu0 %4172
  %4174 = vrot.lane.b32.xlu0 %v3679, 95
  %v4175 = vpop.permute.xlu0 %4174
  %4176 = vrot.lane.b32.xlu0 %v3687, 95
  %v4177 = vpop.permute.xlu0 %4176
  %4178 = vrot.lane.b32.xlu0 %v3680, 95
  %v4179 = vpop.permute.xlu0 %4178
  %4180 = vrot.lane.b32.xlu0 %v3688, 95
  %v4181 = vpop.permute.xlu0 %4180
  %4182 = vrot.lane.b32.xlu0 %v3681, 95
  %v4183 = vpop.permute.xlu0 %4182
  %4184 = vrot.lane.b32.xlu0 %v3689, 95
  %v4185 = vpop.permute.xlu0 %4184
  %v4186 = vsel %vm894, %v4179, %v4183
  %v4187 = vsel %vm894, %v4181, %v4185
  %v4188 = vsel %vm894, %v4175, %v4179
  %v4189 = vsel %vm894, %v4177, %v4181
  %v4190 = vsel %vm894, %v4171, %v4175
  %v4191 = vsel %vm894, %v4173, %v4177
  %v4192 = vsel %vm894, %v4167, %v4171
  %v4193 = vsel %vm894, %v4169, %v4173
  %v4194 = vsel %vm894, %v4163, %v4167
  %v4195 = vsel %vm894, %v4165, %v4169
  %v4196 = vsel %vm894, %v4159, %v4163
  %v4197 = vsel %vm894, %v4161, %v4165
  %v4198 = vsel %vm894, %v4155, %v4159
  %v4199 = vsel %vm894, %v4157, %v4161
  %v4200 = vsel %vm894, %v4183, %v4155
  %v4201 = vsel %vm894, %v4185, %v4157
  %v4202 = vsel %vm367, %v4198, 0.0
  %v4203 = vsel %vm368, %v4196, 0.0
  %v4204 = vsel %vm369, %v4194, 0.0
  %v4205 = vsel %vm370, %v4192, 0.0
  %v4206 = vsel %vm371, %v4190, 0.0
  %v4207 = vsel %vm372, %v4188, 0.0
  %v4208 = vsel %vm373, %v4186, 0.0
  %v4209 = vsel %vm374, %v4200, 0.0
  %v4210 = vsel %vm367, %v4199, 0.0
  %v4211 = vsel %vm368, %v4197, 0.0
  %v4212 = vsel %vm369, %v4195, 0.0
  %v4213 = vsel %vm370, %v4193, 0.0
  %v4214 = vsel %vm371, %v4191, 0.0
  %v4215 = vsel %vm372, %v4189, 0.0
  %v4216 = vsel %vm373, %v4187, 0.0
  %v4217 = vsel %vm374, %v4201, 0.0
  %s4218 = scalar_lea.vmem %s1, 96
  %v4219 = vld [vmem:[%s4218] sm:$0xff]
  %v4220 = vld [vmem:[%s4218 + $0x8] sm:$0xff]
  %v4221 = vld [vmem:[%s4218 + $0x10] sm:$0xff]
  %v4222 = vld [vmem:[%s4218 + $0x18] sm:$0xff]
  %s4223 = scalar_lea.vmem %s2, 48
  %v4224 = vld [vmem:[%s4223] sm:$0xff]
  %v4225 = vld [vmem:[%s4223 + $0x8] sm:$0xff]
  %4227 = vset.pattern.permute.xlu0 0
  %4228 = vperm.xlu0 %4227, %v4224
  %v4229 = vpop.permute.xlu0 %4228
  %4232 = vset.pattern.permute.xlu0 0
  %4233 = vperm.xlu0 %4232, %v4225
  %v4234 = vpop.permute.xlu0 %4233
  %v4237 = vsel %vm943, %v4220, 0
  %v4240 = vsel %vm943, %v4222, 0
  %4242 = vmatprep.subr.mxu0 %v3739
  %4243 = vmatpush1.msra.mxu0 %v3738
  %4244 = vmatprep.subr.mxu0 %v3747
  %4245 = vmatpush1.msra.mxu0 %v3746
  %4246 = vmatprep.subr.mxu0 %v3803
  %4247 = vmatpush1.msra.mxu0 %v3802
  %4248 = vmatprep.subr.mxu0 %v3811
  %4249 = vmatpush1.msra.mxu0 %v3810
  %4250 = vmatprep.subr.mxu0 %v3867
  %4251 = vmatpush1.msra.mxu0 %v3866
  %4252 = vmatprep.subr.mxu0 %v3875
  %4253 = vmatpush1.msra.mxu0 %v3874
  %4254 = vmatprep.subr.mxu0 %v3931
  %4255 = vmatpush1.msra.mxu0 %v3930
  %4256 = vmatprep.subr.mxu0 %v3939
  %4257 = vmatpush1.msra.mxu0 %v3938
  %4258 = vmatprep.subr.mxu0 %v3947
  %4259 = vmatpush1.msra.mxu0 %v3946
  %4260 = vmatprep.subr.mxu0 %v3955
  %4261 = vmatpush1.msra.mxu0 %v3954
  %4262 = vmatprep.subr.mxu0 %v4011
  %4263 = vmatpush1.msra.mxu0 %v4010
  %4264 = vmatprep.subr.mxu0 %v4019
  %4265 = vmatpush1.msra.mxu0 %v4018
  %4266 = vmatprep.subr.mxu0 %v4075
  %4267 = vmatpush1.msra.mxu0 %v4074
  %4268 = vmatprep.subr.mxu0 %v4083
  %4269 = vmatpush1.msra.mxu0 %v4082
  %4270 = vmatprep.subr.mxu0 %v4139
  %4271 = vmatpush1.msra.mxu0 %v4138
  %4272 = vmatprep.subr.mxu0 %v4147
  %4273 = vmatpush1.msra.mxu0 %v4146
  %4274 = vmatprep.subr.mxu0 %v4203
  %4275 = vmatpush1.msra.mxu0 %v4202
  %4276 = vmatprep.subr.mxu0 %v4211
  %4277 = vmatpush1.msra.mxu0 %v4210
  %4278 = vmatprep.subr.mxu0 0.0
  %4279 = vmatpush1.msra.mxu0 0.0
  %4280 = vmatprep.subr.mxu0 0.0
  %4281 = vmatpush1.msra.mxu0 0.0
  %4282 = vmatprep.subr.mxu0 0.0
  %4283 = vmatpush1.msra.mxu0 0.0
  %4284 = vmatprep.subr.mxu0 0.0
  %4285 = vmatpush1.msra.mxu0 0.0
  %4286 = vmatprep.subr.mxu0 0.0
  %4287 = vmatpush1.msra.mxu0 0.0
  %4288 = vmatprep.subr.mxu0 0.0
  %4289 = vmatpush1.msra.mxu0 0.0
  %4290 = vmatprep.subr.mxu0 0.0
  %4291 = vmatpush1.msra.mxu0 0.0
  %4292 = vmatprep.subr.mxu0 0.0
  %4293 = vmatpush1.msra.mxu0 0.0
  %4294 = vmatprep.subr.mxu0 0.0
  %4295 = vmatpush1.msra.mxu0 0.0
  %4296 = vmatprep.subr.mxu0 0.0
  %4297 = vmatpush1.msra.mxu0 0.0
  %4298 = vmatprep.subr.mxu0 0.0
  %4299 = vmatpush1.msra.mxu0 0.0
  %4300 = vmatprep.subr.mxu0 0.0
  %4301 = vmatpush1.msra.mxu0 0.0
  %4302 = vmatprep.subr.mxu0 0.0
  %4303 = vmatpush1.msra.mxu0 0.0
  %4304 = vmatprep.subr.mxu0 0.0
  %4305 = vmatpush1.msra.mxu0 0.0
  %4306 = vmatprep.mubr.f32.mxu0 %v4237
  %4307 = vmatmul.mubr.f32.gmra.mrb[0].mxu0 %v4219
  %v4308 = vpop.f32.mrb[0].mxu0
  %v4309 = vadd.f32 %v4229, %v4308
  %v4310 = vpop.f32.mrb[0].mxu0
  %v4311 = vadd.f32 %v4229, %v4310
  %4312 = vmatprep.mubr.f32.mxu0 %v4240
  %4313 = vmatmul.mubr.f32.gmra.mrb[0].mxu0 %v4221
  %v4314 = vpop.f32.mrb[0].mxu0
  %v4315 = vadd.f32 %v4234, %v4314
  %v4316 = vpop.f32.mrb[0].mxu0
  %v4317 = vadd.f32 %v4234, %v4316
  %4318 = vdwg.mxu0
  %4319 = vmatprep.subr.mxu0 %v3741
  %4320 = vmatpush1.msra.mxu0 %v3740
  %4321 = vmatprep.subr.mxu0 %v3749
  %4322 = vmatpush1.msra.mxu0 %v3748
  %4323 = vmatprep.subr.mxu0 %v3805
  %4324 = vmatpush1.msra.mxu0 %v3804
  %4325 = vmatprep.subr.mxu0 %v3813
  %4326 = vmatpush1.msra.mxu0 %v3812
  %4327 = vmatprep.subr.mxu0 %v3869
  %4328 = vmatpush1.msra.mxu0 %v3868
  %4329 = vmatprep.subr.mxu0 %v3877
  %4330 = vmatpush1.msra.mxu0 %v3876
  %4331 = vmatprep.subr.mxu0 %v3933
  %4332 = vmatpush1.msra.mxu0 %v3932
  %4333 = vmatprep.subr.mxu0 %v3941
  %4334 = vmatpush1.msra.mxu0 %v3940
  %4335 = vmatprep.subr.mxu0 %v3949
  %4336 = vmatpush1.msra.mxu0 %v3948
  %4337 = vmatprep.subr.mxu0 %v3957
  %4338 = vmatpush1.msra.mxu0 %v3956
  %4339 = vmatprep.subr.mxu0 %v4013
  %4340 = vmatpush1.msra.mxu0 %v4012
  %4341 = vmatprep.subr.mxu0 %v4021
  %4342 = vmatpush1.msra.mxu0 %v4020
  %4343 = vmatprep.subr.mxu0 %v4077
  %4344 = vmatpush1.msra.mxu0 %v4076
  %4345 = vmatprep.subr.mxu0 %v4085
  %4346 = vmatpush1.msra.mxu0 %v4084
  %4347 = vmatprep.subr.mxu0 %v4141
  %4348 = vmatpush1.msra.mxu0 %v4140
  %4349 = vmatprep.subr.mxu0 %v4149
  %4350 = vmatpush1.msra.mxu0 %v4148
  %4351 = vmatprep.subr.mxu0 %v4205
  %4352 = vmatpush1.msra.mxu0 %v4204
  %4353 = vmatprep.subr.mxu0 %v4213
  %4354 = vmatpush1.msra.mxu0 %v4212
  %4355 = vmatprep.subr.mxu0 0.0
  %4356 = vmatpush1.msra.mxu0 0.0
  %4357 = vmatprep.subr.mxu0 0.0
  %4358 = vmatpush1.msra.mxu0 0.0
  %4359 = vmatprep.subr.mxu0 0.0
  %4360 = vmatpush1.msra.mxu0 0.0
  %4361 = vmatprep.subr.mxu0 0.0
  %4362 = vmatpush1.msra.mxu0 0.0
  %4363 = vmatprep.subr.mxu0 0.0
  %4364 = vmatpush1.msra.mxu0 0.0
  %4365 = vmatprep.subr.mxu0 0.0
  %4366 = vmatpush1.msra.mxu0 0.0
  %4367 = vmatprep.subr.mxu0 0.0
  %4368 = vmatpush1.msra.mxu0 0.0
  %4369 = vmatprep.subr.mxu0 0.0
  %4370 = vmatpush1.msra.mxu0 0.0
  %4371 = vmatprep.subr.mxu0 0.0
  %4372 = vmatpush1.msra.mxu0 0.0
  %4373 = vmatprep.subr.mxu0 0.0
  %4374 = vmatpush1.msra.mxu0 0.0
  %4375 = vmatprep.subr.mxu0 0.0
  %4376 = vmatpush1.msra.mxu0 0.0
  %4377 = vmatprep.subr.mxu0 0.0
  %4378 = vmatpush1.msra.mxu0 0.0
  %4379 = vmatprep.subr.mxu0 0.0
  %4380 = vmatpush1.msra.mxu0 0.0
  %4381 = vmatprep.subr.mxu0 0.0
  %4382 = vmatpush1.msra.mxu0 0.0
  %4383 = vmatprep.mubr.f32.mxu0 %v4237
  %4384 = vmatmul.mubr.f32.gmra.mrb[0].mxu0 %v4219
  %v4385 = vpop.f32.mrb[0].mxu0
  %v4386 = vadd.f32 %v4229, %v4385
  %v4387 = vpop.f32.mrb[0].mxu0
  %v4388 = vadd.f32 %v4229, %v4387
  %4389 = vmatprep.mubr.f32.mxu0 %v4240
  %4390 = vmatmul.mubr.f32.gmra.mrb[0].mxu0 %v4221
  %v4391 = vpop.f32.mrb[0].mxu0
  %v4392 = vadd.f32 %v4234, %v4391
  %v4393 = vpop.f32.mrb[0].mxu0
  %v4394 = vadd.f32 %v4234, %v4393
  %4395 = vdwg.mxu0
  %4396 = vmatprep.subr.mxu0 %v3743
  %4397 = vmatpush1.msra.mxu0 %v3742
  %4398 = vmatprep.subr.mxu0 %v3751
  %4399 = vmatpush1.msra.mxu0 %v3750
  %4400 = vmatprep.subr.mxu0 %v3807
  %4401 = vmatpush1.msra.mxu0 %v3806
  %4402 = vmatprep.subr.mxu0 %v3815
  %4403 = vmatpush1.msra.mxu0 %v3814
  %4404 = vmatprep.subr.mxu0 %v3871
  %4405 = vmatpush1.msra.mxu0 %v3870
  %4406 = vmatprep.subr.mxu0 %v3879
  %4407 = vmatpush1.msra.mxu0 %v3878
  %4408 = vmatprep.subr.mxu0 %v3935
  %4409 = vmatpush1.msra.mxu0 %v3934
  %4410 = vmatprep.subr.mxu0 %v3943
  %4411 = vmatpush1.msra.mxu0 %v3942
  %4412 = vmatprep.subr.mxu0 %v3951
  %4413 = vmatpush1.msra.mxu0 %v3950
  %4414 = vmatprep.subr.mxu0 %v3959
  %4415 = vmatpush1.msra.mxu0 %v3958
  %4416 = vmatprep.subr.mxu0 %v4015
  %4417 = vmatpush1.msra.mxu0 %v4014
  %4418 = vmatprep.subr.mxu0 %v4023
  %4419 = vmatpush1.msra.mxu0 %v4022
  %4420 = vmatprep.subr.mxu0 %v4079
  %4421 = vmatpush1.msra.mxu0 %v4078
  %4422 = vmatprep.subr.mxu0 %v4087
  %4423 = vmatpush1.msra.mxu0 %v4086
  %4424 = vmatprep.subr.mxu0 %v4143
  %4425 = vmatpush1.msra.mxu0 %v4142
  %4426 = vmatprep.subr.mxu0 %v4151
  %4427 = vmatpush1.msra.mxu0 %v4150
  %4428 = vmatprep.subr.mxu0 %v4207
  %4429 = vmatpush1.msra.mxu0 %v4206
  %4430 = vmatprep.subr.mxu0 %v4215
  %4431 = vmatpush1.msra.mxu0 %v4214
  %4432 = vmatprep.subr.mxu0 0.0
  %4433 = vmatpush1.msra.mxu0 0.0
  %4434 = vmatprep.subr.mxu0 0.0
  %4435 = vmatpush1.msra.mxu0 0.0
  %4436 = vmatprep.subr.mxu0 0.0
  %4437 = vmatpush1.msra.mxu0 0.0
  %4438 = vmatprep.subr.mxu0 0.0
  %4439 = vmatpush1.msra.mxu0 0.0
  %4440 = vmatprep.subr.mxu0 0.0
  %4441 = vmatpush1.msra.mxu0 0.0
  %4442 = vmatprep.subr.mxu0 0.0
  %4443 = vmatpush1.msra.mxu0 0.0
  %4444 = vmatprep.subr.mxu0 0.0
  %4445 = vmatpush1.msra.mxu0 0.0
  %4446 = vmatprep.subr.mxu0 0.0
  %4447 = vmatpush1.msra.mxu0 0.0
  %4448 = vmatprep.subr.mxu0 0.0
  %4449 = vmatpush1.msra.mxu0 0.0
  %4450 = vmatprep.subr.mxu0 0.0
  %4451 = vmatpush1.msra.mxu0 0.0
  %4452 = vmatprep.subr.mxu0 0.0
  %4453 = vmatpush1.msra.mxu0 0.0
  %4454 = vmatprep.subr.mxu0 0.0
  %4455 = vmatpush1.msra.mxu0 0.0
  %4456 = vmatprep.subr.mxu0 0.0
  %4457 = vmatpush1.msra.mxu0 0.0
  %4458 = vmatprep.subr.mxu0 0.0
  %4459 = vmatpush1.msra.mxu0 0.0
  %4460 = vmatprep.mubr.f32.mxu0 %v4237
  %4461 = vmatmul.mubr.f32.gmra.mrb[0].mxu0 %v4219
  %v4462 = vpop.f32.mrb[0].mxu0
  %v4463 = vadd.f32 %v4229, %v4462
  %v4464 = vpop.f32.mrb[0].mxu0
  %v4465 = vadd.f32 %v4229, %v4464
  %4466 = vmatprep.mubr.f32.mxu0 %v4240
  %4467 = vmatmul.mubr.f32.gmra.mrb[0].mxu0 %v4221
  %v4468 = vpop.f32.mrb[0].mxu0
  %v4469 = vadd.f32 %v4234, %v4468
  %v4470 = vpop.f32.mrb[0].mxu0
  %v4471 = vadd.f32 %v4234, %v4470
  %4472 = vdwg.mxu0
  %4473 = vmatprep.subr.mxu0 %v3745
  %4474 = vmatpush1.msra.mxu0 %v3744
  %4475 = vmatprep.subr.mxu0 %v3753
  %4476 = vmatpush1.msra.mxu0 %v3752
  %4477 = vmatprep.subr.mxu0 %v3809
  %4478 = vmatpush1.msra.mxu0 %v3808
  %4479 = vmatprep.subr.mxu0 %v3817
  %4480 = vmatpush1.msra.mxu0 %v3816
  %4481 = vmatprep.subr.mxu0 %v3873
  %4482 = vmatpush1.msra.mxu0 %v3872
  %4483 = vmatprep.subr.mxu0 %v3881
  %4484 = vmatpush1.msra.mxu0 %v3880
  %4485 = vmatprep.subr.mxu0 %v3937
  %4486 = vmatpush1.msra.mxu0 %v3936
  %4487 = vmatprep.subr.mxu0 %v3945
  %4488 = vmatpush1.msra.mxu0 %v3944
  %4489 = vmatprep.subr.mxu0 %v3953
  %4490 = vmatpush1.msra.mxu0 %v3952
  %4491 = vmatprep.subr.mxu0 %v3961
  %4492 = vmatpush1.msra.mxu0 %v3960
  %4493 = vmatprep.subr.mxu0 %v4017
  %4494 = vmatpush1.msra.mxu0 %v4016
  %4495 = vmatprep.subr.mxu0 %v4025
  %4496 = vmatpush1.msra.mxu0 %v4024
  %4497 = vmatprep.subr.mxu0 %v4081
  %4498 = vmatpush1.msra.mxu0 %v4080
  %4499 = vmatprep.subr.mxu0 %v4089
  %4500 = vmatpush1.msra.mxu0 %v4088
  %4501 = vmatprep.subr.mxu0 %v4145
  %4502 = vmatpush1.msra.mxu0 %v4144
  %4503 = vmatprep.subr.mxu0 %v4153
  %4504 = vmatpush1.msra.mxu0 %v4152
  %4505 = vmatprep.subr.mxu0 %v4209
  %4506 = vmatpush1.msra.mxu0 %v4208
  %4507 = vmatprep.subr.mxu0 %v4217
  %4508 = vmatpush1.msra.mxu0 %v4216
  %4509 = vmatprep.subr.mxu0 0.0
  %4510 = vmatpush1.msra.mxu0 0.0
  %4511 = vmatprep.subr.mxu0 0.0
  %4512 = vmatpush1.msra.mxu0 0.0
  %4513 = vmatprep.subr.mxu0 0.0
  %4514 = vmatpush1.msra.mxu0 0.0
  %4515 = vmatprep.subr.mxu0 0.0
  %4516 = vmatpush1.msra.mxu0 0.0
  %4517 = vmatprep.subr.mxu0 0.0
  %4518 = vmatpush1.msra.mxu0 0.0
  %4519 = vmatprep.subr.mxu0 0.0
  %4520 = vmatpush1.msra.mxu0 0.0
  %4521 = vmatprep.subr.mxu0 0.0
  %4522 = vmatpush1.msra.mxu0 0.0
  %4523 = vmatprep.subr.mxu0 0.0
  %4524 = vmatpush1.msra.mxu0 0.0
  %4525 = vmatprep.subr.mxu0 0.0
  %4526 = vmatpush1.msra.mxu0 0.0
  %4527 = vmatprep.subr.mxu0 0.0
  %4528 = vmatpush1.msra.mxu0 0.0
  %4529 = vmatprep.subr.mxu0 0.0
  %4530 = vmatpush1.msra.mxu0 0.0
  %4531 = vmatprep.subr.mxu0 0.0
  %4532 = vmatpush1.msra.mxu0 0.0
  %4533 = vmatprep.subr.mxu0 0.0
  %4534 = vmatpush1.msra.mxu0 0.0
  %4535 = vmatprep.subr.mxu0 0.0
  %4536 = vmatpush1.msra.mxu0 0.0
  %4537 = vmatprep.mubr.f32.mxu0 %v4237
  %4538 = vmatmul.mubr.f32.gmra.mrb[0].mxu0 %v4219
  %v4539 = vpop.f32.mrb[0].mxu0
  %v4540 = vadd.f32 %v4229, %v4539
  %v4541 = vpop.f32.mrb[0].mxu0
  %v4542 = vadd.f32 %v4229, %v4541
  %4543 = vmatprep.mubr.f32.mxu0 %v4240
  %4544 = vmatmul.mubr.f32.gmra.mrb[0].mxu0 %v4221
  %v4545 = vpop.f32.mrb[0].mxu0
  %v4546 = vadd.f32 %v4234, %v4545
  %v4547 = vpop.f32.mrb[0].mxu0
  %v4548 = vadd.f32 %v4234, %v4547
  %4549 = vdwg.mxu0
  %v4550 = vmul.f32 %v3101, %v4309
  %v4551 = vmul.f32 %v3103, %v4311
  %v4552 = vmul.f32 %v3178, %v4386
  %v4553 = vmul.f32 %v3180, %v4388
  %v4554 = vmul.f32 %v3255, %v4463
  %v4555 = vmul.f32 %v3257, %v4465
  %v4556 = vmul.f32 %v3332, %v4540
  %v4557 = vmul.f32 %v3334, %v4542
  %v4558 = vmul.f32 %v3107, %v4315
  %v4559 = vmul.f32 %v3109, %v4317
  %v4560 = vmul.f32 %v3184, %v4392
  %v4561 = vmul.f32 %v3186, %v4394
  %v4562 = vmul.f32 %v3261, %v4469
  %v4563 = vmul.f32 %v3263, %v4471
  %v4564 = vmul.f32 %v3338, %v4546
  %v4565 = vmul.f32 %v3340, %v4548
  %v4566 = vadd.f32 %v2225, %v1893
  %v4567 = vadd.f32 %v2227, %v1895
  %v4568 = vadd.f32 %v2302, %v1970
  %v4569 = vadd.f32 %v2304, %v1972
  %v4570 = vadd.f32 %v2379, %v2047
  %v4571 = vadd.f32 %v2381, %v2049
  %v4572 = vadd.f32 %v2456, %v2124
  %v4573 = vadd.f32 %v2458, %v2126
  %v4574 = vadd.f32 %v2231, %v1899
  %v4575 = vadd.f32 %v2233, %v1901
  %v4576 = vadd.f32 %v2308, %v1976
  %v4577 = vadd.f32 %v2310, %v1978
  %v4578 = vadd.f32 %v2385, %v2053
  %v4579 = vadd.f32 %v2387, %v2055
  %v4580 = vadd.f32 %v2462, %v2130
  %v4581 = vadd.f32 %v2464, %v2132
  %v4582 = vmul.f32 %v4550, %v4566
  %v4583 = vmul.f32 %v4551, %v4567
  %v4584 = vmul.f32 %v4552, %v4568
  %v4585 = vmul.f32 %v4553, %v4569
  %v4586 = vmul.f32 %v4554, %v4570
  %v4587 = vmul.f32 %v4555, %v4571
  %v4588 = vmul.f32 %v4556, %v4572
  %v4589 = vmul.f32 %v4557, %v4573
  %v4590 = vmul.f32 %v4558, %v4574
  %v4591 = vmul.f32 %v4559, %v4575
  %v4592 = vmul.f32 %v4560, %v4576
  %v4593 = vmul.f32 %v4561, %v4577
  %v4594 = vmul.f32 %v4562, %v4578
  %v4595 = vmul.f32 %v4563, %v4579
  %v4596 = vmul.f32 %v4564, %v4580
  %v4597 = vmul.f32 %v4565, %v4581
  %4598 = vrot.lane.b32.xlu0 %v4582, 33
  %v4599 = vpop.permute.xlu0 %4598
  %4600 = vrot.lane.b32.xlu0 %v4590, 33
  %v4601 = vpop.permute.xlu0 %4600
  %4602 = vrot.lane.b32.xlu0 %v4583, 33
  %v4603 = vpop.permute.xlu0 %4602
  %4604 = vrot.lane.b32.xlu0 %v4591, 33
  %v4605 = vpop.permute.xlu0 %4604
  %4606 = vrot.lane.b32.xlu0 %v4584, 33
  %v4607 = vpop.permute.xlu0 %4606
  %4608 = vrot.lane.b32.xlu0 %v4592, 33
  %v4609 = vpop.permute.xlu0 %4608
  %4610 = vrot.lane.b32.xlu0 %v4585, 33
  %v4611 = vpop.permute.xlu0 %4610
  %4612 = vrot.lane.b32.xlu0 %v4593, 33
  %v4613 = vpop.permute.xlu0 %4612
  %4614 = vrot.lane.b32.xlu0 %v4586, 33
  %v4615 = vpop.permute.xlu0 %4614
  %4616 = vrot.lane.b32.xlu0 %v4594, 33
  %v4617 = vpop.permute.xlu0 %4616
  %4618 = vrot.lane.b32.xlu0 %v4587, 33
  %v4619 = vpop.permute.xlu0 %4618
  %4620 = vrot.lane.b32.xlu0 %v4595, 33
  %v4621 = vpop.permute.xlu0 %4620
  %4622 = vrot.lane.b32.xlu0 %v4588, 33
  %v4623 = vpop.permute.xlu0 %4622
  %4624 = vrot.lane.b32.xlu0 %v4596, 33
  %v4625 = vpop.permute.xlu0 %4624
  %4626 = vrot.lane.b32.xlu0 %v4589, 33
  %v4627 = vpop.permute.xlu0 %4626
  %4628 = vrot.lane.b32.xlu0 %v4597, 33
  %v4629 = vpop.permute.xlu0 %4628
  %v4630 = vsel %vm423, %v4623, %v4627
  %v4631 = vsel %vm423, %v4625, %v4629
  %v4632 = vsel %vm423, %v4619, %v4623
  %v4633 = vsel %vm423, %v4621, %v4625
  %v4634 = vsel %vm423, %v4615, %v4619
  %v4635 = vsel %vm423, %v4617, %v4621
  %v4636 = vsel %vm423, %v4611, %v4615
  %v4637 = vsel %vm423, %v4613, %v4617
  %v4638 = vsel %vm423, %v4607, %v4611
  %v4639 = vsel %vm423, %v4609, %v4613
  %v4640 = vsel %vm423, %v4603, %v4607
  %v4641 = vsel %vm423, %v4605, %v4609
  %v4642 = vsel %vm423, %v4599, %v4603
  %v4643 = vsel %vm423, %v4601, %v4605
  %v4644 = vsel %vm423, %v4627, %v4599
  %v4645 = vsel %vm423, %v4629, %v4601
  %v4646 = vsel %vm71, %v4644, 0.0
  %v4647 = vsel %vm72, %v4642, 0.0
  %v4648 = vsel %vm73, %v4640, 0.0
  %v4649 = vsel %vm74, %v4638, 0.0
  %v4650 = vsel %vm75, %v4636, 0.0
  %v4651 = vsel %vm76, %v4634, 0.0
  %v4652 = vsel %vm77, %v4632, 0.0
  %v4653 = vsel %vm78, %v4630, 0.0
  %v4654 = vsel %vm71, %v4645, 0.0
  %v4655 = vsel %vm72, %v4643, 0.0
  %v4656 = vsel %vm73, %v4641, 0.0
  %v4657 = vsel %vm74, %v4639, 0.0
  %v4658 = vsel %vm75, %v4637, 0.0
  %v4659 = vsel %vm76, %v4635, 0.0
  %v4660 = vsel %vm77, %v4633, 0.0
  %v4661 = vsel %vm78, %v4631, 0.0
  %4662 = vrot.lane.b32.xlu0 %v4582, 32
  %v4663 = vpop.permute.xlu0 %4662
  %4664 = vrot.lane.b32.xlu0 %v4590, 32
  %v4665 = vpop.permute.xlu0 %4664
  %4666 = vrot.lane.b32.xlu0 %v4583, 32
  %v4667 = vpop.permute.xlu0 %4666
  %4668 = vrot.lane.b32.xlu0 %v4591, 32
  %v4669 = vpop.permute.xlu0 %4668
  %4670 = vrot.lane.b32.xlu0 %v4584, 32
  %v4671 = vpop.permute.xlu0 %4670
  %4672 = vrot.lane.b32.xlu0 %v4592, 32
  %v4673 = vpop.permute.xlu0 %4672
  %4674 = vrot.lane.b32.xlu0 %v4585, 32
  %v4675 = vpop.permute.xlu0 %4674
  %4676 = vrot.lane.b32.xlu0 %v4593, 32
  %v4677 = vpop.permute.xlu0 %4676
  %4678 = vrot.lane.b32.xlu0 %v4586, 32
  %v4679 = vpop.permute.xlu0 %4678
  %4680 = vrot.lane.b32.xlu0 %v4594, 32
  %v4681 = vpop.permute.xlu0 %4680
  %4682 = vrot.lane.b32.xlu0 %v4587, 32
  %v4683 = vpop.permute.xlu0 %4682
  %4684 = vrot.lane.b32.xlu0 %v4595, 32
  %v4685 = vpop.permute.xlu0 %4684
  %4686 = vrot.lane.b32.xlu0 %v4588, 32
  %v4687 = vpop.permute.xlu0 %4686
  %4688 = vrot.lane.b32.xlu0 %v4596, 32
  %v4689 = vpop.permute.xlu0 %4688
  %4690 = vrot.lane.b32.xlu0 %v4589, 32
  %v4691 = vpop.permute.xlu0 %4690
  %4692 = vrot.lane.b32.xlu0 %v4597, 32
  %v4693 = vpop.permute.xlu0 %4692
  %v4694 = vsel %vm488, %v4687, %v4691
  %v4695 = vsel %vm488, %v4689, %v4693
  %v4696 = vsel %vm488, %v4683, %v4687
  %v4697 = vsel %vm488, %v4685, %v4689
  %v4698 = vsel %vm488, %v4679, %v4683
  %v4699 = vsel %vm488, %v4681, %v4685
  %v4700 = vsel %vm488, %v4675, %v4679
  %v4701 = vsel %vm488, %v4677, %v4681
  %v4702 = vsel %vm488, %v4671, %v4675
  %v4703 = vsel %vm488, %v4673, %v4677
  %v4704 = vsel %vm488, %v4667, %v4671
  %v4705 = vsel %vm488, %v4669, %v4673
  %v4706 = vsel %vm488, %v4663, %v4667
  %v4707 = vsel %vm488, %v4665, %v4669
  %v4708 = vsel %vm488, %v4691, %v4663
  %v4709 = vsel %vm488, %v4693, %v4665
  %v4710 = vsel %vm103, %v4708, 0.0
  %v4711 = vsel %vm104, %v4706, 0.0
  %v4712 = vsel %vm105, %v4704, 0.0
  %v4713 = vsel %vm106, %v4702, 0.0
  %v4714 = vsel %vm107, %v4700, 0.0
  %v4715 = vsel %vm108, %v4698, 0.0
  %v4716 = vsel %vm109, %v4696, 0.0
  %v4717 = vsel %vm110, %v4694, 0.0
  %v4718 = vsel %vm103, %v4709, 0.0
  %v4719 = vsel %vm104, %v4707, 0.0
  %v4720 = vsel %vm105, %v4705, 0.0
  %v4721 = vsel %vm106, %v4703, 0.0
  %v4722 = vsel %vm107, %v4701, 0.0
  %v4723 = vsel %vm108, %v4699, 0.0
  %v4724 = vsel %vm109, %v4697, 0.0
  %v4725 = vsel %vm110, %v4695, 0.0
  %4726 = vrot.lane.b32.xlu0 %v4582, 31
  %v4727 = vpop.permute.xlu0 %4726
  %4728 = vrot.lane.b32.xlu0 %v4590, 31
  %v4729 = vpop.permute.xlu0 %4728
  %4730 = vrot.lane.b32.xlu0 %v4583, 31
  %v4731 = vpop.permute.xlu0 %4730
  %4732 = vrot.lane.b32.xlu0 %v4591, 31
  %v4733 = vpop.permute.xlu0 %4732
  %4734 = vrot.lane.b32.xlu0 %v4584, 31
  %v4735 = vpop.permute.xlu0 %4734
  %4736 = vrot.lane.b32.xlu0 %v4592, 31
  %v4737 = vpop.permute.xlu0 %4736
  %4738 = vrot.lane.b32.xlu0 %v4585, 31
  %v4739 = vpop.permute.xlu0 %4738
  %4740 = vrot.lane.b32.xlu0 %v4593, 31
  %v4741 = vpop.permute.xlu0 %4740
  %4742 = vrot.lane.b32.xlu0 %v4586, 31
  %v4743 = vpop.permute.xlu0 %4742
  %4744 = vrot.lane.b32.xlu0 %v4594, 31
  %v4745 = vpop.permute.xlu0 %4744
  %4746 = vrot.lane.b32.xlu0 %v4587, 31
  %v4747 = vpop.permute.xlu0 %4746
  %4748 = vrot.lane.b32.xlu0 %v4595, 31
  %v4749 = vpop.permute.xlu0 %4748
  %4750 = vrot.lane.b32.xlu0 %v4588, 31
  %v4751 = vpop.permute.xlu0 %4750
  %4752 = vrot.lane.b32.xlu0 %v4596, 31
  %v4753 = vpop.permute.xlu0 %4752
  %4754 = vrot.lane.b32.xlu0 %v4589, 31
  %v4755 = vpop.permute.xlu0 %4754
  %4756 = vrot.lane.b32.xlu0 %v4597, 31
  %v4757 = vpop.permute.xlu0 %4756
  %v4758 = vsel %vm553, %v4751, %v4755
  %v4759 = vsel %vm553, %v4753, %v4757
  %v4760 = vsel %vm553, %v4747, %v4751
  %v4761 = vsel %vm553, %v4749, %v4753
  %v4762 = vsel %vm553, %v4743, %v4747
  %v4763 = vsel %vm553, %v4745, %v4749
  %v4764 = vsel %vm553, %v4739, %v4743
  %v4765 = vsel %vm553, %v4741, %v4745
  %v4766 = vsel %vm553, %v4735, %v4739
  %v4767 = vsel %vm553, %v4737, %v4741
  %v4768 = vsel %vm553, %v4731, %v4735
  %v4769 = vsel %vm553, %v4733, %v4737
  %v4770 = vsel %vm553, %v4727, %v4731
  %v4771 = vsel %vm553, %v4729, %v4733
  %v4772 = vsel %vm553, %v4755, %v4727
  %v4773 = vsel %vm553, %v4757, %v4729
  %v4774 = vsel %vm151, %v4772, 0.0
  %v4775 = vsel %vm152, %v4770, 0.0
  %v4776 = vsel %vm153, %v4768, 0.0
  %v4777 = vsel %vm154, %v4766, 0.0
  %v4778 = vsel %vm155, %v4764, 0.0
  %v4779 = vsel %vm156, %v4762, 0.0
  %v4780 = vsel %vm157, %v4760, 0.0
  %v4781 = vsel %vm158, %v4758, 0.0
  %v4782 = vsel %vm151, %v4773, 0.0
  %v4783 = vsel %vm152, %v4771, 0.0
  %v4784 = vsel %vm153, %v4769, 0.0
  %v4785 = vsel %vm154, %v4767, 0.0
  %v4786 = vsel %vm155, %v4765, 0.0
  %v4787 = vsel %vm156, %v4763, 0.0
  %v4788 = vsel %vm157, %v4761, 0.0
  %v4789 = vsel %vm158, %v4759, 0.0
  %4790 = vrot.lane.b32.xlu0 %v4582, 1
  %v4791 = vpop.permute.xlu0 %4790
  %4792 = vrot.lane.b32.xlu0 %v4590, 1
  %v4793 = vpop.permute.xlu0 %4792
  %4794 = vrot.lane.b32.xlu0 %v4583, 1
  %v4795 = vpop.permute.xlu0 %4794
  %4796 = vrot.lane.b32.xlu0 %v4591, 1
  %v4797 = vpop.permute.xlu0 %4796
  %4798 = vrot.lane.b32.xlu0 %v4584, 1
  %v4799 = vpop.permute.xlu0 %4798
  %4800 = vrot.lane.b32.xlu0 %v4592, 1
  %v4801 = vpop.permute.xlu0 %4800
  %4802 = vrot.lane.b32.xlu0 %v4585, 1
  %v4803 = vpop.permute.xlu0 %4802
  %4804 = vrot.lane.b32.xlu0 %v4593, 1
  %v4805 = vpop.permute.xlu0 %4804
  %4806 = vrot.lane.b32.xlu0 %v4586, 1
  %v4807 = vpop.permute.xlu0 %4806
  %4808 = vrot.lane.b32.xlu0 %v4594, 1
  %v4809 = vpop.permute.xlu0 %4808
  %4810 = vrot.lane.b32.xlu0 %v4587, 1
  %v4811 = vpop.permute.xlu0 %4810
  %4812 = vrot.lane.b32.xlu0 %v4595, 1
  %v4813 = vpop.permute.xlu0 %4812
  %4814 = vrot.lane.b32.xlu0 %v4588, 1
  %v4815 = vpop.permute.xlu0 %4814
  %4816 = vrot.lane.b32.xlu0 %v4596, 1
  %v4817 = vpop.permute.xlu0 %4816
  %4818 = vrot.lane.b32.xlu0 %v4589, 1
  %v4819 = vpop.permute.xlu0 %4818
  %4820 = vrot.lane.b32.xlu0 %v4597, 1
  %v4821 = vpop.permute.xlu0 %4820
  %v4822 = vsel %vm618, %v4815, %v4819
  %v4823 = vsel %vm618, %v4817, %v4821
  %v4824 = vsel %vm618, %v4811, %v4815
  %v4825 = vsel %vm618, %v4813, %v4817
  %v4826 = vsel %vm618, %v4807, %v4811
  %v4827 = vsel %vm618, %v4809, %v4813
  %v4828 = vsel %vm618, %v4803, %v4807
  %v4829 = vsel %vm618, %v4805, %v4809
  %v4830 = vsel %vm618, %v4799, %v4803
  %v4831 = vsel %vm618, %v4801, %v4805
  %v4832 = vsel %vm618, %v4795, %v4799
  %v4833 = vsel %vm618, %v4797, %v4801
  %v4834 = vsel %vm618, %v4791, %v4795
  %v4835 = vsel %vm618, %v4793, %v4797
  %v4836 = vsel %vm618, %v4819, %v4791
  %v4837 = vsel %vm618, %v4821, %v4793
  %v4838 = vsel %vm191, %v4836, 0.0
  %v4839 = vsel %vm192, %v4834, 0.0
  %v4840 = vsel %vm193, %v4832, 0.0
  %v4841 = vsel %vm194, %v4830, 0.0
  %v4842 = vsel %vm195, %v4828, 0.0
  %v4843 = vsel %vm196, %v4826, 0.0
  %v4844 = vsel %vm197, %v4824, 0.0
  %v4845 = vsel %vm198, %v4822, 0.0
  %v4846 = vsel %vm191, %v4837, 0.0
  %v4847 = vsel %vm192, %v4835, 0.0
  %v4848 = vsel %vm193, %v4833, 0.0
  %v4849 = vsel %vm194, %v4831, 0.0
  %v4850 = vsel %vm195, %v4829, 0.0
  %v4851 = vsel %vm196, %v4827, 0.0
  %v4852 = vsel %vm197, %v4825, 0.0
  %v4853 = vsel %vm198, %v4823, 0.0
  %v4854 = vsel %vm215, %v4582, 0.0
  %v4855 = vsel %vm216, %v4583, 0.0
  %v4856 = vsel %vm217, %v4584, 0.0
  %v4857 = vsel %vm218, %v4585, 0.0
  %v4858 = vsel %vm219, %v4586, 0.0
  %v4859 = vsel %vm220, %v4587, 0.0
  %v4860 = vsel %vm221, %v4588, 0.0
  %v4861 = vsel %vm222, %v4589, 0.0
  %v4862 = vsel %vm215, %v4590, 0.0
  %v4863 = vsel %vm216, %v4591, 0.0
  %v4864 = vsel %vm217, %v4592, 0.0
  %v4865 = vsel %vm218, %v4593, 0.0
  %v4866 = vsel %vm219, %v4594, 0.0
  %v4867 = vsel %vm220, %v4595, 0.0
  %v4868 = vsel %vm221, %v4596, 0.0
  %v4869 = vsel %vm222, %v4597, 0.0
  %4870 = vrot.lane.b32.xlu0 %v4582, 127
  %v4871 = vpop.permute.xlu0 %4870
  %4872 = vrot.lane.b32.xlu0 %v4590, 127
  %v4873 = vpop.permute.xlu0 %4872
  %4874 = vrot.lane.b32.xlu0 %v4583, 127
  %v4875 = vpop.permute.xlu0 %4874
  %4876 = vrot.lane.b32.xlu0 %v4591, 127
  %v4877 = vpop.permute.xlu0 %4876
  %4878 = vrot.lane.b32.xlu0 %v4584, 127
  %v4879 = vpop.permute.xlu0 %4878
  %4880 = vrot.lane.b32.xlu0 %v4592, 127
  %v4881 = vpop.permute.xlu0 %4880
  %4882 = vrot.lane.b32.xlu0 %v4585, 127
  %v4883 = vpop.permute.xlu0 %4882
  %4884 = vrot.lane.b32.xlu0 %v4593, 127
  %v4885 = vpop.permute.xlu0 %4884
  %4886 = vrot.lane.b32.xlu0 %v4586, 127
  %v4887 = vpop.permute.xlu0 %4886
  %4888 = vrot.lane.b32.xlu0 %v4594, 127
  %v4889 = vpop.permute.xlu0 %4888
  %4890 = vrot.lane.b32.xlu0 %v4587, 127
  %v4891 = vpop.permute.xlu0 %4890
  %4892 = vrot.lane.b32.xlu0 %v4595, 127
  %v4893 = vpop.permute.xlu0 %4892
  %4894 = vrot.lane.b32.xlu0 %v4588, 127
  %v4895 = vpop.permute.xlu0 %4894
  %4896 = vrot.lane.b32.xlu0 %v4596, 127
  %v4897 = vpop.permute.xlu0 %4896
  %4898 = vrot.lane.b32.xlu0 %v4589, 127
  %v4899 = vpop.permute.xlu0 %4898
  %4900 = vrot.lane.b32.xlu0 %v4597, 127
  %v4901 = vpop.permute.xlu0 %4900
  %v4902 = vsel %vm699, %v4895, %v4899
  %v4903 = vsel %vm699, %v4897, %v4901
  %v4904 = vsel %vm699, %v4891, %v4895
  %v4905 = vsel %vm699, %v4893, %v4897
  %v4906 = vsel %vm699, %v4887, %v4891
  %v4907 = vsel %vm699, %v4889, %v4893
  %v4908 = vsel %vm699, %v4883, %v4887
  %v4909 = vsel %vm699, %v4885, %v4889
  %v4910 = vsel %vm699, %v4879, %v4883
  %v4911 = vsel %vm699, %v4881, %v4885
  %v4912 = vsel %vm699, %v4875, %v4879
  %v4913 = vsel %vm699, %v4877, %v4881
  %v4914 = vsel %vm699, %v4871, %v4875
  %v4915 = vsel %vm699, %v4873, %v4877
  %v4916 = vsel %vm699, %v4899, %v4871
  %v4917 = vsel %vm699, %v4901, %v4873
  %v4918 = vsel %vm255, %v4914, 0.0
  %v4919 = vsel %vm256, %v4912, 0.0
  %v4920 = vsel %vm257, %v4910, 0.0
  %v4921 = vsel %vm258, %v4908, 0.0
  %v4922 = vsel %vm259, %v4906, 0.0
  %v4923 = vsel %vm260, %v4904, 0.0
  %v4924 = vsel %vm261, %v4902, 0.0
  %v4925 = vsel %vm262, %v4916, 0.0
  %v4926 = vsel %vm255, %v4915, 0.0
  %v4927 = vsel %vm256, %v4913, 0.0
  %v4928 = vsel %vm257, %v4911, 0.0
  %v4929 = vsel %vm258, %v4909, 0.0
  %v4930 = vsel %vm259, %v4907, 0.0
  %v4931 = vsel %vm260, %v4905, 0.0
  %v4932 = vsel %vm261, %v4903, 0.0
  %v4933 = vsel %vm262, %v4917, 0.0
  %4934 = vrot.lane.b32.xlu0 %v4582, 97
  %v4935 = vpop.permute.xlu0 %4934
  %4936 = vrot.lane.b32.xlu0 %v4590, 97
  %v4937 = vpop.permute.xlu0 %4936
  %4938 = vrot.lane.b32.xlu0 %v4583, 97
  %v4939 = vpop.permute.xlu0 %4938
  %4940 = vrot.lane.b32.xlu0 %v4591, 97
  %v4941 = vpop.permute.xlu0 %4940
  %4942 = vrot.lane.b32.xlu0 %v4584, 97
  %v4943 = vpop.permute.xlu0 %4942
  %4944 = vrot.lane.b32.xlu0 %v4592, 97
  %v4945 = vpop.permute.xlu0 %4944
  %4946 = vrot.lane.b32.xlu0 %v4585, 97
  %v4947 = vpop.permute.xlu0 %4946
  %4948 = vrot.lane.b32.xlu0 %v4593, 97
  %v4949 = vpop.permute.xlu0 %4948
  %4950 = vrot.lane.b32.xlu0 %v4586, 97
  %v4951 = vpop.permute.xlu0 %4950
  %4952 = vrot.lane.b32.xlu0 %v4594, 97
  %v4953 = vpop.permute.xlu0 %4952
  %4954 = vrot.lane.b32.xlu0 %v4587, 97
  %v4955 = vpop.permute.xlu0 %4954
  %4956 = vrot.lane.b32.xlu0 %v4595, 97
  %v4957 = vpop.permute.xlu0 %4956
  %4958 = vrot.lane.b32.xlu0 %v4588, 97
  %v4959 = vpop.permute.xlu0 %4958
  %4960 = vrot.lane.b32.xlu0 %v4596, 97
  %v4961 = vpop.permute.xlu0 %4960
  %4962 = vrot.lane.b32.xlu0 %v4589, 97
  %v4963 = vpop.permute.xlu0 %4962
  %4964 = vrot.lane.b32.xlu0 %v4597, 97
  %v4965 = vpop.permute.xlu0 %4964
  %v4966 = vsel %vm764, %v4959, %v4963
  %v4967 = vsel %vm764, %v4961, %v4965
  %v4968 = vsel %vm764, %v4955, %v4959
  %v4969 = vsel %vm764, %v4957, %v4961
  %v4970 = vsel %vm764, %v4951, %v4955
  %v4971 = vsel %vm764, %v4953, %v4957
  %v4972 = vsel %vm764, %v4947, %v4951
  %v4973 = vsel %vm764, %v4949, %v4953
  %v4974 = vsel %vm764, %v4943, %v4947
  %v4975 = vsel %vm764, %v4945, %v4949
  %v4976 = vsel %vm764, %v4939, %v4943
  %v4977 = vsel %vm764, %v4941, %v4945
  %v4978 = vsel %vm764, %v4935, %v4939
  %v4979 = vsel %vm764, %v4937, %v4941
  %v4980 = vsel %vm764, %v4963, %v4935
  %v4981 = vsel %vm764, %v4965, %v4937
  %v4982 = vsel %vm295, %v4978, 0.0
  %v4983 = vsel %vm296, %v4976, 0.0
  %v4984 = vsel %vm297, %v4974, 0.0
  %v4985 = vsel %vm298, %v4972, 0.0
  %v4986 = vsel %vm299, %v4970, 0.0
  %v4987 = vsel %vm300, %v4968, 0.0
  %v4988 = vsel %vm301, %v4966, 0.0
  %v4989 = vsel %vm302, %v4980, 0.0
  %v4990 = vsel %vm295, %v4979, 0.0
  %v4991 = vsel %vm296, %v4977, 0.0
  %v4992 = vsel %vm297, %v4975, 0.0
  %v4993 = vsel %vm298, %v4973, 0.0
  %v4994 = vsel %vm299, %v4971, 0.0
  %v4995 = vsel %vm300, %v4969, 0.0
  %v4996 = vsel %vm301, %v4967, 0.0
  %v4997 = vsel %vm302, %v4981, 0.0
  %4998 = vrot.lane.b32.xlu0 %v4582, 96
  %v4999 = vpop.permute.xlu0 %4998
  %5000 = vrot.lane.b32.xlu0 %v4590, 96
  %v5001 = vpop.permute.xlu0 %5000
  %5002 = vrot.lane.b32.xlu0 %v4583, 96
  %v5003 = vpop.permute.xlu0 %5002
  %5004 = vrot.lane.b32.xlu0 %v4591, 96
  %v5005 = vpop.permute.xlu0 %5004
  %5006 = vrot.lane.b32.xlu0 %v4584, 96
  %v5007 = vpop.permute.xlu0 %5006
  %5008 = vrot.lane.b32.xlu0 %v4592, 96
  %v5009 = vpop.permute.xlu0 %5008
  %5010 = vrot.lane.b32.xlu0 %v4585, 96
  %v5011 = vpop.permute.xlu0 %5010
  %5012 = vrot.lane.b32.xlu0 %v4593, 96
  %v5013 = vpop.permute.xlu0 %5012
  %5014 = vrot.lane.b32.xlu0 %v4586, 96
  %v5015 = vpop.permute.xlu0 %5014
  %5016 = vrot.lane.b32.xlu0 %v4594, 96
  %v5017 = vpop.permute.xlu0 %5016
  %5018 = vrot.lane.b32.xlu0 %v4587, 96
  %v5019 = vpop.permute.xlu0 %5018
  %5020 = vrot.lane.b32.xlu0 %v4595, 96
  %v5021 = vpop.permute.xlu0 %5020
  %5022 = vrot.lane.b32.xlu0 %v4588, 96
  %v5023 = vpop.permute.xlu0 %5022
  %5024 = vrot.lane.b32.xlu0 %v4596, 96
  %v5025 = vpop.permute.xlu0 %5024
  %5026 = vrot.lane.b32.xlu0 %v4589, 96
  %v5027 = vpop.permute.xlu0 %5026
  %5028 = vrot.lane.b32.xlu0 %v4597, 96
  %v5029 = vpop.permute.xlu0 %5028
  %v5030 = vsel %vm829, %v5023, %v5027
  %v5031 = vsel %vm829, %v5025, %v5029
  %v5032 = vsel %vm829, %v5019, %v5023
  %v5033 = vsel %vm829, %v5021, %v5025
  %v5034 = vsel %vm829, %v5015, %v5019
  %v5035 = vsel %vm829, %v5017, %v5021
  %v5036 = vsel %vm829, %v5011, %v5015
  %v5037 = vsel %vm829, %v5013, %v5017
  %v5038 = vsel %vm829, %v5007, %v5011
  %v5039 = vsel %vm829, %v5009, %v5013
  %v5040 = vsel %vm829, %v5003, %v5007
  %v5041 = vsel %vm829, %v5005, %v5009
  %v5042 = vsel %vm829, %v4999, %v5003
  %v5043 = vsel %vm829, %v5001, %v5005
  %v5044 = vsel %vm829, %v5027, %v4999
  %v5045 = vsel %vm829, %v5029, %v5001
  %v5046 = vsel %vm327, %v5042, 0.0
  %v5047 = vsel %vm328, %v5040, 0.0
  %v5048 = vsel %vm329, %v5038, 0.0
  %v5049 = vsel %vm330, %v5036, 0.0
  %v5050 = vsel %vm331, %v5034, 0.0
  %v5051 = vsel %vm332, %v5032, 0.0
  %v5052 = vsel %vm333, %v5030, 0.0
  %v5053 = vsel %vm334, %v5044, 0.0
  %v5054 = vsel %vm327, %v5043, 0.0
  %v5055 = vsel %vm328, %v5041, 0.0
  %v5056 = vsel %vm329, %v5039, 0.0
  %v5057 = vsel %vm330, %v5037, 0.0
  %v5058 = vsel %vm331, %v5035, 0.0
  %v5059 = vsel %vm332, %v5033, 0.0
  %v5060 = vsel %vm333, %v5031, 0.0
  %v5061 = vsel %vm334, %v5045, 0.0
  %5062 = vrot.lane.b32.xlu0 %v4582, 95
  %v5063 = vpop.permute.xlu0 %5062
  %5064 = vrot.lane.b32.xlu0 %v4590, 95
  %v5065 = vpop.permute.xlu0 %5064
  %5066 = vrot.lane.b32.xlu0 %v4583, 95
  %v5067 = vpop.permute.xlu0 %5066
  %5068 = vrot.lane.b32.xlu0 %v4591, 95
  %v5069 = vpop.permute.xlu0 %5068
  %5070 = vrot.lane.b32.xlu0 %v4584, 95
  %v5071 = vpop.permute.xlu0 %5070
  %5072 = vrot.lane.b32.xlu0 %v4592, 95
  %v5073 = vpop.permute.xlu0 %5072
  %5074 = vrot.lane.b32.xlu0 %v4585, 95
  %v5075 = vpop.permute.xlu0 %5074
  %5076 = vrot.lane.b32.xlu0 %v4593, 95
  %v5077 = vpop.permute.xlu0 %5076
  %5078 = vrot.lane.b32.xlu0 %v4586, 95
  %v5079 = vpop.permute.xlu0 %5078
  %5080 = vrot.lane.b32.xlu0 %v4594, 95
  %v5081 = vpop.permute.xlu0 %5080
  %5082 = vrot.lane.b32.xlu0 %v4587, 95
  %v5083 = vpop.permute.xlu0 %5082
  %5084 = vrot.lane.b32.xlu0 %v4595, 95
  %v5085 = vpop.permute.xlu0 %5084
  %5086 = vrot.lane.b32.xlu0 %v4588, 95
  %v5087 = vpop.permute.xlu0 %5086
  %5088 = vrot.lane.b32.xlu0 %v4596, 95
  %v5089 = vpop.permute.xlu0 %5088
  %5090 = vrot.lane.b32.xlu0 %v4589, 95
  %v5091 = vpop.permute.xlu0 %5090
  %5092 = vrot.lane.b32.xlu0 %v4597, 95
  %v5093 = vpop.permute.xlu0 %5092
  %v5094 = vsel %vm894, %v5087, %v5091
  %v5095 = vsel %vm894, %v5089, %v5093
  %v5096 = vsel %vm894, %v5083, %v5087
  %v5097 = vsel %vm894, %v5085, %v5089
  %v5098 = vsel %vm894, %v5079, %v5083
  %v5099 = vsel %vm894, %v5081, %v5085
  %v5100 = vsel %vm894, %v5075, %v5079
  %v5101 = vsel %vm894, %v5077, %v5081
  %v5102 = vsel %vm894, %v5071, %v5075
  %v5103 = vsel %vm894, %v5073, %v5077
  %v5104 = vsel %vm894, %v5067, %v5071
  %v5105 = vsel %vm894, %v5069, %v5073
  %v5106 = vsel %vm894, %v5063, %v5067
  %v5107 = vsel %vm894, %v5065, %v5069
  %v5108 = vsel %vm894, %v5091, %v5063
  %v5109 = vsel %vm894, %v5093, %v5065
  %v5110 = vsel %vm367, %v5106, 0.0
  %v5111 = vsel %vm368, %v5104, 0.0
  %v5112 = vsel %vm369, %v5102, 0.0
  %v5113 = vsel %vm370, %v5100, 0.0
  %v5114 = vsel %vm371, %v5098, 0.0
  %v5115 = vsel %vm372, %v5096, 0.0
  %v5116 = vsel %vm373, %v5094, 0.0
  %v5117 = vsel %vm374, %v5108, 0.0
  %v5118 = vsel %vm367, %v5107, 0.0
  %v5119 = vsel %vm368, %v5105, 0.0
  %v5120 = vsel %vm369, %v5103, 0.0
  %v5121 = vsel %vm370, %v5101, 0.0
  %v5122 = vsel %vm371, %v5099, 0.0
  %v5123 = vsel %vm372, %v5097, 0.0
  %v5124 = vsel %vm373, %v5095, 0.0
  %v5125 = vsel %vm374, %v5109, 0.0
  %s5126 = scalar_lea.vmem %s1, 160
  %v5127 = vld [vmem:[%s5126] sm:$0xff]
  %v5128 = vld [vmem:[%s5126 + $0x8] sm:$0xff]
  %v5129 = vld [vmem:[%s5126 + $0x10] sm:$0xff]
  %v5130 = vld [vmem:[%s5126 + $0x18] sm:$0xff]
  %s5131 = scalar_lea.vmem %s2, 80
  %v5132 = vld [vmem:[%s5131] sm:$0xff]
  %v5133 = vld [vmem:[%s5131 + $0x8] sm:$0xff]
  %5135 = vset.pattern.permute.xlu0 0
  %5136 = vperm.xlu0 %5135, %v5132
  %v5137 = vpop.permute.xlu0 %5136
  %5140 = vset.pattern.permute.xlu0 0
  %5141 = vperm.xlu0 %5140, %v5133
  %v5142 = vpop.permute.xlu0 %5141
  %v5145 = vsel %vm943, %v5128, 0
  %v5148 = vsel %vm943, %v5130, 0
  %5150 = vmatprep.subr.mxu0 %v4647
  %5151 = vmatpush1.msra.mxu0 %v4646
  %5152 = vmatprep.subr.mxu0 %v4655
  %5153 = vmatpush1.msra.mxu0 %v4654
  %5154 = vmatprep.subr.mxu0 %v4711
  %5155 = vmatpush1.msra.mxu0 %v4710
  %5156 = vmatprep.subr.mxu0 %v4719
  %5157 = vmatpush1.msra.mxu0 %v4718
  %5158 = vmatprep.subr.mxu0 %v4775
  %5159 = vmatpush1.msra.mxu0 %v4774
  %5160 = vmatprep.subr.mxu0 %v4783
  %5161 = vmatpush1.msra.mxu0 %v4782
  %5162 = vmatprep.subr.mxu0 %v4839
  %5163 = vmatpush1.msra.mxu0 %v4838
  %5164 = vmatprep.subr.mxu0 %v4847
  %5165 = vmatpush1.msra.mxu0 %v4846
  %5166 = vmatprep.subr.mxu0 %v4855
  %5167 = vmatpush1.msra.mxu0 %v4854
  %5168 = vmatprep.subr.mxu0 %v4863
  %5169 = vmatpush1.msra.mxu0 %v4862
  %5170 = vmatprep.subr.mxu0 %v4919
  %5171 = vmatpush1.msra.mxu0 %v4918
  %5172 = vmatprep.subr.mxu0 %v4927
  %5173 = vmatpush1.msra.mxu0 %v4926
  %5174 = vmatprep.subr.mxu0 %v4983
  %5175 = vmatpush1.msra.mxu0 %v4982
  %5176 = vmatprep.subr.mxu0 %v4991
  %5177 = vmatpush1.msra.mxu0 %v4990
  %5178 = vmatprep.subr.mxu0 %v5047
  %5179 = vmatpush1.msra.mxu0 %v5046
  %5180 = vmatprep.subr.mxu0 %v5055
  %5181 = vmatpush1.msra.mxu0 %v5054
  %5182 = vmatprep.subr.mxu0 %v5111
  %5183 = vmatpush1.msra.mxu0 %v5110
  %5184 = vmatprep.subr.mxu0 %v5119
  %5185 = vmatpush1.msra.mxu0 %v5118
  %5186 = vmatprep.subr.mxu0 0.0
  %5187 = vmatpush1.msra.mxu0 0.0
  %5188 = vmatprep.subr.mxu0 0.0
  %5189 = vmatpush1.msra.mxu0 0.0
  %5190 = vmatprep.subr.mxu0 0.0
  %5191 = vmatpush1.msra.mxu0 0.0
  %5192 = vmatprep.subr.mxu0 0.0
  %5193 = vmatpush1.msra.mxu0 0.0
  %5194 = vmatprep.subr.mxu0 0.0
  %5195 = vmatpush1.msra.mxu0 0.0
  %5196 = vmatprep.subr.mxu0 0.0
  %5197 = vmatpush1.msra.mxu0 0.0
  %5198 = vmatprep.subr.mxu0 0.0
  %5199 = vmatpush1.msra.mxu0 0.0
  %5200 = vmatprep.subr.mxu0 0.0
  %5201 = vmatpush1.msra.mxu0 0.0
  %5202 = vmatprep.subr.mxu0 0.0
  %5203 = vmatpush1.msra.mxu0 0.0
  %5204 = vmatprep.subr.mxu0 0.0
  %5205 = vmatpush1.msra.mxu0 0.0
  %5206 = vmatprep.subr.mxu0 0.0
  %5207 = vmatpush1.msra.mxu0 0.0
  %5208 = vmatprep.subr.mxu0 0.0
  %5209 = vmatpush1.msra.mxu0 0.0
  %5210 = vmatprep.subr.mxu0 0.0
  %5211 = vmatpush1.msra.mxu0 0.0
  %5212 = vmatprep.subr.mxu0 0.0
  %5213 = vmatpush1.msra.mxu0 0.0
  %5214 = vmatprep.mubr.f32.mxu0 %v5145
  %5215 = vmatmul.mubr.f32.gmra.mrb[0].mxu0 %v5127
  %v5216 = vpop.f32.mrb[0].mxu0
  %v5217 = vadd.f32 %v5137, %v5216
  %v5218 = vpop.f32.mrb[0].mxu0
  %v5219 = vadd.f32 %v5137, %v5218
  %5220 = vmatprep.mubr.f32.mxu0 %v5148
  %5221 = vmatmul.mubr.f32.gmra.mrb[0].mxu0 %v5129
  %v5222 = vpop.f32.mrb[0].mxu0
  %v5223 = vadd.f32 %v5142, %v5222
  %v5224 = vpop.f32.mrb[0].mxu0
  %v5225 = vadd.f32 %v5142, %v5224
  %5226 = vdwg.mxu0
  %5227 = vmatprep.subr.mxu0 %v4649
  %5228 = vmatpush1.msra.mxu0 %v4648
  %5229 = vmatprep.subr.mxu0 %v4657
  %5230 = vmatpush1.msra.mxu0 %v4656
  %5231 = vmatprep.subr.mxu0 %v4713
  %5232 = vmatpush1.msra.mxu0 %v4712
  %5233 = vmatprep.subr.mxu0 %v4721
  %5234 = vmatpush1.msra.mxu0 %v4720
  %5235 = vmatprep.subr.mxu0 %v4777
  %5236 = vmatpush1.msra.mxu0 %v4776
  %5237 = vmatprep.subr.mxu0 %v4785
  %5238 = vmatpush1.msra.mxu0 %v4784
  %5239 = vmatprep.subr.mxu0 %v4841
  %5240 = vmatpush1.msra.mxu0 %v4840
  %5241 = vmatprep.subr.mxu0 %v4849
  %5242 = vmatpush1.msra.mxu0 %v4848
  %5243 = vmatprep.subr.mxu0 %v4857
  %5244 = vmatpush1.msra.mxu0 %v4856
  %5245 = vmatprep.subr.mxu0 %v4865
  %5246 = vmatpush1.msra.mxu0 %v4864
  %5247 = vmatprep.subr.mxu0 %v4921
  %5248 = vmatpush1.msra.mxu0 %v4920
  %5249 = vmatprep.subr.mxu0 %v4929
  %5250 = vmatpush1.msra.mxu0 %v4928
  %5251 = vmatprep.subr.mxu0 %v4985
  %5252 = vmatpush1.msra.mxu0 %v4984
  %5253 = vmatprep.subr.mxu0 %v4993
  %5254 = vmatpush1.msra.mxu0 %v4992
  %5255 = vmatprep.subr.mxu0 %v5049
  %5256 = vmatpush1.msra.mxu0 %v5048
  %5257 = vmatprep.subr.mxu0 %v5057
  %5258 = vmatpush1.msra.mxu0 %v5056
  %5259 = vmatprep.subr.mxu0 %v5113
  %5260 = vmatpush1.msra.mxu0 %v5112
  %5261 = vmatprep.subr.mxu0 %v5121
  %5262 = vmatpush1.msra.mxu0 %v5120
  %5263 = vmatprep.subr.mxu0 0.0
  %5264 = vmatpush1.msra.mxu0 0.0
  %5265 = vmatprep.subr.mxu0 0.0
  %5266 = vmatpush1.msra.mxu0 0.0
  %5267 = vmatprep.subr.mxu0 0.0
  %5268 = vmatpush1.msra.mxu0 0.0
  %5269 = vmatprep.subr.mxu0 0.0
  %5270 = vmatpush1.msra.mxu0 0.0
  %5271 = vmatprep.subr.mxu0 0.0
  %5272 = vmatpush1.msra.mxu0 0.0
  %5273 = vmatprep.subr.mxu0 0.0
  %5274 = vmatpush1.msra.mxu0 0.0
  %5275 = vmatprep.subr.mxu0 0.0
  %5276 = vmatpush1.msra.mxu0 0.0
  %5277 = vmatprep.subr.mxu0 0.0
  %5278 = vmatpush1.msra.mxu0 0.0
  %5279 = vmatprep.subr.mxu0 0.0
  %5280 = vmatpush1.msra.mxu0 0.0
  %5281 = vmatprep.subr.mxu0 0.0
  %5282 = vmatpush1.msra.mxu0 0.0
  %5283 = vmatprep.subr.mxu0 0.0
  %5284 = vmatpush1.msra.mxu0 0.0
  %5285 = vmatprep.subr.mxu0 0.0
  %5286 = vmatpush1.msra.mxu0 0.0
  %5287 = vmatprep.subr.mxu0 0.0
  %5288 = vmatpush1.msra.mxu0 0.0
  %5289 = vmatprep.subr.mxu0 0.0
  %5290 = vmatpush1.msra.mxu0 0.0
  %5291 = vmatprep.mubr.f32.mxu0 %v5145
  %5292 = vmatmul.mubr.f32.gmra.mrb[0].mxu0 %v5127
  %v5293 = vpop.f32.mrb[0].mxu0
  %v5294 = vadd.f32 %v5137, %v5293
  %v5295 = vpop.f32.mrb[0].mxu0
  %v5296 = vadd.f32 %v5137, %v5295
  %5297 = vmatprep.mubr.f32.mxu0 %v5148
  %5298 = vmatmul.mubr.f32.gmra.mrb[0].mxu0 %v5129
  %v5299 = vpop.f32.mrb[0].mxu0
  %v5300 = vadd.f32 %v5142, %v5299
  %v5301 = vpop.f32.mrb[0].mxu0
  %v5302 = vadd.f32 %v5142, %v5301
  %5303 = vdwg.mxu0
  %5304 = vmatprep.subr.mxu0 %v4651
  %5305 = vmatpush1.msra.mxu0 %v4650
  %5306 = vmatprep.subr.mxu0 %v4659
  %5307 = vmatpush1.msra.mxu0 %v4658
  %5308 = vmatprep.subr.mxu0 %v4715
  %5309 = vmatpush1.msra.mxu0 %v4714
  %5310 = vmatprep.subr.mxu0 %v4723
  %5311 = vmatpush1.msra.mxu0 %v4722
  %5312 = vmatprep.subr.mxu0 %v4779
  %5313 = vmatpush1.msra.mxu0 %v4778
  %5314 = vmatprep.subr.mxu0 %v4787
  %5315 = vmatpush1.msra.mxu0 %v4786
  %5316 = vmatprep.subr.mxu0 %v4843
  %5317 = vmatpush1.msra.mxu0 %v4842
  %5318 = vmatprep.subr.mxu0 %v4851
  %5319 = vmatpush1.msra.mxu0 %v4850
  %5320 = vmatprep.subr.mxu0 %v4859
  %5321 = vmatpush1.msra.mxu0 %v4858
  %5322 = vmatprep.subr.mxu0 %v4867
  %5323 = vmatpush1.msra.mxu0 %v4866
  %5324 = vmatprep.subr.mxu0 %v4923
  %5325 = vmatpush1.msra.mxu0 %v4922
  %5326 = vmatprep.subr.mxu0 %v4931
  %5327 = vmatpush1.msra.mxu0 %v4930
  %5328 = vmatprep.subr.mxu0 %v4987
  %5329 = vmatpush1.msra.mxu0 %v4986
  %5330 = vmatprep.subr.mxu0 %v4995
  %5331 = vmatpush1.msra.mxu0 %v4994
  %5332 = vmatprep.subr.mxu0 %v5051
  %5333 = vmatpush1.msra.mxu0 %v5050
  %5334 = vmatprep.subr.mxu0 %v5059
  %5335 = vmatpush1.msra.mxu0 %v5058
  %5336 = vmatprep.subr.mxu0 %v5115
  %5337 = vmatpush1.msra.mxu0 %v5114
  %5338 = vmatprep.subr.mxu0 %v5123
  %5339 = vmatpush1.msra.mxu0 %v5122
  %5340 = vmatprep.subr.mxu0 0.0
  %5341 = vmatpush1.msra.mxu0 0.0
  %5342 = vmatprep.subr.mxu0 0.0
  %5343 = vmatpush1.msra.mxu0 0.0
  %5344 = vmatprep.subr.mxu0 0.0
  %5345 = vmatpush1.msra.mxu0 0.0
  %5346 = vmatprep.subr.mxu0 0.0
  %5347 = vmatpush1.msra.mxu0 0.0
  %5348 = vmatprep.subr.mxu0 0.0
  %5349 = vmatpush1.msra.mxu0 0.0
  %5350 = vmatprep.subr.mxu0 0.0
  %5351 = vmatpush1.msra.mxu0 0.0
  %5352 = vmatprep.subr.mxu0 0.0
  %5353 = vmatpush1.msra.mxu0 0.0
  %5354 = vmatprep.subr.mxu0 0.0
  %5355 = vmatpush1.msra.mxu0 0.0
  %5356 = vmatprep.subr.mxu0 0.0
  %5357 = vmatpush1.msra.mxu0 0.0
  %5358 = vmatprep.subr.mxu0 0.0
  %5359 = vmatpush1.msra.mxu0 0.0
  %5360 = vmatprep.subr.mxu0 0.0
  %5361 = vmatpush1.msra.mxu0 0.0
  %5362 = vmatprep.subr.mxu0 0.0
  %5363 = vmatpush1.msra.mxu0 0.0
  %5364 = vmatprep.subr.mxu0 0.0
  %5365 = vmatpush1.msra.mxu0 0.0
  %5366 = vmatprep.subr.mxu0 0.0
  %5367 = vmatpush1.msra.mxu0 0.0
  %5368 = vmatprep.mubr.f32.mxu0 %v5145
  %5369 = vmatmul.mubr.f32.gmra.mrb[0].mxu0 %v5127
  %v5370 = vpop.f32.mrb[0].mxu0
  %v5371 = vadd.f32 %v5137, %v5370
  %v5372 = vpop.f32.mrb[0].mxu0
  %v5373 = vadd.f32 %v5137, %v5372
  %5374 = vmatprep.mubr.f32.mxu0 %v5148
  %5375 = vmatmul.mubr.f32.gmra.mrb[0].mxu0 %v5129
  %v5376 = vpop.f32.mrb[0].mxu0
  %v5377 = vadd.f32 %v5142, %v5376
  %v5378 = vpop.f32.mrb[0].mxu0
  %v5379 = vadd.f32 %v5142, %v5378
  %5380 = vdwg.mxu0
  %5381 = vmatprep.subr.mxu0 %v4653
  %5382 = vmatpush1.msra.mxu0 %v4652
  %5383 = vmatprep.subr.mxu0 %v4661
  %5384 = vmatpush1.msra.mxu0 %v4660
  %5385 = vmatprep.subr.mxu0 %v4717
  %5386 = vmatpush1.msra.mxu0 %v4716
  %5387 = vmatprep.subr.mxu0 %v4725
  %5388 = vmatpush1.msra.mxu0 %v4724
  %5389 = vmatprep.subr.mxu0 %v4781
  %5390 = vmatpush1.msra.mxu0 %v4780
  %5391 = vmatprep.subr.mxu0 %v4789
  %5392 = vmatpush1.msra.mxu0 %v4788
  %5393 = vmatprep.subr.mxu0 %v4845
  %5394 = vmatpush1.msra.mxu0 %v4844
  %5395 = vmatprep.subr.mxu0 %v4853
  %5396 = vmatpush1.msra.mxu0 %v4852
  %5397 = vmatprep.subr.mxu0 %v4861
  %5398 = vmatpush1.msra.mxu0 %v4860
  %5399 = vmatprep.subr.mxu0 %v4869
  %5400 = vmatpush1.msra.mxu0 %v4868
  %5401 = vmatprep.subr.mxu0 %v4925
  %5402 = vmatpush1.msra.mxu0 %v4924
  %5403 = vmatprep.subr.mxu0 %v4933
  %5404 = vmatpush1.msra.mxu0 %v4932
  %5405 = vmatprep.subr.mxu0 %v4989
  %5406 = vmatpush1.msra.mxu0 %v4988
  %5407 = vmatprep.subr.mxu0 %v4997
  %5408 = vmatpush1.msra.mxu0 %v4996
  %5409 = vmatprep.subr.mxu0 %v5053
  %5410 = vmatpush1.msra.mxu0 %v5052
  %5411 = vmatprep.subr.mxu0 %v5061
  %5412 = vmatpush1.msra.mxu0 %v5060
  %5413 = vmatprep.subr.mxu0 %v5117
  %5414 = vmatpush1.msra.mxu0 %v5116
  %5415 = vmatprep.subr.mxu0 %v5125
  %5416 = vmatpush1.msra.mxu0 %v5124
  %5417 = vmatprep.subr.mxu0 0.0
  %5418 = vmatpush1.msra.mxu0 0.0
  %5419 = vmatprep.subr.mxu0 0.0
  %5420 = vmatpush1.msra.mxu0 0.0
  %5421 = vmatprep.subr.mxu0 0.0
  %5422 = vmatpush1.msra.mxu0 0.0
  %5423 = vmatprep.subr.mxu0 0.0
  %5424 = vmatpush1.msra.mxu0 0.0
  %5425 = vmatprep.subr.mxu0 0.0
  %5426 = vmatpush1.msra.mxu0 0.0
  %5427 = vmatprep.subr.mxu0 0.0
  %5428 = vmatpush1.msra.mxu0 0.0
  %5429 = vmatprep.subr.mxu0 0.0
  %5430 = vmatpush1.msra.mxu0 0.0
  %5431 = vmatprep.subr.mxu0 0.0
  %5432 = vmatpush1.msra.mxu0 0.0
  %5433 = vmatprep.subr.mxu0 0.0
  %5434 = vmatpush1.msra.mxu0 0.0
  %5435 = vmatprep.subr.mxu0 0.0
  %5436 = vmatpush1.msra.mxu0 0.0
  %5437 = vmatprep.subr.mxu0 0.0
  %5438 = vmatpush1.msra.mxu0 0.0
  %5439 = vmatprep.subr.mxu0 0.0
  %5440 = vmatpush1.msra.mxu0 0.0
  %5441 = vmatprep.subr.mxu0 0.0
  %5442 = vmatpush1.msra.mxu0 0.0
  %5443 = vmatprep.subr.mxu0 0.0
  %5444 = vmatpush1.msra.mxu0 0.0
  %5445 = vmatprep.mubr.f32.mxu0 %v5145
  %5446 = vmatmul.mubr.f32.gmra.mrb[0].mxu0 %v5127
  %v5447 = vpop.f32.mrb[0].mxu0
  %v5448 = vadd.f32 %v5137, %v5447
  %v5449 = vpop.f32.mrb[0].mxu0
  %v5450 = vadd.f32 %v5137, %v5449
  %5451 = vmatprep.mubr.f32.mxu0 %v5148
  %5452 = vmatmul.mubr.f32.gmra.mrb[0].mxu0 %v5129
  %v5453 = vpop.f32.mrb[0].mxu0
  %v5454 = vadd.f32 %v5142, %v5453
  %v5455 = vpop.f32.mrb[0].mxu0
  %v5456 = vadd.f32 %v5142, %v5455
  %5457 = vdwg.mxu0
  %v5458 = vadd.f32 %v5217, %v3433
  %v5459 = vadd.f32 %v5219, %v3435
  %v5460 = vadd.f32 %v5294, %v3510
  %v5461 = vadd.f32 %v5296, %v3512
  %v5462 = vadd.f32 %v5371, %v3587
  %v5463 = vadd.f32 %v5373, %v3589
  %v5464 = vadd.f32 %v5448, %v3664
  %v5465 = vadd.f32 %v5450, %v3666
  %v5466 = vadd.f32 %v5223, %v3439
  %v5467 = vadd.f32 %v5225, %v3441
  %v5468 = vadd.f32 %v5300, %v3516
  %v5469 = vadd.f32 %v5302, %v3518
  %v5470 = vadd.f32 %v5377, %v3593
  %v5471 = vadd.f32 %v5379, %v3595
  %v5472 = vadd.f32 %v5454, %v3670
  %v5473 = vadd.f32 %v5456, %v3672
  %5474 = vst [vmem:[%s3] sm:$0xff] %v5458
  %5475 = vst [vmem:[%s3 + $0x8] sm:$0xff] %v5459
  %5476 = vst [vmem:[%s3 + $0x10] sm:$0xff] %v5460
  %5477 = vst [vmem:[%s3 + $0x18] sm:$0xff] %v5461
  %5478 = vst [vmem:[%s3 + $0x20] sm:$0xff] %v5462
  %5479 = vst [vmem:[%s3 + $0x28] sm:$0xff] %v5463
  %5480 = vst [vmem:[%s3 + $0x30] sm:$0xff] %v5464
  %5481 = vst [vmem:[%s3 + $0x38] sm:$0xff] %v5465
  %5482 = vst [vmem:[%s3 + $0x40] sm:$0xff] %v5466
  %5483 = vst [vmem:[%s3 + $0x48] sm:$0xff] %v5467
  %5484 = vst [vmem:[%s3 + $0x50] sm:$0xff] %v5468
  %5485 = vst [vmem:[%s3 + $0x58] sm:$0xff] %v5469
  %5486 = vst [vmem:[%s3 + $0x60] sm:$0xff] %v5470
  %5487 = vst [vmem:[%s3 + $0x68] sm:$0xff] %v5471
  %5488 = vst [vmem:[%s3 + $0x70] sm:$0xff] %v5472
  %5489 = vst [vmem:[%s3 + $0x78] sm:$0xff] %v5473
  // Predicated region
  $region14: #{model_forward.1} parent=0 // pred_check
    _
  $region15: #{model_forward.1} parent=0 // pred_check_branch
    %5491 = sbr.rel (0) target = $region17
  $region16: #{model_forward.1} parent=0 // pred_region
    _
  $region17: #{model_forward.1} parent=0 // pred_fallthru
    _
  // Predicated region
  $region18: #{model_forward.1} parent=0 // pred_check
    _
  $region19: #{model_forward.1} parent=0 // pred_check_branch
    %5493 = sbr.rel (0) target = $region21
  $region20: #{model_forward.1} parent=0 // pred_region
    _
  $region21: #{model_forward.1} parent=0 // pred_fallthru
    _

</llo_original>
